<compile_context>
chip_gen: v7x
topology: tpu7x:2x2x1
jax: 0.10.0
libtpu: 0.0.40
codegen_flags: <defaults>
</compile_context>

<pallas_src>
import functools

import jax
import jax.numpy as jnp
from jax.experimental import pallas as pl
from jax.experimental.pallas import tpu as pltpu

EPS = 1e-5          # nn.BatchNorm2d default eps
LANES = 128         # lane-dense channel padding
_VMEM = pl.BlockSpec(memory_space=pltpu.MemorySpace.VMEM)
_VMEM_LIMIT = 32 * 1024 * 1024   # safe on v5e/v6e (128 MiB) and v7x (64 MiB physical)
_TILE_TARGET = 256               # rows per tile; double-buffers comfortably everywhere


def _pick_tile(m, target=_TILE_TARGET):
    """Largest multiple-of-8 divisor of m that is <= target (else the full extent)."""
    if m <= target:
        return m
    for t in range(target - target % 8, 0, -8):
        if m % t == 0:
            return t
    return m


# ----------------------------- Pallas kernels ------------------------------

def _conv_dual_stats_kernel(x_ref, w_ref, ya_ref, yb_ref,
                            sa_ref, qa_ref, sb_ref, qb_ref, *, cpad):
    """One MXU matmul computing conv1 AND the 1x1 shortcut conv (+ BN partial stats).

    x_ref : (TM, K*K*Cin) bf16 im2col tile (its center tap == the 1x1-conv input).
    w_ref : (K*K*Cin, 2*cpad) bf16 = [conv1 weights | shortcut weights on center rows].
    ya/yb : (TM, cpad) f32 conv1 / shortcut outputs (padded lanes exactly zero).
    sa/qa/sb/qb : (1,1,cpad) per-tile sums and sums-of-squares for the two BatchNorms.
    """
    acc = jnp.dot(x_ref[...], w_ref[...], preferred_element_type=jnp.float32)
    ya = acc[:, :cpad]          # lane-aligned 128-wide slices of the 256-wide MXU result
    yb = acc[:, cpad:]
    ya_ref[...] = ya
    yb_ref[...] = yb
    sa_ref[...] = jnp.sum(ya, axis=0)[None, None, :]
    qa_ref[...] = jnp.sum(ya * ya, axis=0)[None, None, :]
    sb_ref[...] = jnp.sum(yb, axis=0)[None, None, :]
    qb_ref[...] = jnp.sum(yb * yb, axis=0)[None, None, :]


def _conv_stats_kernel(x_ref, w_ref, y_ref, sum_ref, sq_ref):
    """Single conv tile: (TM,KKC)x(KKC,cpad) bf16 MXU matmul + fused BN partial stats."""
    y = jnp.dot(x_ref[...], w_ref[...], preferred_element_type=jnp.float32)
    y_ref[...] = y
    sum_ref[...] = jnp.sum(y, axis=0)[None, None, :]
    sq_ref[...] = jnp.sum(y * y, axis=0)[None, None, :]


def _bn_finalize_kernel(psum_ref, psq_ref, g_ref, b_ref, scale_ref, shift_ref,
                        *, count, eps):
    """Reduce per-tile sums -> per-channel BN scale/shift (training-mode batch stats)."""
    inv = 1.0 / count
    mean = jnp.sum(psum_ref[...], axis=0) * inv                                  # (1, cpad)
    var = jnp.maximum(jnp.sum(psq_ref[...], axis=0) * inv - mean * mean, 0.0)    # biased var
    scale = g_ref[...] * jax.lax.rsqrt(var + eps)                                # EUP rsqrt
    scale_ref[...] = scale
    shift_ref[...] = b_ref[...] - mean * scale


def _affine_relu_kernel(y_ref, s_ref, b_ref, o_ref):
    """out = relu(y*scale + shift), cast to o_ref.dtype (bf16 activation for conv2)."""
    o_ref[...] = jnp.maximum(y_ref[...] * s_ref[...] + b_ref[...], 0.0).astype(o_ref.dtype)


def _affine_relu_add_affine_kernel(y_ref, s_ref, b_ref, r_ref, sr_ref, br_ref, o_ref):
    """Fused tail: relu(bn2(y)) + bn_shortcut(r), one pass over HBM."""
    z = jnp.maximum(y_ref[...] * s_ref[...] + b_ref[...], 0.0)
    o_ref[...] = z + (r_ref[...] * sr_ref[...] + br_ref[...])


# ------------------------------- wrappers -----------------------------------

def _im2col(xb, K, stride, Hout, Wout):
    """xb: already spatially padded NHWC bf16. Returns (N*Hout*Wout, K*K*Cin)."""
    N, _, _, Cin = xb.shape
    M = N * Hout * Wout
    taps = []
    for ky in range(K):
        for kx in range(K):
            sl = xb[:, ky:ky + (Hout - 1) * stride + 1:stride,
                       kx:kx + (Wout - 1) * stride + 1:stride, :]
            taps.append(sl.reshape(M, Cin))
    # TODO(synk): extract taps inside the kernel (halo blocks / manual DMA from pl.ANY)
    # to avoid materializing the K*K-inflated im2col in HBM for 3x3 convs.
    return taps[0] if len(taps) == 1 else jnp.concatenate(taps, axis=-1)


def conv1_and_shortcut_bn_stats(x, w1, ws, *, stride, cpad=LANES):
    """3x3/pad=1 conv and 1x1/pad=0 shortcut conv (same stride) fused in one kernel.

    x: (N,H,W,Cin) f32; w1: (3,3,Cin,Cout) HWIO; ws: (1,1,Cin,Cout) HWIO.
    Returns y1, ysc (M, cpad) f32 (padded lanes exactly zero), per-tile BN partial
    stats for both convs, and (Hout, Wout).
    """
    N, H, W, Cin = x.shape
    K = 3
    Cout = w1.shape[-1]
    assert Cout <= cpad
    Hout = (H + 2 - K) // stride + 1
    Wout = (W + 2 - K) // stride + 1
    M = N * Hout * Wout

    xb = jnp.pad(x.astype(jnp.bfloat16), ((0, 0), (1, 1), (1, 1), (0, 0)))
    im2col = _im2col(xb, K, stride, Hout, Wout)
    KKC = K * K * Cin

    # [conv1 | shortcut] on a shared contraction axis; the 1x1 shortcut only touches
    # the center-tap rows (tap index 4 of the 3x3 window == unpadded x at stride s).
    wcat = jnp.zeros((KKC, 2 * cpad), jnp.bfloat16)
    wcat = wcat.at[:, :Cout].set(w1.reshape(KKC, Cout).astype(jnp.bfloat16))
    wcat = wcat.at[4 * Cin:5 * Cin, cpad:cpad + Cout].set(
        ws.reshape(Cin, Cout).astype(jnp.bfloat16))

    TM = _pick_tile(M)
    T = M // TM
    big = pl.BlockSpec((TM, cpad), lambda i: (i, 0))
    stat = pl.BlockSpec((1, 1, cpad), lambda i: (i, 0, 0))
    y1, ysc, s1, q1, ss, qs = pl.pallas_call(
        functools.partial(_conv_dual_stats_kernel, cpad=cpad),
        grid=(T,),
        in_specs=[pl.BlockSpec((TM, KKC), lambda i: (i, 0)),
                  pl.BlockSpec((KKC, 2 * cpad), lambda i: (0, 0))],
        out_specs=[big, big, stat, stat, stat, stat],
        out_shape=[jax.ShapeDtypeStruct((M, cpad), jnp.float32)] * 2
        + [jax.ShapeDtypeStruct((T, 1, cpad), jnp.float32)] * 4,
        compiler_params=pltpu.CompilerParams(
            dimension_semantics=("parallel",), vmem_limit_bytes=_VMEM_LIMIT),
    )(im2col, wcat)
    return y1, ysc, (s1, q1), (ss, qs), (Hout, Wout)


def conv2d_bn_stats(x, w, *, stride, padding, cpad=LANES):
    """x: (N,H,W,Cin) f32/bf16, w: (K,K,Cin,Cout) HWIO.

    Returns y (M, cpad) f32 conv output (padded output channels are exactly zero),
    per-tile BN partial sums psum/psq (T,1,cpad), and (Hout, Wout).
    """
    N, H, W, Cin = x.shape
    K, _, _, Cout = w.shape
    assert Cout <= cpad
    Hout = (H + 2 * padding - K) // stride + 1
    Wout = (W + 2 * padding - K) // stride + 1
    M = N * Hout * Wout

    xb = x.astype(jnp.bfloat16)              # no-op if activation already bf16
    if padding:
        xb = jnp.pad(xb, ((0, 0), (padding, padding), (padding, padding), (0, 0)))
    im2col = _im2col(xb, K, stride, Hout, Wout)

    KKC = K * K * Cin
    wm = jnp.zeros((KKC, cpad), jnp.bfloat16)
    wm = wm.at[:, :Cout].set(w.reshape(KKC, Cout).astype(jnp.bfloat16))

    TM = _pick_tile(M)
    T = M // TM
    y, psum, psq = pl.pallas_call(
        _conv_stats_kernel,
        grid=(T,),
        in_specs=[pl.BlockSpec((TM, KKC), lambda i: (i, 0)),
                  pl.BlockSpec((KKC, cpad), lambda i: (0, 0))],
        out_specs=[pl.BlockSpec((TM, cpad), lambda i: (i, 0)),
                   pl.BlockSpec((1, 1, cpad), lambda i: (i, 0, 0)),
                   pl.BlockSpec((1, 1, cpad), lambda i: (i, 0, 0))],
        out_shape=[jax.ShapeDtypeStruct((M, cpad), jnp.float32),
                   jax.ShapeDtypeStruct((T, 1, cpad), jnp.float32),
                   jax.ShapeDtypeStruct((T, 1, cpad), jnp.float32)],
        compiler_params=pltpu.CompilerParams(
            dimension_semantics=("parallel",), vmem_limit_bytes=_VMEM_LIMIT),
    )(im2col, wm)
    return y, psum, psq, (Hout, Wout)


def bn_finalize(psum, psq, gamma, beta, count, *, cpad=LANES):
    """Per-tile sums -> (scale, shift) of shape (1, cpad); padded channels stay zero."""
    C = gamma.shape[0]
    g = jnp.zeros((1, cpad), jnp.float32).at[0, :C].set(gamma.astype(jnp.float32))
    b = jnp.zeros((1, cpad), jnp.float32).at[0, :C].set(beta.astype(jnp.float32))
    kernel = functools.partial(_bn_finalize_kernel, count=float(count), eps=EPS)
    scale, shift = pl.pallas_call(
        kernel,
        in_specs=[_VMEM, _VMEM, _VMEM, _VMEM],
        out_specs=[_VMEM, _VMEM],
        out_shape=[jax.ShapeDtypeStruct((1, cpad), jnp.float32)] * 2,
    )(psum, psq, g, b)
    return scale, shift


def affine_relu_bf16(y, scale, shift):
    """relu(y*scale + shift) written as bf16 (conv2 consumes bf16 anyway)."""
    M, cpad = y.shape
    TM = _pick_tile(M)
    big = pl.BlockSpec((TM, cpad), lambda i: (i, 0))
    small = pl.BlockSpec((1, cpad), lambda i: (0, 0))
    return pl.pallas_call(
        _affine_relu_kernel,
        grid=(M // TM,),
        in_specs=[big, small, small],
        out_specs=big,
        out_shape=jax.ShapeDtypeStruct((M, cpad), jnp.bfloat16),
        compiler_params=pltpu.CompilerParams(
            dimension_semantics=("parallel",), vmem_limit_bytes=_VMEM_LIMIT),
    )(y, scale, shift)


def affine_relu_add_affine(y, s, b, r, sr, br):
    M, cpad = y.shape
    TM = _pick_tile(M)
    big = pl.BlockSpec((TM, cpad), lambda i: (i, 0))
    small = pl.BlockSpec((1, cpad), lambda i: (0, 0))
    return pl.pallas_call(
        _affine_relu_add_affine_kernel,
        grid=(M // TM,),
        in_specs=[big, small, small, big, small, small],
        out_specs=big,
        out_shape=jax.ShapeDtypeStruct((M, cpad), jnp.float32),
        compiler_params=pltpu.CompilerParams(
            dimension_semantics=("parallel",), vmem_limit_bytes=_VMEM_LIMIT),
    )(y, s, b, r, sr, br)


def init_skip_block_params(key, in_ch, out_ch):
    """Deterministic synthetic params (shapes match SkipBlock.__init__)."""
    ks = jax.random.split(key, 9)

    def conv_w(k, kk, cin, cout):
        fan_in = kk * kk * cin
        return jax.random.normal(k, (kk, kk, cin, cout), jnp.float32) / jnp.sqrt(fan_in)

    return dict(
        w1=conv_w(ks[0], 3, in_ch, out_ch),                                   # conv1
        g1=1.0 + 0.1 * jax.random.normal(ks[1], (out_ch,), jnp.float32),      # bn1 weight
        b1=0.1 * jax.random.normal(ks[2], (out_ch,), jnp.float32),            # bn1 bias
        w2=conv_w(ks[3], 3, out_ch, out_ch),                                  # conv2
        g2=1.0 + 0.1 * jax.random.normal(ks[4], (out_ch,), jnp.float32),      # bn2 weight
        b2=0.1 * jax.random.normal(ks[5], (out_ch,), jnp.float32),            # bn2 bias
        ws=conv_w(ks[6], 1, in_ch, out_ch),                                   # shortcut conv1x1
        gs=1.0 + 0.1 * jax.random.normal(ks[7], (out_ch,), jnp.float32),      # shortcut bn weight
        bs=0.1 * jax.random.normal(ks[8], (out_ch,), jnp.float32),            # shortcut bn bias
    )


def skip_block_forward(x_nchw, params, *, stride=1):
    """Matches SkipBlock.forward; input/output are NCHW like PyTorch."""
    x = jnp.transpose(x_nchw, (0, 2, 3, 1)).astype(jnp.float32)   # NCHW -> NHWC
    N = x.shape[0]
    out_ch = params["w1"].shape[-1]

    # conv1 + shortcut conv1x1 in a single MXU pass (+ fused BN partial stats for both)
    y1, ysc, (ps1, pq1), (pss, pqs), (Ho, Wo) = conv1_and_shortcut_bn_stats(
        x, params["w1"], params["ws"], stride=stride)
    M = N * Ho * Wo

    # bn1 -> relu (bf16 activation feeding conv2)
    s1, b1 = bn_finalize(ps1, pq1, params["g1"], params["b1"], M)
    a1 = affine_relu_bf16(y1, s1, b1)                              # (M, 128) bf16, pads == 0

    # conv2 -> bn2 stats (slice back to real channels for the next im2col)
    a1_nhwc = a1.reshape(N, Ho, Wo, LANES)[..., :out_ch]
    y2, ps2, pq2, _ = conv2d_bn_stats(a1_nhwc, params["w2"], stride=1, padding=1)
    s2, b2 = bn_finalize(ps2, pq2, params["g2"], params["b2"], M)

    # shortcut BN scale/shift
    ss, bs = bn_finalize(pss, pqs, params["gs"], params["bs"], M)

    # fused tail: relu(bn2(y2)) + bn_shortcut(ysc), single HBM pass
    out = affine_relu_add_affine(y2, s2, b2, ysc, ss, bs)
    out = out.reshape(N, Ho, Wo, LANES)[..., :out_ch]
    return jnp.transpose(out, (0, 3, 1, 2))                        # NHWC -> NCHW


# ------------------------- pure-JAX reference check --------------------------

def _reference_forward(x_nchw, params, *, stride=1):
    x = jnp.transpose(x_nchw, (0, 2, 3, 1)).astype(jnp.float32)

    def conv(y, w, s, p):
        # bf16 operands / f32 accumulation, matching the MXU path of the Pallas kernels.
        return jax.lax.conv_general_dilated(
            y.astype(jnp.bfloat16), w.astype(jnp.bfloat16),
            window_strides=(s, s), padding=[(p, p), (p, p)],
            dimension_numbers=("NHWC", "HWIO", "NHWC"),
            preferred_element_type=jnp.float32)

    def bn(y, g, b, relu):
        mean = jnp.mean(y, axis=(0, 1, 2), keepdims=True)
        var = jnp.mean((y - mean) ** 2, axis=(0, 1, 2), keepdims=True)
        z = (y - mean) * jax.lax.rsqrt(var + EPS) * g + b
        return jnp.maximum(z, 0.0) if relu else z

    out = bn(conv(x, params["w1"], stride, 1), params["g1"], params["b1"], True)
    out = bn(conv(out, params["w2"], 1, 1), params["g2"], params["b2"], True)
    sc = bn(conv(x, params["ws"], stride, 0), params["gs"], params["bs"], False)
    return jnp.transpose(out + sc, (0, 3, 1, 2))


if __name__ == "__main__":
    in_ch, out_ch, stride = 4, 8, 1
    key = jax.random.PRNGKey(0)
    kx, kp = jax.random.split(key)
    x = jax.random.normal(kx, (2, in_ch, 16, 16), jnp.float32)   # NCHW, like PyTorch
    params = init_skip_block_params(kp, in_ch, out_ch)

    fwd = jax.jit(lambda xx, pp: skip_block_forward(xx, pp, stride=stride))
    y = jax.block_until_ready(fwd(x, params))

    y_ref = jax.block_until_ready(_reference_forward(x, params, stride=stride))
    assert y.shape == (2, out_ch, 16, 16)
    err = float(jnp.max(jnp.abs(y - y_ref)))
    assert jnp.allclose(y, y_ref, atol=1e-2, rtol=1e-2), err

    print("KERNEL_OK")
</pallas_src>

<mosaic_0001>
module attributes {stable_mosaic.version = 11 : i64} {
  func.func @_affine_relu_kernel(%arg0: i32, %arg1: memref<256x128xf32, #tpu.memory_space<vmem>>, %arg2: memref<1x128xf32, #tpu.memory_space<vmem>>, %arg3: memref<1x128xf32, #tpu.memory_space<vmem>>, %arg4: memref<256x128xbf16, #tpu.memory_space<vmem>>) attributes {dimension_semantics = [#tpu.dimension_semantics<parallel>], iteration_bounds = array<i64: 2>, scalar_prefetch = 0 : i64, scratch_operands = 0 : i64, tpu.core_type = #tpu.core_type<tc>, window_params = [{transform_indices = @transform_0, window_bounds = array<i64: 256, 128>}, {pipeline_mode = #tpu.pipeline_mode<synchronous>, transform_indices = @transform_1, window_bounds = array<i64: 1, 128>}, {pipeline_mode = #tpu.pipeline_mode<synchronous>, transform_indices = @transform_2, window_bounds = array<i64: 1, 128>}, {transform_indices = @transform_3, window_bounds = array<i64: 256, 128>}]} {
    %c0 = arith.constant 0 : index
    %c0_0 = arith.constant 0 : index
    %0 = vector.load %arg1[%c0, %c0_0] : memref<256x128xf32, #tpu.memory_space<vmem>>, vector<256x128xf32>
    %c0_1 = arith.constant 0 : index
    %c0_2 = arith.constant 0 : index
    %1 = vector.load %arg2[%c0_1, %c0_2] : memref<1x128xf32, #tpu.memory_space<vmem>>, vector<1x128xf32>
    %2 = vector.broadcast %1 : vector<1x128xf32> to vector<256x128xf32>
    %3 = arith.mulf %0, %2 : vector<256x128xf32>
    %c0_3 = arith.constant 0 : index
    %c0_4 = arith.constant 0 : index
    %4 = vector.load %arg3[%c0_3, %c0_4] : memref<1x128xf32, #tpu.memory_space<vmem>>, vector<1x128xf32>
    %5 = vector.broadcast %4 : vector<1x128xf32> to vector<256x128xf32>
    %6 = arith.addf %3, %5 : vector<256x128xf32>
    %cst = arith.constant 0.000000e+00 : f32
    %7 = vector.broadcast %cst : f32 to vector<256x128xf32>
    %8 = arith.maximumf %6, %7 : vector<256x128xf32>
    %9 = arith.truncf %8 : vector<256x128xf32> to vector<256x128xbf16>
    %c0_5 = arith.constant 0 : index
    %c0_6 = arith.constant 0 : index
    %10 = vector.load %arg4[%c0_5, %c0_6] : memref<256x128xbf16, #tpu.memory_space<vmem>>, vector<256x128xbf16>
    tpu.vector_store %arg4[%c0_5, %c0_6], %9 {strides = array<i32>} : memref<256x128xbf16, #tpu.memory_space<vmem>>, vector<256x128xbf16>,
    return
  }
  func.func @transform_0(%arg0: i32) -> (i32, i32) {
    %c0_i32 = arith.constant 0 : i32
    %c0_i32_0 = arith.constant 0 : i32
    return %arg0, %c0_i32 : i32, i32
  }
  func.func @transform_1(%arg0: i32) -> (i32, i32) {
    %c0_i32 = arith.constant 0 : i32
    %c0_i32_0 = arith.constant 0 : i32
    %c0_i32_1 = arith.constant 0 : i32
    return %c0_i32, %c0_i32_0 : i32, i32
  }
  func.func @transform_2(%arg0: i32) -> (i32, i32) {
    %c0_i32 = arith.constant 0 : i32
    %c0_i32_0 = arith.constant 0 : i32
    %c0_i32_1 = arith.constant 0 : i32
    return %c0_i32, %c0_i32_0 : i32, i32
  }
  func.func @transform_3(%arg0: i32) -> (i32, i32) {
    %c0_i32 = arith.constant 0 : i32
    %c0_i32_0 = arith.constant 0 : i32
    return %arg0, %c0_i32 : i32, i32
  }
}

module attributes {stable_mosaic.version = 11 : i64} {
  func.func @_bn_finalize_kernel(%arg0: memref<2x1x128xf32, #tpu.memory_space<vmem>>, %arg1: memref<2x1x128xf32, #tpu.memory_space<vmem>>, %arg2: memref<1x128xf32, #tpu.memory_space<vmem>>, %arg3: memref<1x128xf32, #tpu.memory_space<vmem>>, %arg4: memref<1x128xf32, #tpu.memory_space<vmem>>, %arg5: memref<1x128xf32, #tpu.memory_space<vmem>>) attributes {dimension_semantics = [], scalar_prefetch = 0 : i64, scratch_operands = 0 : i64, tpu.core_type = #tpu.core_type<tc>} {
    %c0 = arith.constant 0 : index
    %c0_0 = arith.constant 0 : index
    %c0_1 = arith.constant 0 : index
    %0 = vector.load %arg0[%c0, %c0_0, %c0_1] : memref<2x1x128xf32, #tpu.memory_space<vmem>>, vector<2x1x128xf32>
    %cst = arith.constant dense<0.000000e+00> : vector<1x128xf32>
    %1 = vector.multi_reduction <add>, %0, %cst [0] : vector<2x1x128xf32> to vector<1x128xf32>
    %cst_2 = arith.constant 0.001953125 : f32
    %2 = vector.broadcast %cst_2 : f32 to vector<1x128xf32>
    %3 = arith.mulf %1, %2 : vector<1x128xf32>
    %c0_3 = arith.constant 0 : index
    %c0_4 = arith.constant 0 : index
    %c0_5 = arith.constant 0 : index
    %4 = vector.load %arg1[%c0_3, %c0_4, %c0_5] : memref<2x1x128xf32, #tpu.memory_space<vmem>>, vector<2x1x128xf32>
    %cst_6 = arith.constant dense<0.000000e+00> : vector<1x128xf32>
    %5 = vector.multi_reduction <add>, %4, %cst_6 [0] : vector<2x1x128xf32> to vector<1x128xf32>
    %cst_7 = arith.constant 0.001953125 : f32
    %6 = vector.broadcast %cst_7 : f32 to vector<1x128xf32>
    %7 = arith.mulf %5, %6 : vector<1x128xf32>
    %8 = arith.mulf %3, %3 : vector<1x128xf32>
    %9 = arith.subf %7, %8 : vector<1x128xf32>
    %cst_8 = arith.constant 0.000000e+00 : f32
    %10 = vector.broadcast %cst_8 : f32 to vector<1x128xf32>
    %11 = arith.maximumf %9, %10 : vector<1x128xf32>
    %c0_9 = arith.constant 0 : index
    %c0_10 = arith.constant 0 : index
    %12 = vector.load %arg2[%c0_9, %c0_10] : memref<1x128xf32, #tpu.memory_space<vmem>>, vector<1x128xf32>
    %cst_11 = arith.constant 9.99999974E-6 : f32
    %13 = vector.broadcast %cst_11 : f32 to vector<1x128xf32>
    %14 = arith.addf %11, %13 : vector<1x128xf32>
    %15 = math.rsqrt %14 : vector<1x128xf32>
    %16 = arith.mulf %12, %15 : vector<1x128xf32>
    %c0_12 = arith.constant 0 : index
    %c0_13 = arith.constant 0 : index
    %17 = vector.load %arg4[%c0_12, %c0_13] : memref<1x128xf32, #tpu.memory_space<vmem>>, vector<1x128xf32>
    tpu.vector_store %arg4[%c0_12, %c0_13], %16 {strides = array<i32>} : memref<1x128xf32, #tpu.memory_space<vmem>>, vector<1x128xf32>,
    %c0_14 = arith.constant 0 : index
    %c0_15 = arith.constant 0 : index
    %18 = vector.load %arg3[%c0_14, %c0_15] : memref<1x128xf32, #tpu.memory_space<vmem>>, vector<1x128xf32>
    %19 = arith.mulf %3, %16 : vector<1x128xf32>
    %20 = arith.subf %18, %19 : vector<1x128xf32>
    %c0_16 = arith.constant 0 : index
    %c0_17 = arith.constant 0 : index
    %21 = vector.load %arg5[%c0_16, %c0_17] : memref<1x128xf32, #tpu.memory_space<vmem>>, vector<1x128xf32>
    tpu.vector_store %arg5[%c0_16, %c0_17], %20 {strides = array<i32>} : memref<1x128xf32, #tpu.memory_space<vmem>>, vector<1x128xf32>,
    return
  }
}

module attributes {stable_mosaic.version = 11 : i64} {
  func.func @_conv_dual_stats_kernel(%arg0: i32, %arg1: memref<256x36xbf16, #tpu.memory_space<vmem>>, %arg2: memref<36x256xbf16, #tpu.memory_space<vmem>>, %arg3: memref<256x128xf32, #tpu.memory_space<vmem>>, %arg4: memref<256x128xf32, #tpu.memory_space<vmem>>, %arg5: memref<1x1x128xf32, #tpu.memory_space<vmem>>, %arg6: memref<1x1x128xf32, #tpu.memory_space<vmem>>, %arg7: memref<1x1x128xf32, #tpu.memory_space<vmem>>, %arg8: memref<1x1x128xf32, #tpu.memory_space<vmem>>) attributes {dimension_semantics = [#tpu.dimension_semantics<parallel>], iteration_bounds = array<i64: 2>, scalar_prefetch = 0 : i64, scratch_operands = 0 : i64, tpu.core_type = #tpu.core_type<tc>, window_params = [{transform_indices = @transform_0, window_bounds = array<i64: 256, 36>}, {pipeline_mode = #tpu.pipeline_mode<synchronous>, transform_indices = @transform_1, window_bounds = array<i64: 36, 256>}, {transform_indices = @transform_2, window_bounds = array<i64: 256, 128>}, {transform_indices = @transform_3, window_bounds = array<i64: 256, 128>}, {transform_indices = @transform_4, window_bounds = array<i64: 1, 1, 128>}, {transform_indices = @transform_5, window_bounds = array<i64: 1, 1, 128>}, {transform_indices = @transform_6, window_bounds = array<i64: 1, 1, 128>}, {transform_indices = @transform_7, window_bounds = array<i64: 1, 1, 128>}]} {
    %c0 = arith.constant 0 : index
    %c0_0 = arith.constant 0 : index
    %0 = vector.load %arg1[%c0, %c0_0] : memref<256x36xbf16, #tpu.memory_space<vmem>>, vector<256x36xbf16>
    %c0_1 = arith.constant 0 : index
    %c0_2 = arith.constant 0 : index
    %1 = vector.load %arg2[%c0_1, %c0_2] : memref<36x256xbf16, #tpu.memory_space<vmem>>, vector<36x256xbf16>
    %cst = arith.constant dense<0.000000e+00> : vector<256x256xf32>
    %2 = tpu.matmul %0, %1, %cst {dimension_numbers = #tpu.dot_dimension_numbers<[1], [0], [0], [1], [0, 0, 1, 1], [], []>} : vector<256x36xbf16>, vector<36x256xbf16>, vector<256x256xf32> -> vector<256x256xf32>
    %3 = vector.extract_strided_slice %2 {offsets = [0, 0], sizes = [256, 128], strides = [1, 1]} : vector<256x256xf32> to vector<256x128xf32>
    %4 = vector.extract_strided_slice %2 {offsets = [0, 128], sizes = [256, 128], strides = [1, 1]} : vector<256x256xf32> to vector<256x128xf32>
    %c0_3 = arith.constant 0 : index
    %c0_4 = arith.constant 0 : index
    %5 = vector.load %arg3[%c0_3, %c0_4] : memref<256x128xf32, #tpu.memory_space<vmem>>, vector<256x128xf32>
    tpu.vector_store %arg3[%c0_3, %c0_4], %3 {strides = array<i32>} : memref<256x128xf32, #tpu.memory_space<vmem>>, vector<256x128xf32>,
    %c0_5 = arith.constant 0 : index
    %c0_6 = arith.constant 0 : index
    %6 = vector.load %arg4[%c0_5, %c0_6] : memref<256x128xf32, #tpu.memory_space<vmem>>, vector<256x128xf32>
    tpu.vector_store %arg4[%c0_5, %c0_6], %4 {strides = array<i32>} : memref<256x128xf32, #tpu.memory_space<vmem>>, vector<256x128xf32>,
    %cst_7 = arith.constant dense<0.000000e+00> : vector<128xf32>
    %7 = vector.multi_reduction <add>, %3, %cst_7 [0] : vector<256x128xf32> to vector<128xf32>
    %8 = vector.shape_cast %7 : vector<128xf32> to vector<1x1x128xf32>
    %c0_8 = arith.constant 0 : index
    %c0_9 = arith.constant 0 : index
    %c0_10 = arith.constant 0 : index
    %9 = vector.load %arg5[%c0_8, %c0_9, %c0_10] : memref<1x1x128xf32, #tpu.memory_space<vmem>>, vector<1x1x128xf32>
    tpu.vector_store %arg5[%c0_8, %c0_9, %c0_10], %8 {strides = array<i32>} : memref<1x1x128xf32, #tpu.memory_space<vmem>>, vector<1x1x128xf32>,
    %10 = arith.mulf %3, %3 : vector<256x128xf32>
    %cst_11 = arith.constant dense<0.000000e+00> : vector<128xf32>
    %11 = vector.multi_reduction <add>, %10, %cst_11 [0] : vector<256x128xf32> to vector<128xf32>
    %12 = vector.shape_cast %11 : vector<128xf32> to vector<1x1x128xf32>
    %c0_12 = arith.constant 0 : index
    %c0_13 = arith.constant 0 : index
    %c0_14 = arith.constant 0 : index
    %13 = vector.load %arg6[%c0_12, %c0_13, %c0_14] : memref<1x1x128xf32, #tpu.memory_space<vmem>>, vector<1x1x128xf32>
    tpu.vector_store %arg6[%c0_12, %c0_13, %c0_14], %12 {strides = array<i32>} : memref<1x1x128xf32, #tpu.memory_space<vmem>>, vector<1x1x128xf32>,
    %cst_15 = arith.constant dense<0.000000e+00> : vector<128xf32>
    %14 = vector.multi_reduction <add>, %4, %cst_15 [0] : vector<256x128xf32> to vector<128xf32>
    %15 = vector.shape_cast %14 : vector<128xf32> to vector<1x1x128xf32>
    %c0_16 = arith.constant 0 : index
    %c0_17 = arith.constant 0 : index
    %c0_18 = arith.constant 0 : index
    %16 = vector.load %arg7[%c0_16, %c0_17, %c0_18] : memref<1x1x128xf32, #tpu.memory_space<vmem>>, vector<1x1x128xf32>
    tpu.vector_store %arg7[%c0_16, %c0_17, %c0_18], %15 {strides = array<i32>} : memref<1x1x128xf32, #tpu.memory_space<vmem>>, vector<1x1x128xf32>,
    %17 = arith.mulf %4, %4 : vector<256x128xf32>
    %cst_19 = arith.constant dense<0.000000e+00> : vector<128xf32>
    %18 = vector.multi_reduction <add>, %17, %cst_19 [0] : vector<256x128xf32> to vector<128xf32>
    %19 = vector.shape_cast %18 : vector<128xf32> to vector<1x1x128xf32>
    %c0_20 = arith.constant 0 : index
    %c0_21 = arith.constant 0 : index
    %c0_22 = arith.constant 0 : index
    %20 = vector.load %arg8[%c0_20, %c0_21, %c0_22] : memref<1x1x128xf32, #tpu.memory_space<vmem>>, vector<1x1x128xf32>
    tpu.vector_store %arg8[%c0_20, %c0_21, %c0_22], %19 {strides = array<i32>} : memref<1x1x128xf32, #tpu.memory_space<vmem>>, vector<1x1x128xf32>,
    return
  }
  func.func @transform_0(%arg0: i32) -> (i32, i32) {
    %c0_i32 = arith.constant 0 : i32
    %c0_i32_0 = arith.constant 0 : i32
    return %arg0, %c0_i32 : i32, i32
  }
  func.func @transform_1(%arg0: i32) -> (i32, i32) {
    %c0_i32 = arith.constant 0 : i32
    %c0_i32_0 = arith.constant 0 : i32
    %c0_i32_1 = arith.constant 0 : i32
    return %c0_i32, %c0_i32_0 : i32, i32
  }
  func.func @transform_2(%arg0: i32) -> (i32, i32) {
    %c0_i32 = arith.constant 0 : i32
    %c0_i32_0 = arith.constant 0 : i32
    return %arg0, %c0_i32 : i32, i32
  }
  func.func @transform_3(%arg0: i32) -> (i32, i32) {
    %c0_i32 = arith.constant 0 : i32
    %c0_i32_0 = arith.constant 0 : i32
    return %arg0, %c0_i32 : i32, i32
  }
  func.func @transform_4(%arg0: i32) -> (i32, i32, i32) {
    %c0_i32 = arith.constant 0 : i32
    %c0_i32_0 = arith.constant 0 : i32
    %c0_i32_1 = arith.constant 0 : i32
    return %arg0, %c0_i32, %c0_i32_0 : i32, i32, i32
  }
  func.func @transform_5(%arg0: i32) -> (i32, i32, i32) {
    %c0_i32 = arith.constant 0 : i32
    %c0_i32_0 = arith.constant 0 : i32
    %c0_i32_1 = arith.constant 0 : i32
    return %arg0, %c0_i32, %c0_i32_0 : i32, i32, i32
  }
  func.func @transform_6(%arg0: i32) -> (i32, i32, i32) {
    %c0_i32 = arith.constant 0 : i32
    %c0_i32_0 = arith.constant 0 : i32
    %c0_i32_1 = arith.constant 0 : i32
    return %arg0, %c0_i32, %c0_i32_0 : i32, i32, i32
  }
  func.func @transform_7(%arg0: i32) -> (i32, i32, i32) {
    %c0_i32 = arith.constant 0 : i32
    %c0_i32_0 = arith.constant 0 : i32
    %c0_i32_1 = arith.constant 0 : i32
    return %arg0, %c0_i32, %c0_i32_0 : i32, i32, i32
  }
}

module attributes {stable_mosaic.version = 11 : i64} {
  func.func @_conv_stats_kernel(%arg0: i32, %arg1: memref<256x72xbf16, #tpu.memory_space<vmem>>, %arg2: memref<72x128xbf16, #tpu.memory_space<vmem>>, %arg3: memref<256x128xf32, #tpu.memory_space<vmem>>, %arg4: memref<1x1x128xf32, #tpu.memory_space<vmem>>, %arg5: memref<1x1x128xf32, #tpu.memory_space<vmem>>) attributes {dimension_semantics = [#tpu.dimension_semantics<parallel>], iteration_bounds = array<i64: 2>, scalar_prefetch = 0 : i64, scratch_operands = 0 : i64, tpu.core_type = #tpu.core_type<tc>, window_params = [{transform_indices = @transform_0, window_bounds = array<i64: 256, 72>}, {pipeline_mode = #tpu.pipeline_mode<synchronous>, transform_indices = @transform_1, window_bounds = array<i64: 72, 128>}, {transform_indices = @transform_2, window_bounds = array<i64: 256, 128>}, {transform_indices = @transform_3, window_bounds = array<i64: 1, 1, 128>}, {transform_indices = @transform_4, window_bounds = array<i64: 1, 1, 128>}]} {
    %c0 = arith.constant 0 : index
    %c0_0 = arith.constant 0 : index
    %0 = vector.load %arg1[%c0, %c0_0] : memref<256x72xbf16, #tpu.memory_space<vmem>>, vector<256x72xbf16>
    %c0_1 = arith.constant 0 : index
    %c0_2 = arith.constant 0 : index
    %1 = vector.load %arg2[%c0_1, %c0_2] : memref<72x128xbf16, #tpu.memory_space<vmem>>, vector<72x128xbf16>
    %cst = arith.constant dense<0.000000e+00> : vector<256x128xf32>
    %2 = tpu.matmul %0, %1, %cst {dimension_numbers = #tpu.dot_dimension_numbers<[1], [0], [0], [1], [0, 0, 1, 1], [], []>} : vector<256x72xbf16>, vector<72x128xbf16>, vector<256x128xf32> -> vector<256x128xf32>
    %c0_3 = arith.constant 0 : index
    %c0_4 = arith.constant 0 : index
    %3 = vector.load %arg3[%c0_3, %c0_4] : memref<256x128xf32, #tpu.memory_space<vmem>>, vector<256x128xf32>
    tpu.vector_store %arg3[%c0_3, %c0_4], %2 {strides = array<i32>} : memref<256x128xf32, #tpu.memory_space<vmem>>, vector<256x128xf32>,
    %cst_5 = arith.constant dense<0.000000e+00> : vector<128xf32>
    %4 = vector.multi_reduction <add>, %2, %cst_5 [0] : vector<256x128xf32> to vector<128xf32>
    %5 = vector.shape_cast %4 : vector<128xf32> to vector<1x1x128xf32>
    %c0_6 = arith.constant 0 : index
    %c0_7 = arith.constant 0 : index
    %c0_8 = arith.constant 0 : index
    %6 = vector.load %arg4[%c0_6, %c0_7, %c0_8] : memref<1x1x128xf32, #tpu.memory_space<vmem>>, vector<1x1x128xf32>
    tpu.vector_store %arg4[%c0_6, %c0_7, %c0_8], %5 {strides = array<i32>} : memref<1x1x128xf32, #tpu.memory_space<vmem>>, vector<1x1x128xf32>,
    %7 = arith.mulf %2, %2 : vector<256x128xf32>
    %cst_9 = arith.constant dense<0.000000e+00> : vector<128xf32>
    %8 = vector.multi_reduction <add>, %7, %cst_9 [0] : vector<256x128xf32> to vector<128xf32>
    %9 = vector.shape_cast %8 : vector<128xf32> to vector<1x1x128xf32>
    %c0_10 = arith.constant 0 : index
    %c0_11 = arith.constant 0 : index
    %c0_12 = arith.constant 0 : index
    %10 = vector.load %arg5[%c0_10, %c0_11, %c0_12] : memref<1x1x128xf32, #tpu.memory_space<vmem>>, vector<1x1x128xf32>
    tpu.vector_store %arg5[%c0_10, %c0_11, %c0_12], %9 {strides = array<i32>} : memref<1x1x128xf32, #tpu.memory_space<vmem>>, vector<1x1x128xf32>,
    return
  }
  func.func @transform_0(%arg0: i32) -> (i32, i32) {
    %c0_i32 = arith.constant 0 : i32
    %c0_i32_0 = arith.constant 0 : i32
    return %arg0, %c0_i32 : i32, i32
  }
  func.func @transform_1(%arg0: i32) -> (i32, i32) {
    %c0_i32 = arith.constant 0 : i32
    %c0_i32_0 = arith.constant 0 : i32
    %c0_i32_1 = arith.constant 0 : i32
    return %c0_i32, %c0_i32_0 : i32, i32
  }
  func.func @transform_2(%arg0: i32) -> (i32, i32) {
    %c0_i32 = arith.constant 0 : i32
    %c0_i32_0 = arith.constant 0 : i32
    return %arg0, %c0_i32 : i32, i32
  }
  func.func @transform_3(%arg0: i32) -> (i32, i32, i32) {
    %c0_i32 = arith.constant 0 : i32
    %c0_i32_0 = arith.constant 0 : i32
    %c0_i32_1 = arith.constant 0 : i32
    return %arg0, %c0_i32, %c0_i32_0 : i32, i32, i32
  }
  func.func @transform_4(%arg0: i32) -> (i32, i32, i32) {
    %c0_i32 = arith.constant 0 : i32
    %c0_i32_0 = arith.constant 0 : i32
    %c0_i32_1 = arith.constant 0 : i32
    return %arg0, %c0_i32, %c0_i32_0 : i32, i32, i32
  }
}

module attributes {stable_mosaic.version = 11 : i64} {
  func.func @_affine_relu_add_affine_kernel(%arg0: i32, %arg1: memref<256x128xf32, #tpu.memory_space<vmem>>, %arg2: memref<1x128xf32, #tpu.memory_space<vmem>>, %arg3: memref<1x128xf32, #tpu.memory_space<vmem>>, %arg4: memref<256x128xf32, #tpu.memory_space<vmem>>, %arg5: memref<1x128xf32, #tpu.memory_space<vmem>>, %arg6: memref<1x128xf32, #tpu.memory_space<vmem>>, %arg7: memref<256x128xf32, #tpu.memory_space<vmem>>) attributes {dimension_semantics = [#tpu.dimension_semantics<parallel>], iteration_bounds = array<i64: 2>, scalar_prefetch = 0 : i64, scratch_operands = 0 : i64, tpu.core_type = #tpu.core_type<tc>, window_params = [{transform_indices = @transform_0, window_bounds = array<i64: 256, 128>}, {pipeline_mode = #tpu.pipeline_mode<synchronous>, transform_indices = @transform_1, window_bounds = array<i64: 1, 128>}, {pipeline_mode = #tpu.pipeline_mode<synchronous>, transform_indices = @transform_2, window_bounds = array<i64: 1, 128>}, {transform_indices = @transform_3, window_bounds = array<i64: 256, 128>}, {pipeline_mode = #tpu.pipeline_mode<synchronous>, transform_indices = @transform_4, window_bounds = array<i64: 1, 128>}, {pipeline_mode = #tpu.pipeline_mode<synchronous>, transform_indices = @transform_5, window_bounds = array<i64: 1, 128>}, {transform_indices = @transform_6, window_bounds = array<i64: 256, 128>}]} {
    %c0 = arith.constant 0 : index
    %c0_0 = arith.constant 0 : index
    %0 = vector.load %arg1[%c0, %c0_0] : memref<256x128xf32, #tpu.memory_space<vmem>>, vector<256x128xf32>
    %c0_1 = arith.constant 0 : index
    %c0_2 = arith.constant 0 : index
    %1 = vector.load %arg2[%c0_1, %c0_2] : memref<1x128xf32, #tpu.memory_space<vmem>>, vector<1x128xf32>
    %2 = vector.broadcast %1 : vector<1x128xf32> to vector<256x128xf32>
    %3 = arith.mulf %0, %2 : vector<256x128xf32>
    %c0_3 = arith.constant 0 : index
    %c0_4 = arith.constant 0 : index
    %4 = vector.load %arg3[%c0_3, %c0_4] : memref<1x128xf32, #tpu.memory_space<vmem>>, vector<1x128xf32>
    %5 = vector.broadcast %4 : vector<1x128xf32> to vector<256x128xf32>
    %6 = arith.addf %3, %5 : vector<256x128xf32>
    %cst = arith.constant 0.000000e+00 : f32
    %7 = vector.broadcast %cst : f32 to vector<256x128xf32>
    %8 = arith.maximumf %6, %7 : vector<256x128xf32>
    %c0_5 = arith.constant 0 : index
    %c0_6 = arith.constant 0 : index
    %9 = vector.load %arg4[%c0_5, %c0_6] : memref<256x128xf32, #tpu.memory_space<vmem>>, vector<256x128xf32>
    %c0_7 = arith.constant 0 : index
    %c0_8 = arith.constant 0 : index
    %10 = vector.load %arg5[%c0_7, %c0_8] : memref<1x128xf32, #tpu.memory_space<vmem>>, vector<1x128xf32>
    %11 = vector.broadcast %10 : vector<1x128xf32> to vector<256x128xf32>
    %12 = arith.mulf %9, %11 : vector<256x128xf32>
    %c0_9 = arith.constant 0 : index
    %c0_10 = arith.constant 0 : index
    %13 = vector.load %arg6[%c0_9, %c0_10] : memref<1x128xf32, #tpu.memory_space<vmem>>, vector<1x128xf32>
    %14 = vector.broadcast %13 : vector<1x128xf32> to vector<256x128xf32>
    %15 = arith.addf %12, %14 : vector<256x128xf32>
    %16 = arith.addf %8, %15 : vector<256x128xf32>
    %c0_11 = arith.constant 0 : index
    %c0_12 = arith.constant 0 : index
    %17 = vector.load %arg7[%c0_11, %c0_12] : memref<256x128xf32, #tpu.memory_space<vmem>>, vector<256x128xf32>
    tpu.vector_store %arg7[%c0_11, %c0_12], %16 {strides = array<i32>} : memref<256x128xf32, #tpu.memory_space<vmem>>, vector<256x128xf32>,
    return
  }
  func.func @transform_0(%arg0: i32) -> (i32, i32) {
    %c0_i32 = arith.constant 0 : i32
    %c0_i32_0 = arith.constant 0 : i32
    return %arg0, %c0_i32 : i32, i32
  }
  func.func @transform_1(%arg0: i32) -> (i32, i32) {
    %c0_i32 = arith.constant 0 : i32
    %c0_i32_0 = arith.constant 0 : i32
    %c0_i32_1 = arith.constant 0 : i32
    return %c0_i32, %c0_i32_0 : i32, i32
  }
  func.func @transform_2(%arg0: i32) -> (i32, i32) {
    %c0_i32 = arith.constant 0 : i32
    %c0_i32_0 = arith.constant 0 : i32
    %c0_i32_1 = arith.constant 0 : i32
    return %c0_i32, %c0_i32_0 : i32, i32
  }
  func.func @transform_3(%arg0: i32) -> (i32, i32) {
    %c0_i32 = arith.constant 0 : i32
    %c0_i32_0 = arith.constant 0 : i32
    return %arg0, %c0_i32 : i32, i32
  }
  func.func @transform_4(%arg0: i32) -> (i32, i32) {
    %c0_i32 = arith.constant 0 : i32
    %c0_i32_0 = arith.constant 0 : i32
    %c0_i32_1 = arith.constant 0 : i32
    return %c0_i32, %c0_i32_0 : i32, i32
  }
  func.func @transform_5(%arg0: i32) -> (i32, i32) {
    %c0_i32 = arith.constant 0 : i32
    %c0_i32_0 = arith.constant 0 : i32
    %c0_i32_1 = arith.constant 0 : i32
    return %c0_i32, %c0_i32_0 : i32, i32
  }
  func.func @transform_6(%arg0: i32) -> (i32, i32) {
    %c0_i32 = arith.constant 0 : i32
    %c0_i32_0 = arith.constant 0 : i32
    return %arg0, %c0_i32 : i32, i32
  }
}

</mosaic_0001>

<llo_original>
// kernel: _lambda_.8
$region0: #{_lambda_.8}
  #allocation0 [shape = 'u32[]', space=smem, size = 0x4, offset = 0x4, fixed_abs, tag = 'smem constant byte address 0x4 - core index']
  #allocation1 [shape = 'u32[144,128]{1,0:T(1,128)}', space=vmem, size = 0x12000, scoped, tag = 'internal scratch']
  %s0 = inlined_call_operand.vmem [shape: f32[2,1,128], index: 0, kind: input, shape index: {}]
  %s1 = inlined_call_operand.vmem [shape: f32[2,1,128], index: 1, kind: input, shape index: {}]
  %s2 = inlined_call_operand.vmem [shape: f32[1,128], index: 2, kind: input, shape index: {}]
  %s3 = inlined_call_operand.vmem [shape: f32[1,128], index: 3, kind: input, shape index: {}]
  %s4 = inlined_call_operand.vmem [shape: f32[1,128], index: 4, kind: output, shape index: {0}]
  %s5 = inlined_call_operand.vmem [shape: f32[1,128], index: 5, kind: output, shape index: {1}]
  %6 = xla_tuple %s4, %s5
  %s7 = sld [smem:[#allocation0]]
  $region34: #{_lambda_.8} parent=0
    _
  %s9 = ssub.s32 1, %s7
  %s10 = scalar_select 0, %s9, %s7
  // Predicated region
  $region2: #{_lambda_.8} parent=0 // pred_check
    _
  $region3: #{_lambda_.8} parent=0 // pred_check_branch
    %12 = sbr.rel (0) target = $region5
  $region4: #{_lambda_.8} parent=0 // pred_region
    _
  $region5: #{_lambda_.8} parent=0 // pred_fallthru
    _
  // Predicated region
  $region6: #{_lambda_.8} parent=0 // pred_check
    _
  $region7: #{_lambda_.8} parent=0 // pred_check_branch
    %14 = sbr.rel (0) target = $region9
  $region8: #{_lambda_.8} parent=0 // pred_region
    _
  $region9: #{_lambda_.8} parent=0 // pred_fallthru
    _
  // Predicated region
  $region10: #{_lambda_.8} parent=0 // pred_check
    _
  $region11: #{_lambda_.8} parent=0 // pred_check_branch
    %16 = sbr.rel (0) target = $region13
  $region12: #{_lambda_.8} parent=0 // pred_region
    _
  $region13: #{_lambda_.8} parent=0 // pred_fallthru
    _
  // Predicated region
  $region14: #{_lambda_.8} parent=0 // pred_check
    _
  $region15: #{_lambda_.8} parent=0 // pred_check_branch
    %18 = sbr.rel (0) target = $region17
  $region16: #{_lambda_.8} parent=0 // pred_region
    _
  $region17: #{_lambda_.8} parent=0 // pred_fallthru
    _
  %v19 = vld [vmem:[%s0] sm:$0x1]
  %v20 = vld [vmem:[%s0 + $0x1] sm:$0x1]
  %vm21 = vcmask 1040384
  %v22 = vsel %vm21, %v19, 0.0
  %v23 = vsel %vm21, %v20, 0.0
  %v24 = vadd.f32 %v22, %v23
  %v25 = vmul.f32 %v24, 0.001953125
  %v26 = vld [vmem:[%s1] sm:$0x1]
  %v27 = vld [vmem:[%s1 + $0x1] sm:$0x1]
  %v28 = vsel %vm21, %v26, 0.0
  %v29 = vsel %vm21, %v27, 0.0
  %v30 = vadd.f32 %v28, %v29
  %v31 = vmul.f32 %v30, 0.001953125
  %v32 = vmul.f32 %v25, %v25
  %v33 = vsub.f32 %v31, %v32
  %v34 = vmax.f32 %v33, 0.0
  %v35 = vld [vmem:[%s2] sm:$0x1]
  %v36 = vadd.f32 %v34, 1e-05
  %v37 = vrsqrt.pop %v36
  %v38 = vmul.f32 %v35, %v37
  %39 = vst [vmem:[%s4] sm:$0x1] %v38
  %v40 = vld [vmem:[%s3] sm:$0x1]
  %v41 = vmul.f32 %v25, %v38
  %v42 = vsub.f32 %v40, %v41
  %43 = vst [vmem:[%s5] sm:$0x1] %v42
  // Predicated region
  $region18: #{_lambda_.8} parent=0 // pred_check
    _
  $region19: #{_lambda_.8} parent=0 // pred_check_branch
    %45 = sbr.rel (0) target = $region21
  $region20: #{_lambda_.8} parent=0 // pred_region
    _
  $region21: #{_lambda_.8} parent=0 // pred_fallthru
    _
  // Predicated region
  $region22: #{_lambda_.8} parent=0 // pred_check
    _
  $region23: #{_lambda_.8} parent=0 // pred_check_branch
    %47 = sbr.rel (0) target = $region25
  $region24: #{_lambda_.8} parent=0 // pred_region
    _
  $region25: #{_lambda_.8} parent=0 // pred_fallthru
    _
  // Predicated region
  $region26: #{_lambda_.8} parent=0 // pred_check
    _
  $region27: #{_lambda_.8} parent=0 // pred_check_branch
    %49 = sbr.rel (0) target = $region29
  $region28: #{_lambda_.8} parent=0 // pred_region
    _
  $region29: #{_lambda_.8} parent=0 // pred_fallthru
    _
  // Predicated region
  $region30: #{_lambda_.8} parent=0 // pred_check
    _
  $region31: #{_lambda_.8} parent=0 // pred_check_branch
    %51 = sbr.rel (0) target = $region33
  $region32: #{_lambda_.8} parent=0 // pred_region
    _
  $region33: #{_lambda_.8} parent=0 // pred_fallthru
    _

// kernel: _lambda_.9
$region0: #{_lambda_.9}
  #allocation0 [shape = 'u32[]', space=smem, size = 0x4, offset = 0x4, fixed_abs, tag = 'smem constant byte address 0x4 - core index']
  #allocation1 [shape = 'u32[144,128]{1,0:T(1,128)}', space=vmem, size = 0x12000, scoped, tag = 'internal scratch']
  %s0 = inlined_call_operand.vmem [shape: f32[512,128], index: 0, kind: input, shape index: {}]
  %s1 = inlined_call_operand.vmem [shape: f32[1,128], index: 1, kind: input, shape index: {}]
  %s2 = inlined_call_operand.vmem [shape: f32[1,128], index: 2, kind: input, shape index: {}]
  %s3 = inlined_call_operand.vmem [shape: bf16[512,128], index: 3, kind: output, shape index: {}]
  %s4 = sld [smem:[#allocation0]]
  $region45: #{_lambda_.9} parent=0
    _
  %s6 = ssub.s32 1, %s4
  %s7 = scalar_select 0, %s6, %s4
  loop: start=0, step=1, limit=4
  $region2: #{_lambda_.9} parent=0 // loop_pre_header
    _
  $region3: #{_lambda_.9} parent=0 // loop_header
    %s9 = sphi 0, %s13
    %p10 = scmp.ge.s32.totalorder %s9, 4
    %s19 = sphi 0, %s21
    %s22 = sphi 0, %s19
    %s23 = sphi 0, %s22
    %s39 = sphi 0, %s23
    %s43 = sphi 0, %s43
    %s45 = sphi 0, %s43
    %s46 = sphi 0, %s45
    %s60 = sphi 0, %s46
    %s64 = sphi 0, %s64
    %s66 = sphi 0, %s64
    %s67 = sphi 0, %s66
    %s81 = sphi 0, %s67
    %s87 = sphi 0, %s89
    %s90 = sphi 0, %s87
    %s91 = sphi 0, %s90
    %s107 = sphi 0, %s91
  $region4: #{_lambda_.9} parent=0 // loop_header_branch
    %12 = sbr.rel (%p10) target = $region8
  $region5: #{_lambda_.9} parent=0 // loop_body
    %s14 = ssub.s32 %s9, 1
    %s15 = ssub.s32 %s9, 2
    %s16 = sadd.s32 %s9, 1
    %s17 = ssub.s32 %s9, %s16
    %p18 = scmp.eq.s32.totalorder %s17, 0
    %s20 = sadd.s32 %s19, 1
    %s21 = scalar_select %p18, %s19, %s20
    %p24 = pneg %p18
    %p25 = scmp.eq.s32.totalorder %s9, 1
    %p26 = por %p24, %p25
    %p27 = scmp.ne.s32.totalorder %s19, %s22
    %p28 = scmp.eq.s32.totalorder %s9, 0
    %p29 = por %p27, %p28
    %p30 = scmp.ne.s32.totalorder %s19, %s22
    %p31 = scmp.eq.s32.totalorder %s14, 1
    %p32 = por %p30, %p31
    %p33 = scmp.ne.s32.totalorder %s22, %s23
    %p34 = scmp.eq.s32.totalorder %s14, 0
    %p35 = por %p33, %p34
    %p36 = scmp.ne.s32.totalorder %s22, %s23
    %p37 = scmp.eq.s32.totalorder %s15, 1
    %p38 = por %p36, %p37
    %p40 = scmp.ne.s32.totalorder %s23, %s39
    %p41 = scmp.eq.s32.totalorder %s15, 0
    %p42 = por %p40, %p41
    %s44 = sadd.s32 %s43, 1
    %p47 = scmp.eq.s32.totalorder %s9, 1
    %p48 = scmp.ne.s32.totalorder %s43, %s45
    %p49 = scmp.eq.s32.totalorder %s9, 0
    %p50 = por %p48, %p49
    %p51 = scmp.ne.s32.totalorder %s43, %s45
    %p52 = scmp.eq.s32.totalorder %s14, 1
    %p53 = por %p51, %p52
    %p54 = scmp.ne.s32.totalorder %s45, %s46
    %p55 = scmp.eq.s32.totalorder %s14, 0
    %p56 = por %p54, %p55
    %p57 = scmp.ne.s32.totalorder %s45, %s46
    %p58 = scmp.eq.s32.totalorder %s15, 1
    %p59 = por %p57, %p58
    %p61 = scmp.ne.s32.totalorder %s46, %s60
    %p62 = scmp.eq.s32.totalorder %s15, 0
    %p63 = por %p61, %p62
    %s65 = sadd.s32 %s64, 1
    %p68 = scmp.eq.s32.totalorder %s9, 1
    %p69 = scmp.ne.s32.totalorder %s64, %s66
    %p70 = scmp.eq.s32.totalorder %s9, 0
    %p71 = por %p69, %p70
    %p72 = scmp.ne.s32.totalorder %s64, %s66
    %p73 = scmp.eq.s32.totalorder %s14, 1
    %p74 = por %p72, %p73
    %p75 = scmp.ne.s32.totalorder %s66, %s67
    %p76 = scmp.eq.s32.totalorder %s14, 0
    %p77 = por %p75, %p76
    %p78 = scmp.ne.s32.totalorder %s66, %s67
    %p79 = scmp.eq.s32.totalorder %s15, 1
    %p80 = por %p78, %p79
    %p82 = scmp.ne.s32.totalorder %s67, %s81
    %p83 = scmp.eq.s32.totalorder %s15, 0
    %p84 = por %p82, %p83
    %s85 = ssub.s32 %s9, %s16
    %p86 = scmp.eq.s32.totalorder %s85, 0
    %s88 = sadd.s32 %s87, 1
    %s89 = scalar_select %p86, %s87, %s88
    %p92 = pneg %p86
    %p93 = scmp.eq.s32.totalorder %s9, 1
    %p94 = por %p92, %p93
    %p95 = scmp.ne.s32.totalorder %s87, %s90
    %p96 = scmp.eq.s32.totalorder %s9, 0
    %p97 = por %p95, %p96
    %p98 = scmp.ne.s32.totalorder %s87, %s90
    %p99 = scmp.eq.s32.totalorder %s14, 1
    %p100 = por %p98, %p99
    %p101 = scmp.ne.s32.totalorder %s90, %s91
    %p102 = scmp.eq.s32.totalorder %s14, 0
    %p103 = por %p101, %p102
    %p104 = scmp.ne.s32.totalorder %s90, %s91
    %p105 = scmp.eq.s32.totalorder %s15, 1
    %p106 = por %p104, %p105
    %p108 = scmp.ne.s32.totalorder %s91, %s107
    %p109 = scmp.eq.s32.totalorder %s15, 0
    %p110 = por %p108, %p109
    %p111 = scmp.le.s32.totalorder 1, %s9
    %p112 = scmp.lt.s32.totalorder %s9, 3
    %p113 = pnand %p111, %p112
    %p114 = pneg %p113
    // Predicated region
    $region9: #{_lambda_.9} parent=5 // pred_check
      _
    $region10: #{_lambda_.9} parent=5 // pred_check_branch
      %116 = sbr.rel (%p113) target = $region12
    $region11: #{_lambda_.9} parent=5 // pred_region
      %s117 = ssub.s32 %s9, 1
      // Predicated region
      $region13: #{_lambda_.9} parent=11 // pred_check
        %p118 = pneg %p56
      $region14: #{_lambda_.9} parent=11 // pred_check_branch
        %120 = sbr.rel (%p118) target = $region16
      $region15: #{_lambda_.9} parent=11 // pred_region
        _
      $region16: #{_lambda_.9} parent=11 // pred_fallthru
        _
      // Predicated region
      $region17: #{_lambda_.9} parent=11 // pred_check
        %p121 = pneg %p77
      $region18: #{_lambda_.9} parent=11 // pred_check_branch
        %123 = sbr.rel (%p121) target = $region20
      $region19: #{_lambda_.9} parent=11 // pred_region
        _
      $region20: #{_lambda_.9} parent=11 // pred_fallthru
        _
    $region12: #{_lambda_.9} parent=5 // pred_fallthru
      _
    %p124 = scmp.lt.s32.totalorder %s9, 2
    // Predicated region
    $region21: #{_lambda_.9} parent=5 // pred_check
      %p125 = pneg %p124
    $region22: #{_lambda_.9} parent=5 // pred_check_branch
      %127 = sbr.rel (%p125) target = $region24
    $region23: #{_lambda_.9} parent=5 // pred_region
      // Predicated region
      $region25: #{_lambda_.9} parent=23 // pred_check
        %p128 = pneg %p29
      $region26: #{_lambda_.9} parent=23 // pred_check_branch
        %130 = sbr.rel (%p128) target = $region28
      $region27: #{_lambda_.9} parent=23 // pred_region
        %s131 = smul.u32 32, %s9
        %p132 = scmp.lt.s32.totalorder %s131, 63
        %s133 = scalar_select %p132, %s131, 63
        %s134 = smul.addr %s133, 8
        %s135 = scalar_lea.vmem %s0, %s134
        %s136 = smul.u32 32, %s9
      $region28: #{_lambda_.9} parent=23 // pred_fallthru
        _
    $region24: #{_lambda_.9} parent=5 // pred_fallthru
      _
    %p137 = scmp.le.s32.totalorder 1, %s9
    %p138 = scmp.lt.s32.totalorder %s9, 3
    %p139 = pnand %p137, %p138
    %p140 = pneg %p139
    // Predicated region
    $region29: #{_lambda_.9} parent=5 // pred_check
      _
    $region30: #{_lambda_.9} parent=5 // pred_check_branch
      %142 = sbr.rel (%p139) target = $region32
    $region31: #{_lambda_.9} parent=5 // pred_region
      %s143 = ssub.s32 %s9, 1
      %s144 = smul.u32 32, %s14
      %p145 = scmp.lt.s32.totalorder %s144, 63
      %s146 = scalar_select %p145, %s144, 63
      %s147 = smul.addr %s146, 8
      %s148 = scalar_lea.vmem %s0, %s147
      %p149 = pneg %p35
      %p150 = pneg %p32
      %p151 = pneg %p56
      %p152 = pneg %p53
      %p153 = pneg %p77
      %p154 = pneg %p74
      %p155 = pneg %p103
      %p156 = pneg %p100
      %s157 = smul.u32 32, %s14
      %p158 = scmp.lt.s32.totalorder %s157, 63
      %s159 = scalar_select %p158, %s157, 63
      %s160 = smul.addr %s159, 4
      %s161 = scalar_lea.vmem %s3, %s160
      %s162 = smul.u32 32, %s14
      %p163 = scmp.lt.s32.totalorder %s162, 63
      %s164 = scalar_select %p163, %s162, 63
      %s165 = smul.addr %s164, 8
      %s166 = scalar_lea.vmem %s0, %s165
      %s167 = smul.u32 32, %s14
      %s168 = smul.u32 32, %s14
      %p169 = scmp.lt.s32.totalorder %s168, 63
      %s170 = scalar_select %p169, %s168, 63
      %s171 = smul.addr %s170, 4
      %s172 = scalar_lea.vmem %s3, %s171
      %s173 = smul.u32 32, %s14
      %v174 = vld [vmem:[%s166] sm:$0xff]
      %v175 = vld [vmem:[%s166 + $0x8] sm:$0xff]
      %v176 = vld [vmem:[%s166 + $0x10] sm:$0xff]
      %v177 = vld [vmem:[%s166 + $0x18] sm:$0xff]
      %v178 = vld [vmem:[%s166 + $0x20] sm:$0xff]
      %v179 = vld [vmem:[%s166 + $0x28] sm:$0xff]
      %v180 = vld [vmem:[%s166 + $0x30] sm:$0xff]
      %v181 = vld [vmem:[%s166 + $0x38] sm:$0xff]
      %v182 = vld [vmem:[%s166 + $0x40] sm:$0xff]
      %v183 = vld [vmem:[%s166 + $0x48] sm:$0xff]
      %v184 = vld [vmem:[%s166 + $0x50] sm:$0xff]
      %v185 = vld [vmem:[%s166 + $0x58] sm:$0xff]
      %v186 = vld [vmem:[%s166 + $0x60] sm:$0xff]
      %v187 = vld [vmem:[%s166 + $0x68] sm:$0xff]
      %v188 = vld [vmem:[%s166 + $0x70] sm:$0xff]
      %v189 = vld [vmem:[%s166 + $0x78] sm:$0xff]
      %v190 = vld [vmem:[%s166 + $0x80] sm:$0xff]
      %v191 = vld [vmem:[%s166 + $0x88] sm:$0xff]
      %v192 = vld [vmem:[%s166 + $0x90] sm:$0xff]
      %v193 = vld [vmem:[%s166 + $0x98] sm:$0xff]
      %v194 = vld [vmem:[%s166 + $0xa0] sm:$0xff]
      %v195 = vld [vmem:[%s166 + $0xa8] sm:$0xff]
      %v196 = vld [vmem:[%s166 + $0xb0] sm:$0xff]
      %v197 = vld [vmem:[%s166 + $0xb8] sm:$0xff]
      %v198 = vld [vmem:[%s166 + $0xc0] sm:$0xff]
      %v199 = vld [vmem:[%s166 + $0xc8] sm:$0xff]
      %v200 = vld [vmem:[%s166 + $0xd0] sm:$0xff]
      %v201 = vld [vmem:[%s166 + $0xd8] sm:$0xff]
      %v202 = vld [vmem:[%s166 + $0xe0] sm:$0xff]
      %v203 = vld [vmem:[%s166 + $0xe8] sm:$0xff]
      %v204 = vld [vmem:[%s166 + $0xf0] sm:$0xff]
      %v205 = vld [vmem:[%s166 + $0xf8] sm:$0xff]
      %v206 = vld [vmem:[%s1] sm:$0x1]
      %v208 = vlaneseq
      %v209 = vshrl.u32 %v208, 7
      %v210 = vsub.s32 0, %v209
      %v211 = vrot.slane %v206, %v210
      %v213 = vmul.f32 %v174, %v211
      %v214 = vmul.f32 %v175, %v211
      %v215 = vmul.f32 %v176, %v211
      %v216 = vmul.f32 %v177, %v211
      %v217 = vmul.f32 %v178, %v211
      %v218 = vmul.f32 %v179, %v211
      %v219 = vmul.f32 %v180, %v211
      %v220 = vmul.f32 %v181, %v211
      %v221 = vmul.f32 %v182, %v211
      %v222 = vmul.f32 %v183, %v211
      %v223 = vmul.f32 %v184, %v211
      %v224 = vmul.f32 %v185, %v211
      %v225 = vmul.f32 %v186, %v211
      %v226 = vmul.f32 %v187, %v211
      %v227 = vmul.f32 %v188, %v211
      %v228 = vmul.f32 %v189, %v211
      %v229 = vmul.f32 %v190, %v211
      %v230 = vmul.f32 %v191, %v211
      %v231 = vmul.f32 %v192, %v211
      %v232 = vmul.f32 %v193, %v211
      %v233 = vmul.f32 %v194, %v211
      %v234 = vmul.f32 %v195, %v211
      %v235 = vmul.f32 %v196, %v211
      %v236 = vmul.f32 %v197, %v211
      %v237 = vmul.f32 %v198, %v211
      %v238 = vmul.f32 %v199, %v211
      %v239 = vmul.f32 %v200, %v211
      %v240 = vmul.f32 %v201, %v211
      %v241 = vmul.f32 %v202, %v211
      %v242 = vmul.f32 %v203, %v211
      %v243 = vmul.f32 %v204, %v211
      %v244 = vmul.f32 %v205, %v211
      %v245 = vld [vmem:[%s2] sm:$0x1]
      %v247 = vlaneseq
      %v248 = vshrl.u32 %v247, 7
      %v249 = vsub.s32 0, %v248
      %v250 = vrot.slane %v245, %v249
      %v252 = vadd.f32 %v213, %v250
      %v253 = vadd.f32 %v214, %v250
      %v254 = vadd.f32 %v215, %v250
      %v255 = vadd.f32 %v216, %v250
      %v256 = vadd.f32 %v217, %v250
      %v257 = vadd.f32 %v218, %v250
      %v258 = vadd.f32 %v219, %v250
      %v259 = vadd.f32 %v220, %v250
      %v260 = vadd.f32 %v221, %v250
      %v261 = vadd.f32 %v222, %v250
      %v262 = vadd.f32 %v223, %v250
      %v263 = vadd.f32 %v224, %v250
      %v264 = vadd.f32 %v225, %v250
      %v265 = vadd.f32 %v226, %v250
      %v266 = vadd.f32 %v227, %v250
      %v267 = vadd.f32 %v228, %v250
      %v268 = vadd.f32 %v229, %v250
      %v269 = vadd.f32 %v230, %v250
      %v270 = vadd.f32 %v231, %v250
      %v271 = vadd.f32 %v232, %v250
      %v272 = vadd.f32 %v233, %v250
      %v273 = vadd.f32 %v234, %v250
      %v274 = vadd.f32 %v235, %v250
      %v275 = vadd.f32 %v236, %v250
      %v276 = vadd.f32 %v237, %v250
      %v277 = vadd.f32 %v238, %v250
      %v278 = vadd.f32 %v239, %v250
      %v279 = vadd.f32 %v240, %v250
      %v280 = vadd.f32 %v241, %v250
      %v281 = vadd.f32 %v242, %v250
      %v282 = vadd.f32 %v243, %v250
      %v283 = vadd.f32 %v244, %v250
      %v284 = vmax.f32 %v252, 0.0
      %v285 = vmax.f32 %v253, 0.0
      %v286 = vmax.f32 %v254, 0.0
      %v287 = vmax.f32 %v255, 0.0
      %v288 = vmax.f32 %v256, 0.0
      %v289 = vmax.f32 %v257, 0.0
      %v290 = vmax.f32 %v258, 0.0
      %v291 = vmax.f32 %v259, 0.0
      %v292 = vmax.f32 %v260, 0.0
      %v293 = vmax.f32 %v261, 0.0
      %v294 = vmax.f32 %v262, 0.0
      %v295 = vmax.f32 %v263, 0.0
      %v296 = vmax.f32 %v264, 0.0
      %v297 = vmax.f32 %v265, 0.0
      %v298 = vmax.f32 %v266, 0.0
      %v299 = vmax.f32 %v267, 0.0
      %v300 = vmax.f32 %v268, 0.0
      %v301 = vmax.f32 %v269, 0.0
      %v302 = vmax.f32 %v270, 0.0
      %v303 = vmax.f32 %v271, 0.0
      %v304 = vmax.f32 %v272, 0.0
      %v305 = vmax.f32 %v273, 0.0
      %v306 = vmax.f32 %v274, 0.0
      %v307 = vmax.f32 %v275, 0.0
      %v308 = vmax.f32 %v276, 0.0
      %v309 = vmax.f32 %v277, 0.0
      %v310 = vmax.f32 %v278, 0.0
      %v311 = vmax.f32 %v279, 0.0
      %v312 = vmax.f32 %v280, 0.0
      %v313 = vmax.f32 %v281, 0.0
      %v314 = vmax.f32 %v282, 0.0
      %v315 = vmax.f32 %v283, 0.0
      %v316 = vpack.c.bf16 %v285, %v284
      %v317 = vpack.c.bf16 %v287, %v286
      %v318 = vpack.c.bf16 %v289, %v288
      %v319 = vpack.c.bf16 %v291, %v290
      %v320 = vpack.c.bf16 %v293, %v292
      %v321 = vpack.c.bf16 %v295, %v294
      %v322 = vpack.c.bf16 %v297, %v296
      %v323 = vpack.c.bf16 %v299, %v298
      %v324 = vpack.c.bf16 %v301, %v300
      %v325 = vpack.c.bf16 %v303, %v302
      %v326 = vpack.c.bf16 %v305, %v304
      %v327 = vpack.c.bf16 %v307, %v306
      %v328 = vpack.c.bf16 %v309, %v308
      %v329 = vpack.c.bf16 %v311, %v310
      %v330 = vpack.c.bf16 %v313, %v312
      %v331 = vpack.c.bf16 %v315, %v314
      %v348 = vunpack.c.l.b16 %v316
      %v349 = vunpack.c.h.b16 %v316
      %v350 = vunpack.c.l.b16 %v317
      %v351 = vunpack.c.h.b16 %v317
      %v352 = vunpack.c.l.b16 %v318
      %v353 = vunpack.c.h.b16 %v318
      %v354 = vunpack.c.l.b16 %v319
      %v355 = vunpack.c.h.b16 %v319
      %v356 = vunpack.c.l.b16 %v320
      %v357 = vunpack.c.h.b16 %v320
      %v358 = vunpack.c.l.b16 %v321
      %v359 = vunpack.c.h.b16 %v321
      %v360 = vunpack.c.l.b16 %v322
      %v361 = vunpack.c.h.b16 %v322
      %v362 = vunpack.c.l.b16 %v323
      %v363 = vunpack.c.h.b16 %v323
      %v364 = vunpack.c.l.b16 %v324
      %v365 = vunpack.c.h.b16 %v324
      %v366 = vunpack.c.l.b16 %v325
      %v367 = vunpack.c.h.b16 %v325
      %v368 = vunpack.c.l.b16 %v326
      %v369 = vunpack.c.h.b16 %v326
      %v370 = vunpack.c.l.b16 %v327
      %v371 = vunpack.c.h.b16 %v327
      %v372 = vunpack.c.l.b16 %v328
      %v373 = vunpack.c.h.b16 %v328
      %v374 = vunpack.c.l.b16 %v329
      %v375 = vunpack.c.h.b16 %v329
      %v376 = vunpack.c.l.b16 %v330
      %v377 = vunpack.c.h.b16 %v330
      %v378 = vunpack.c.l.b16 %v331
      %v379 = vunpack.c.h.b16 %v331
      %v380 = vpack.c.b16 %v348, %v348
      %v381 = vpack.c.b16 %v349, %v349
      %v382 = vpack.c.b16 %v350, %v350
      %v383 = vpack.c.b16 %v351, %v351
      %v384 = vpack.c.b16 %v352, %v352
      %v385 = vpack.c.b16 %v353, %v353
      %v386 = vpack.c.b16 %v354, %v354
      %v387 = vpack.c.b16 %v355, %v355
      %v388 = vpack.c.b16 %v356, %v356
      %v389 = vpack.c.b16 %v357, %v357
      %v390 = vpack.c.b16 %v358, %v358
      %v391 = vpack.c.b16 %v359, %v359
      %v392 = vpack.c.b16 %v360, %v360
      %v393 = vpack.c.b16 %v361, %v361
      %v394 = vpack.c.b16 %v362, %v362
      %v395 = vpack.c.b16 %v363, %v363
      %v396 = vpack.c.b16 %v364, %v364
      %v397 = vpack.c.b16 %v365, %v365
      %v398 = vpack.c.b16 %v366, %v366
      %v399 = vpack.c.b16 %v367, %v367
      %v400 = vpack.c.b16 %v368, %v368
      %v401 = vpack.c.b16 %v369, %v369
      %v402 = vpack.c.b16 %v370, %v370
      %v403 = vpack.c.b16 %v371, %v371
      %v404 = vpack.c.b16 %v372, %v372
      %v405 = vpack.c.b16 %v373, %v373
      %v406 = vpack.c.b16 %v374, %v374
      %v407 = vpack.c.b16 %v375, %v375
      %v408 = vpack.c.b16 %v376, %v376
      %v409 = vpack.c.b16 %v377, %v377
      %v410 = vpack.c.b16 %v378, %v378
      %v411 = vpack.c.b16 %v379, %v379
      %444 = vst [vmem:[%s172] sm:$0xf] %v380
      %445 = vst [vmem:[%s172 + $0x4] sm:$0xf] %v381
      %446 = vst [vmem:[%s172 + $0x8] sm:$0xf] %v382
      %447 = vst [vmem:[%s172 + $0xc] sm:$0xf] %v383
      %448 = vst [vmem:[%s172 + $0x10] sm:$0xf] %v384
      %449 = vst [vmem:[%s172 + $0x14] sm:$0xf] %v385
      %450 = vst [vmem:[%s172 + $0x18] sm:$0xf] %v386
      %451 = vst [vmem:[%s172 + $0x1c] sm:$0xf] %v387
      %452 = vst [vmem:[%s172 + $0x20] sm:$0xf] %v388
      %453 = vst [vmem:[%s172 + $0x24] sm:$0xf] %v389
      %454 = vst [vmem:[%s172 + $0x28] sm:$0xf] %v390
      %455 = vst [vmem:[%s172 + $0x2c] sm:$0xf] %v391
      %456 = vst [vmem:[%s172 + $0x30] sm:$0xf] %v392
      %457 = vst [vmem:[%s172 + $0x34] sm:$0xf] %v393
      %458 = vst [vmem:[%s172 + $0x38] sm:$0xf] %v394
      %459 = vst [vmem:[%s172 + $0x3c] sm:$0xf] %v395
      %460 = vst [vmem:[%s172 + $0x40] sm:$0xf] %v396
      %461 = vst [vmem:[%s172 + $0x44] sm:$0xf] %v397
      %462 = vst [vmem:[%s172 + $0x48] sm:$0xf] %v398
      %463 = vst [vmem:[%s172 + $0x4c] sm:$0xf] %v399
      %464 = vst [vmem:[%s172 + $0x50] sm:$0xf] %v400
      %465 = vst [vmem:[%s172 + $0x54] sm:$0xf] %v401
      %466 = vst [vmem:[%s172 + $0x58] sm:$0xf] %v402
      %467 = vst [vmem:[%s172 + $0x5c] sm:$0xf] %v403
      %468 = vst [vmem:[%s172 + $0x60] sm:$0xf] %v404
      %469 = vst [vmem:[%s172 + $0x64] sm:$0xf] %v405
      %470 = vst [vmem:[%s172 + $0x68] sm:$0xf] %v406
      %471 = vst [vmem:[%s172 + $0x6c] sm:$0xf] %v407
      %472 = vst [vmem:[%s172 + $0x70] sm:$0xf] %v408
      %473 = vst [vmem:[%s172 + $0x74] sm:$0xf] %v409
      %474 = vst [vmem:[%s172 + $0x78] sm:$0xf] %v410
      %475 = vst [vmem:[%s172 + $0x7c] sm:$0xf] %v411
      %s476 = smul.u32 32, %s14
      %p477 = scmp.lt.s32.totalorder %s476, 63
      %s478 = scalar_select %p477, %s476, 63
      %s479 = smul.addr %s478, 4
      %s480 = scalar_lea.vmem %s3, %s479
      // Predicated region
      $region33: #{_lambda_.9} parent=31 // pred_check
        %p481 = pneg %p100
      $region34: #{_lambda_.9} parent=31 // pred_check_branch
        %483 = sbr.rel (%p481) target = $region36
      $region35: #{_lambda_.9} parent=31 // pred_region
        %s484 = smul.u32 32, %s14
      $region36: #{_lambda_.9} parent=31 // pred_fallthru
        _
    $region32: #{_lambda_.9} parent=5 // pred_fallthru
      _
    %p485 = scmp.le.s32.totalorder 2, %s9
    // Predicated region
    $region37: #{_lambda_.9} parent=5 // pred_check
      %p486 = pneg %p485
    $region38: #{_lambda_.9} parent=5 // pred_check_branch
      %488 = sbr.rel (%p486) target = $region40
    $region39: #{_lambda_.9} parent=5 // pred_region
      %s489 = ssub.s32 %s9, 2
      // Predicated region
      $region41: #{_lambda_.9} parent=39 // pred_check
        %p490 = pneg %p106
      $region42: #{_lambda_.9} parent=39 // pred_check_branch
        %492 = sbr.rel (%p490) target = $region44
      $region43: #{_lambda_.9} parent=39 // pred_region
        %s493 = smul.u32 32, %s15
        %p494 = scmp.lt.s32.totalorder %s493, 63
        %s495 = scalar_select %p494, %s493, 63
        %s496 = smul.addr %s495, 4
        %s497 = scalar_lea.vmem %s3, %s496
      $region44: #{_lambda_.9} parent=39 // pred_fallthru
        _
    $region40: #{_lambda_.9} parent=5 // pred_fallthru
      _
  $region6: #{_lambda_.9} parent=0 // loop_footer
    %s13 = sadd.s32 1, %s9
  $region7: #{_lambda_.9} parent=0 // loop_footer_branch
    %8 = sbr.rel target = $region3
  $region8: #{_lambda_.9} parent=0 // loop_exit
    _

// kernel: _lambda_.7
$region0: #{_lambda_.7}
  #allocation0 [shape = 'u32[]', space=smem, size = 0x4, offset = 0x4, fixed_abs, tag = 'smem constant byte address 0x4 - core index']
  #allocation1 [shape = 'u32[144,128]{1,0:T(1,128)}', space=vmem, size = 0x12000, scoped, tag = 'internal scratch']
  %s0 = inlined_call_operand.vmem [shape: bf16[512,36], index: 0, kind: input, shape index: {}]
  %s1 = inlined_call_operand.vmem [shape: bf16[36,256], index: 1, kind: input, shape index: {}]
  %s2 = inlined_call_operand.vmem [shape: f32[512,128], index: 2, kind: output, shape index: {0}]
  %s3 = inlined_call_operand.vmem [shape: f32[512,128], index: 3, kind: output, shape index: {1}]
  %s4 = inlined_call_operand.vmem [shape: f32[2,1,128], index: 4, kind: output, shape index: {2}]
  %s5 = inlined_call_operand.vmem [shape: f32[2,1,128], index: 5, kind: output, shape index: {3}]
  %s6 = inlined_call_operand.vmem [shape: f32[2,1,128], index: 6, kind: output, shape index: {4}]
  %s7 = inlined_call_operand.vmem [shape: f32[2,1,128], index: 7, kind: output, shape index: {5}]
  %8 = xla_tuple %s2, %s3, %s4, %s5, %s6, %s7
  %s9 = sld [smem:[#allocation0]]
  $region81: #{_lambda_.7} parent=0
    _
  %s11 = ssub.s32 1, %s9
  %s12 = scalar_select 0, %s11, %s9
  loop: start=0, step=1, limit=4
  $region2: #{_lambda_.7} parent=0 // loop_pre_header
    _
  $region3: #{_lambda_.7} parent=0 // loop_header
    %s14 = sphi 0, %s18
    %p15 = scmp.ge.s32.totalorder %s14, 4
    %s24 = sphi 0, %s26
    %s27 = sphi 0, %s24
    %s28 = sphi 0, %s27
    %s44 = sphi 0, %s28
    %s48 = sphi 0, %s48
    %s50 = sphi 0, %s48
    %s51 = sphi 0, %s50
    %s65 = sphi 0, %s51
    %s71 = sphi 0, %s73
    %s74 = sphi 0, %s71
    %s75 = sphi 0, %s74
    %s91 = sphi 0, %s75
    %s97 = sphi 0, %s99
    %s100 = sphi 0, %s97
    %s101 = sphi 0, %s100
    %s117 = sphi 0, %s101
    %s123 = sphi 0, %s125
    %s126 = sphi 0, %s123
    %s127 = sphi 0, %s126
    %s143 = sphi 0, %s127
    %s149 = sphi 0, %s151
    %s152 = sphi 0, %s149
    %s153 = sphi 0, %s152
    %s169 = sphi 0, %s153
    %s175 = sphi 0, %s177
    %s178 = sphi 0, %s175
    %s179 = sphi 0, %s178
    %s195 = sphi 0, %s179
    %s201 = sphi 0, %s203
    %s204 = sphi 0, %s201
    %s205 = sphi 0, %s204
    %s221 = sphi 0, %s205
  $region4: #{_lambda_.7} parent=0 // loop_header_branch
    %17 = sbr.rel (%p15) target = $region8
  $region5: #{_lambda_.7} parent=0 // loop_body
    %s19 = ssub.s32 %s14, 1
    %s20 = ssub.s32 %s14, 2
    %s21 = sadd.s32 %s14, 1
    %s22 = ssub.s32 %s14, %s21
    %p23 = scmp.eq.s32.totalorder %s22, 0
    %s25 = sadd.s32 %s24, 1
    %s26 = scalar_select %p23, %s24, %s25
    %p29 = pneg %p23
    %p30 = scmp.eq.s32.totalorder %s14, 1
    %p31 = por %p29, %p30
    %p32 = scmp.ne.s32.totalorder %s24, %s27
    %p33 = scmp.eq.s32.totalorder %s14, 0
    %p34 = por %p32, %p33
    %p35 = scmp.ne.s32.totalorder %s24, %s27
    %p36 = scmp.eq.s32.totalorder %s19, 1
    %p37 = por %p35, %p36
    %p38 = scmp.ne.s32.totalorder %s27, %s28
    %p39 = scmp.eq.s32.totalorder %s19, 0
    %p40 = por %p38, %p39
    %p41 = scmp.ne.s32.totalorder %s27, %s28
    %p42 = scmp.eq.s32.totalorder %s20, 1
    %p43 = por %p41, %p42
    %p45 = scmp.ne.s32.totalorder %s28, %s44
    %p46 = scmp.eq.s32.totalorder %s20, 0
    %p47 = por %p45, %p46
    %s49 = sadd.s32 %s48, 1
    %p52 = scmp.eq.s32.totalorder %s14, 1
    %p53 = scmp.ne.s32.totalorder %s48, %s50
    %p54 = scmp.eq.s32.totalorder %s14, 0
    %p55 = por %p53, %p54
    %p56 = scmp.ne.s32.totalorder %s48, %s50
    %p57 = scmp.eq.s32.totalorder %s19, 1
    %p58 = por %p56, %p57
    %p59 = scmp.ne.s32.totalorder %s50, %s51
    %p60 = scmp.eq.s32.totalorder %s19, 0
    %p61 = por %p59, %p60
    %p62 = scmp.ne.s32.totalorder %s50, %s51
    %p63 = scmp.eq.s32.totalorder %s20, 1
    %p64 = por %p62, %p63
    %p66 = scmp.ne.s32.totalorder %s51, %s65
    %p67 = scmp.eq.s32.totalorder %s20, 0
    %p68 = por %p66, %p67
    %s69 = ssub.s32 %s14, %s21
    %p70 = scmp.eq.s32.totalorder %s69, 0
    %s72 = sadd.s32 %s71, 1
    %s73 = scalar_select %p70, %s71, %s72
    %p76 = pneg %p70
    %p77 = scmp.eq.s32.totalorder %s14, 1
    %p78 = por %p76, %p77
    %p79 = scmp.ne.s32.totalorder %s71, %s74
    %p80 = scmp.eq.s32.totalorder %s14, 0
    %p81 = por %p79, %p80
    %p82 = scmp.ne.s32.totalorder %s71, %s74
    %p83 = scmp.eq.s32.totalorder %s19, 1
    %p84 = por %p82, %p83
    %p85 = scmp.ne.s32.totalorder %s74, %s75
    %p86 = scmp.eq.s32.totalorder %s19, 0
    %p87 = por %p85, %p86
    %p88 = scmp.ne.s32.totalorder %s74, %s75
    %p89 = scmp.eq.s32.totalorder %s20, 1
    %p90 = por %p88, %p89
    %p92 = scmp.ne.s32.totalorder %s75, %s91
    %p93 = scmp.eq.s32.totalorder %s20, 0
    %p94 = por %p92, %p93
    %s95 = ssub.s32 %s14, %s21
    %p96 = scmp.eq.s32.totalorder %s95, 0
    %s98 = sadd.s32 %s97, 1
    %s99 = scalar_select %p96, %s97, %s98
    %p102 = pneg %p96
    %p103 = scmp.eq.s32.totalorder %s14, 1
    %p104 = por %p102, %p103
    %p105 = scmp.ne.s32.totalorder %s97, %s100
    %p106 = scmp.eq.s32.totalorder %s14, 0
    %p107 = por %p105, %p106
    %p108 = scmp.ne.s32.totalorder %s97, %s100
    %p109 = scmp.eq.s32.totalorder %s19, 1
    %p110 = por %p108, %p109
    %p111 = scmp.ne.s32.totalorder %s100, %s101
    %p112 = scmp.eq.s32.totalorder %s19, 0
    %p113 = por %p111, %p112
    %p114 = scmp.ne.s32.totalorder %s100, %s101
    %p115 = scmp.eq.s32.totalorder %s20, 1
    %p116 = por %p114, %p115
    %p118 = scmp.ne.s32.totalorder %s101, %s117
    %p119 = scmp.eq.s32.totalorder %s20, 0
    %p120 = por %p118, %p119
    %s121 = ssub.s32 %s14, %s21
    %p122 = scmp.eq.s32.totalorder %s121, 0
    %s124 = sadd.s32 %s123, 1
    %s125 = scalar_select %p122, %s123, %s124
    %p128 = pneg %p122
    %p129 = scmp.eq.s32.totalorder %s14, 1
    %p130 = por %p128, %p129
    %p131 = scmp.ne.s32.totalorder %s123, %s126
    %p132 = scmp.eq.s32.totalorder %s14, 0
    %p133 = por %p131, %p132
    %p134 = scmp.ne.s32.totalorder %s123, %s126
    %p135 = scmp.eq.s32.totalorder %s19, 1
    %p136 = por %p134, %p135
    %p137 = scmp.ne.s32.totalorder %s126, %s127
    %p138 = scmp.eq.s32.totalorder %s19, 0
    %p139 = por %p137, %p138
    %p140 = scmp.ne.s32.totalorder %s126, %s127
    %p141 = scmp.eq.s32.totalorder %s20, 1
    %p142 = por %p140, %p141
    %p144 = scmp.ne.s32.totalorder %s127, %s143
    %p145 = scmp.eq.s32.totalorder %s20, 0
    %p146 = por %p144, %p145
    %s147 = ssub.s32 %s14, %s21
    %p148 = scmp.eq.s32.totalorder %s147, 0
    %s150 = sadd.s32 %s149, 1
    %s151 = scalar_select %p148, %s149, %s150
    %p154 = pneg %p148
    %p155 = scmp.eq.s32.totalorder %s14, 1
    %p156 = por %p154, %p155
    %p157 = scmp.ne.s32.totalorder %s149, %s152
    %p158 = scmp.eq.s32.totalorder %s14, 0
    %p159 = por %p157, %p158
    %p160 = scmp.ne.s32.totalorder %s149, %s152
    %p161 = scmp.eq.s32.totalorder %s19, 1
    %p162 = por %p160, %p161
    %p163 = scmp.ne.s32.totalorder %s152, %s153
    %p164 = scmp.eq.s32.totalorder %s19, 0
    %p165 = por %p163, %p164
    %p166 = scmp.ne.s32.totalorder %s152, %s153
    %p167 = scmp.eq.s32.totalorder %s20, 1
    %p168 = por %p166, %p167
    %p170 = scmp.ne.s32.totalorder %s153, %s169
    %p171 = scmp.eq.s32.totalorder %s20, 0
    %p172 = por %p170, %p171
    %s173 = ssub.s32 %s14, %s21
    %p174 = scmp.eq.s32.totalorder %s173, 0
    %s176 = sadd.s32 %s175, 1
    %s177 = scalar_select %p174, %s175, %s176
    %p180 = pneg %p174
    %p181 = scmp.eq.s32.totalorder %s14, 1
    %p182 = por %p180, %p181
    %p183 = scmp.ne.s32.totalorder %s175, %s178
    %p184 = scmp.eq.s32.totalorder %s14, 0
    %p185 = por %p183, %p184
    %p186 = scmp.ne.s32.totalorder %s175, %s178
    %p187 = scmp.eq.s32.totalorder %s19, 1
    %p188 = por %p186, %p187
    %p189 = scmp.ne.s32.totalorder %s178, %s179
    %p190 = scmp.eq.s32.totalorder %s19, 0
    %p191 = por %p189, %p190
    %p192 = scmp.ne.s32.totalorder %s178, %s179
    %p193 = scmp.eq.s32.totalorder %s20, 1
    %p194 = por %p192, %p193
    %p196 = scmp.ne.s32.totalorder %s179, %s195
    %p197 = scmp.eq.s32.totalorder %s20, 0
    %p198 = por %p196, %p197
    %s199 = ssub.s32 %s14, %s21
    %p200 = scmp.eq.s32.totalorder %s199, 0
    %s202 = sadd.s32 %s201, 1
    %s203 = scalar_select %p200, %s201, %s202
    %p206 = pneg %p200
    %p207 = scmp.eq.s32.totalorder %s14, 1
    %p208 = por %p206, %p207
    %p209 = scmp.ne.s32.totalorder %s201, %s204
    %p210 = scmp.eq.s32.totalorder %s14, 0
    %p211 = por %p209, %p210
    %p212 = scmp.ne.s32.totalorder %s201, %s204
    %p213 = scmp.eq.s32.totalorder %s19, 1
    %p214 = por %p212, %p213
    %p215 = scmp.ne.s32.totalorder %s204, %s205
    %p216 = scmp.eq.s32.totalorder %s19, 0
    %p217 = por %p215, %p216
    %p218 = scmp.ne.s32.totalorder %s204, %s205
    %p219 = scmp.eq.s32.totalorder %s20, 1
    %p220 = por %p218, %p219
    %p222 = scmp.ne.s32.totalorder %s205, %s221
    %p223 = scmp.eq.s32.totalorder %s20, 0
    %p224 = por %p222, %p223
    %p225 = scmp.le.s32.totalorder 1, %s14
    %p226 = scmp.lt.s32.totalorder %s14, 3
    %p227 = pnand %p225, %p226
    %p228 = pneg %p227
    // Predicated region
    $region9: #{_lambda_.7} parent=5 // pred_check
      _
    $region10: #{_lambda_.7} parent=5 // pred_check_branch
      %230 = sbr.rel (%p227) target = $region12
    $region11: #{_lambda_.7} parent=5 // pred_region
      %s231 = ssub.s32 %s14, 1
      // Predicated region
      $region13: #{_lambda_.7} parent=11 // pred_check
        %p232 = pneg %p61
      $region14: #{_lambda_.7} parent=11 // pred_check_branch
        %234 = sbr.rel (%p232) target = $region16
      $region15: #{_lambda_.7} parent=11 // pred_region
        _
      $region16: #{_lambda_.7} parent=11 // pred_fallthru
        _
    $region12: #{_lambda_.7} parent=5 // pred_fallthru
      _
    %p235 = scmp.lt.s32.totalorder %s14, 2
    // Predicated region
    $region17: #{_lambda_.7} parent=5 // pred_check
      %p236 = pneg %p235
    $region18: #{_lambda_.7} parent=5 // pred_check_branch
      %238 = sbr.rel (%p236) target = $region20
    $region19: #{_lambda_.7} parent=5 // pred_region
      // Predicated region
      $region21: #{_lambda_.7} parent=19 // pred_check
        %p239 = pneg %p34
      $region22: #{_lambda_.7} parent=19 // pred_check_branch
        %241 = sbr.rel (%p239) target = $region24
      $region23: #{_lambda_.7} parent=19 // pred_region
        %s242 = smul.u32 32, %s14
        %p243 = scmp.lt.s32.totalorder %s242, 63
        %s244 = scalar_select %p243, %s242, 63
        %s245 = smul.addr %s244, 4
        %s246 = scalar_lea.vmem %s0, %s245
        %s247 = smul.u32 32, %s14
      $region24: #{_lambda_.7} parent=19 // pred_fallthru
        _
    $region20: #{_lambda_.7} parent=5 // pred_fallthru
      _
    %p248 = scmp.le.s32.totalorder 1, %s14
    %p249 = scmp.lt.s32.totalorder %s14, 3
    %p250 = pnand %p248, %p249
    %p251 = pneg %p250
    // Predicated region
    $region25: #{_lambda_.7} parent=5 // pred_check
      _
    $region26: #{_lambda_.7} parent=5 // pred_check_branch
      %253 = sbr.rel (%p250) target = $region28
    $region27: #{_lambda_.7} parent=5 // pred_region
      %s254 = ssub.s32 %s14, 1
      %s255 = smul.u32 32, %s19
      %p256 = scmp.lt.s32.totalorder %s255, 63
      %s257 = scalar_select %p256, %s255, 63
      %s258 = smul.addr %s257, 4
      %s259 = scalar_lea.vmem %s0, %s258
      %p260 = pneg %p40
      %p261 = pneg %p37
      %p262 = pneg %p61
      %p263 = pneg %p58
      %p264 = pneg %p87
      %p265 = pneg %p84
      %s266 = smul.u32 32, %s19
      %p267 = scmp.lt.s32.totalorder %s266, 63
      %s268 = scalar_select %p267, %s266, 63
      %s269 = smul.addr %s268, 8
      %s270 = scalar_lea.vmem %s2, %s269
      %p271 = pneg %p113
      %p272 = pneg %p110
      %s273 = smul.u32 32, %s19
      %p274 = scmp.lt.s32.totalorder %s273, 63
      %s275 = scalar_select %p274, %s273, 63
      %s276 = smul.addr %s275, 8
      %s277 = scalar_lea.vmem %s3, %s276
      %p278 = pneg %p139
      %p279 = pneg %p136
      %p280 = scmp.lt.s32.totalorder %s19, 1
      %s281 = scalar_select %p280, %s19, 1
      %s282 = scalar_lea.vmem %s4, %s281
      %p283 = pneg %p165
      %p284 = pneg %p162
      %p285 = scmp.lt.s32.totalorder %s19, 1
      %s286 = scalar_select %p285, %s19, 1
      %s287 = scalar_lea.vmem %s5, %s286
      %p288 = pneg %p191
      %p289 = pneg %p188
      %p290 = scmp.lt.s32.totalorder %s19, 1
      %s291 = scalar_select %p290, %s19, 1
      %s292 = scalar_lea.vmem %s6, %s291
      %p293 = pneg %p217
      %p294 = pneg %p214
      %p295 = scmp.lt.s32.totalorder %s19, 1
      %s296 = scalar_select %p295, %s19, 1
      %s297 = scalar_lea.vmem %s7, %s296
      %s298 = smul.u32 32, %s19
      %p299 = scmp.lt.s32.totalorder %s298, 63
      %s300 = scalar_select %p299, %s298, 63
      %s301 = smul.addr %s300, 4
      %s302 = scalar_lea.vmem %s0, %s301
      %s303 = smul.u32 32, %s19
      %s304 = smul.u32 32, %s19
      %p305 = scmp.lt.s32.totalorder %s304, 63
      %s306 = scalar_select %p305, %s304, 63
      %s307 = smul.addr %s306, 8
      %s308 = scalar_lea.vmem %s2, %s307
      %s309 = smul.u32 32, %s19
      %s310 = smul.u32 32, %s19
      %p311 = scmp.lt.s32.totalorder %s310, 63
      %s312 = scalar_select %p311, %s310, 63
      %s313 = smul.addr %s312, 8
      %s314 = scalar_lea.vmem %s3, %s313
      %s315 = smul.u32 32, %s19
      %p316 = scmp.lt.s32.totalorder %s19, 1
      %s317 = scalar_select %p316, %s19, 1
      %s318 = scalar_lea.vmem %s4, %s317
      %p319 = scmp.lt.s32.totalorder %s19, 1
      %s320 = scalar_select %p319, %s19, 1
      %s321 = scalar_lea.vmem %s5, %s320
      %p322 = scmp.lt.s32.totalorder %s19, 1
      %s323 = scalar_select %p322, %s19, 1
      %s324 = scalar_lea.vmem %s6, %s323
      %p325 = scmp.lt.s32.totalorder %s19, 1
      %s326 = scalar_select %p325, %s19, 1
      %s327 = scalar_lea.vmem %s7, %s326
      %v329 = vld [vmem:[%s302] sm:$0xf]
      %v330 = vld [vmem:[%s302 + $0x4] sm:$0xf]
      %v331 = vld [vmem:[%s302 + $0x8] sm:$0xf]
      %v332 = vld [vmem:[%s302 + $0xc] sm:$0xf]
      %v333 = vld [vmem:[%s302 + $0x10] sm:$0xf]
      %v334 = vld [vmem:[%s302 + $0x14] sm:$0xf]
      %v335 = vld [vmem:[%s302 + $0x18] sm:$0xf]
      %v336 = vld [vmem:[%s302 + $0x1c] sm:$0xf]
      %v337 = vld [vmem:[%s302 + $0x20] sm:$0xf]
      %v338 = vld [vmem:[%s302 + $0x24] sm:$0xf]
      %v339 = vld [vmem:[%s302 + $0x28] sm:$0xf]
      %v340 = vld [vmem:[%s302 + $0x2c] sm:$0xf]
      %v341 = vld [vmem:[%s302 + $0x30] sm:$0xf]
      %v342 = vld [vmem:[%s302 + $0x34] sm:$0xf]
      %v343 = vld [vmem:[%s302 + $0x38] sm:$0xf]
      %v344 = vld [vmem:[%s302 + $0x3c] sm:$0xf]
      %v345 = vld [vmem:[%s302 + $0x40] sm:$0xf]
      %v346 = vld [vmem:[%s302 + $0x44] sm:$0xf]
      %v347 = vld [vmem:[%s302 + $0x48] sm:$0xf]
      %v348 = vld [vmem:[%s302 + $0x4c] sm:$0xf]
      %v349 = vld [vmem:[%s302 + $0x50] sm:$0xf]
      %v350 = vld [vmem:[%s302 + $0x54] sm:$0xf]
      %v351 = vld [vmem:[%s302 + $0x58] sm:$0xf]
      %v352 = vld [vmem:[%s302 + $0x5c] sm:$0xf]
      %v353 = vld [vmem:[%s302 + $0x60] sm:$0xf]
      %v354 = vld [vmem:[%s302 + $0x64] sm:$0xf]
      %v355 = vld [vmem:[%s302 + $0x68] sm:$0xf]
      %v356 = vld [vmem:[%s302 + $0x6c] sm:$0xf]
      %v357 = vld [vmem:[%s302 + $0x70] sm:$0xf]
      %v358 = vld [vmem:[%s302 + $0x74] sm:$0xf]
      %v359 = vld [vmem:[%s302 + $0x78] sm:$0xf]
      %v360 = vld [vmem:[%s302 + $0x7c] sm:$0xf]
      %v361 = vld [vmem:[%s1] sm:$0xff]
      %v362 = vld [vmem:[%s1 + $0x8] sm:$0xff]
      %v363 = vld [vmem:[%s1 + $0x10] sm:$0xff]
      %v364 = vld [vmem:[%s1 + $0x18] sm:$0xff]
      %v365 = vld [vmem:[%s1 + $0x20] sm:$0x33]
      %v398 = vunpack.c.l.b16 %v329
      %v399 = vunpack.c.l.b16 %v330
      %v400 = vunpack.c.l.b16 %v331
      %v401 = vunpack.c.l.b16 %v332
      %v402 = vunpack.c.l.b16 %v333
      %v403 = vunpack.c.l.b16 %v334
      %v404 = vunpack.c.l.b16 %v335
      %v405 = vunpack.c.l.b16 %v336
      %v406 = vunpack.c.l.b16 %v337
      %v407 = vunpack.c.l.b16 %v338
      %v408 = vunpack.c.l.b16 %v339
      %v409 = vunpack.c.l.b16 %v340
      %v410 = vunpack.c.l.b16 %v341
      %v411 = vunpack.c.l.b16 %v342
      %v412 = vunpack.c.l.b16 %v343
      %v413 = vunpack.c.l.b16 %v344
      %v414 = vunpack.c.l.b16 %v345
      %v415 = vunpack.c.l.b16 %v346
      %v416 = vunpack.c.l.b16 %v347
      %v417 = vunpack.c.l.b16 %v348
      %v418 = vunpack.c.l.b16 %v349
      %v419 = vunpack.c.l.b16 %v350
      %v420 = vunpack.c.l.b16 %v351
      %v421 = vunpack.c.l.b16 %v352
      %v422 = vunpack.c.l.b16 %v353
      %v423 = vunpack.c.l.b16 %v354
      %v424 = vunpack.c.l.b16 %v355
      %v425 = vunpack.c.l.b16 %v356
      %v426 = vunpack.c.l.b16 %v357
      %v427 = vunpack.c.l.b16 %v358
      %v428 = vunpack.c.l.b16 %v359
      %v429 = vunpack.c.l.b16 %v360
      %v430 = vpack.c.b16 %v399, %v398
      %v431 = vpack.c.b16 %v401, %v400
      %v432 = vpack.c.b16 %v403, %v402
      %v433 = vpack.c.b16 %v405, %v404
      %v434 = vpack.c.b16 %v407, %v406
      %v435 = vpack.c.b16 %v409, %v408
      %v436 = vpack.c.b16 %v411, %v410
      %v437 = vpack.c.b16 %v413, %v412
      %v438 = vpack.c.b16 %v415, %v414
      %v439 = vpack.c.b16 %v417, %v416
      %v440 = vpack.c.b16 %v419, %v418
      %v441 = vpack.c.b16 %v421, %v420
      %v442 = vpack.c.b16 %v423, %v422
      %v443 = vpack.c.b16 %v425, %v424
      %v444 = vpack.c.b16 %v427, %v426
      %v445 = vpack.c.b16 %v429, %v428
      %v451 = vunpack.c.l.b16 %v361
      %v452 = vunpack.c.h.b16 %v361
      %v453 = vunpack.c.l.b16 %v362
      %v454 = vunpack.c.h.b16 %v362
      %v455 = vunpack.c.l.b16 %v363
      %v456 = vunpack.c.h.b16 %v363
      %v457 = vunpack.c.l.b16 %v364
      %v458 = vunpack.c.h.b16 %v364
      %v459 = vunpack.c.l.b16 %v365
      %v460 = vunpack.c.h.b16 %v365
      %v461 = vpack.c.b16 %v453, %v451
      %v462 = vpack.c.b16 %v454, %v452
      %v463 = vpack.c.b16 %v457, %v455
      %v464 = vpack.c.b16 %v458, %v456
      %v465 = vpack.c.b16 %v459, %v459
      %v466 = vpack.c.b16 %v460, %v460
      %vm471 = vcmask 293888
      %v473 = vsel %vm471, %v430, 0
      %v476 = vsel %vm471, %v431, 0
      %v479 = vsel %vm471, %v432, 0
      %v482 = vsel %vm471, %v433, 0
      %v485 = vsel %vm471, %v434, 0
      %v488 = vsel %vm471, %v435, 0
      %v491 = vsel %vm471, %v436, 0
      %v494 = vsel %vm471, %v437, 0
      %v497 = vsel %vm471, %v438, 0
      %v500 = vsel %vm471, %v439, 0
      %v503 = vsel %vm471, %v440, 0
      %v506 = vsel %vm471, %v441, 0
      %v509 = vsel %vm471, %v442, 0
      %v512 = vsel %vm471, %v443, 0
      %v515 = vsel %vm471, %v444, 0
      %v518 = vsel %vm471, %v445, 0
      %vm520 = vcmask 1041408
      %v522 = vsel %vm520, %v465, 0
      %v525 = vsel %vm520, %v466, 0
      %527 = vmatprep.subr.bf16.mxu0 %v462
      %528 = vmatpush1.bf16.msra.mxu0 %v461
      %529 = vmatprep.subr.bf16.mxu0 %v464
      %530 = vmatpush1.bf16.msra.mxu0 %v463
      %531 = vmatprep.subr.bf16.mxu0 %v525
      %532 = vmatpush1.bf16.msra.mxu0 %v522
      %533 = vmatprep.subr.bf16.mxu0 0
      %534 = vmatpush1.bf16.msra.mxu0 0
      %535 = vmatprep.subr.bf16.mxu0 0
      %536 = vmatpush1.bf16.msra.mxu0 0
      %537 = vmatprep.subr.bf16.mxu0 0
      %538 = vmatpush1.bf16.msra.mxu0 0
      %539 = vmatprep.subr.bf16.mxu0 0
      %540 = vmatpush1.bf16.msra.mxu0 0
      %541 = vmatprep.subr.bf16.mxu0 0
      %542 = vmatpush1.bf16.msra.mxu0 0
      %543 = vmatprep.subr.bf16.mxu0 0
      %544 = vmatpush1.bf16.msra.mxu0 0
      %545 = vmatprep.subr.bf16.mxu0 0
      %546 = vmatpush1.bf16.msra.mxu0 0
      %547 = vmatprep.subr.bf16.mxu0 0
      %548 = vmatpush1.bf16.msra.mxu0 0
      %549 = vmatprep.subr.bf16.mxu0 0
      %550 = vmatpush1.bf16.msra.mxu0 0
      %551 = vmatprep.subr.bf16.mxu0 0
      %552 = vmatpush1.bf16.msra.mxu0 0
      %553 = vmatprep.subr.bf16.mxu0 0
      %554 = vmatpush1.bf16.msra.mxu0 0
      %555 = vmatprep.subr.bf16.mxu0 0
      %556 = vmatpush1.bf16.msra.mxu0 0
      %557 = vmatprep.subr.bf16.mxu0 0
      %558 = vmatpush1.bf16.msra.mxu0 0
      %559 = vmatprep.mubr.bf16.mxu0 0
      %560 = vmatmul.mubr.bf16.gmra.mrb[0].mxu0 %v473
      %v561 = vpop.f32.mrb[0].mxu0
      %v562 = vadd.f32 0.0, %v561
      %v563 = vpop.f32.mrb[0].mxu0
      %v564 = vadd.f32 0.0, %v563
      %v565 = vpop.f32.mrb[0].mxu0
      %v566 = vadd.f32 0.0, %v565
      %v567 = vpop.f32.mrb[0].mxu0
      %v568 = vadd.f32 0.0, %v567
      %569 = vmatprep.mubr.bf16.mxu0 0
      %570 = vmatmul.mubr.bf16.gmra.mrb[0].mxu0 %v476
      %v571 = vpop.f32.mrb[0].mxu0
      %v572 = vadd.f32 0.0, %v571
      %v573 = vpop.f32.mrb[0].mxu0
      %v574 = vadd.f32 0.0, %v573
      %v575 = vpop.f32.mrb[0].mxu0
      %v576 = vadd.f32 0.0, %v575
      %v577 = vpop.f32.mrb[0].mxu0
      %v578 = vadd.f32 0.0, %v577
      %579 = vmatprep.mubr.bf16.mxu0 0
      %580 = vmatmul.mubr.bf16.gmra.mrb[0].mxu0 %v479
      %v581 = vpop.f32.mrb[0].mxu0
      %v582 = vadd.f32 0.0, %v581
      %v583 = vpop.f32.mrb[0].mxu0
      %v584 = vadd.f32 0.0, %v583
      %v585 = vpop.f32.mrb[0].mxu0
      %v586 = vadd.f32 0.0, %v585
      %v587 = vpop.f32.mrb[0].mxu0
      %v588 = vadd.f32 0.0, %v587
      %589 = vmatprep.mubr.bf16.mxu0 0
      %590 = vmatmul.mubr.bf16.gmra.mrb[0].mxu0 %v482
      %v591 = vpop.f32.mrb[0].mxu0
      %v592 = vadd.f32 0.0, %v591
      %v593 = vpop.f32.mrb[0].mxu0
      %v594 = vadd.f32 0.0, %v593
      %v595 = vpop.f32.mrb[0].mxu0
      %v596 = vadd.f32 0.0, %v595
      %v597 = vpop.f32.mrb[0].mxu0
      %v598 = vadd.f32 0.0, %v597
      %599 = vmatprep.mubr.bf16.mxu0 0
      %600 = vmatmul.mubr.bf16.gmra.mrb[0].mxu0 %v485
      %v601 = vpop.f32.mrb[0].mxu0
      %v602 = vadd.f32 0.0, %v601
      %v603 = vpop.f32.mrb[0].mxu0
      %v604 = vadd.f32 0.0, %v603
      %v605 = vpop.f32.mrb[0].mxu0
      %v606 = vadd.f32 0.0, %v605
      %v607 = vpop.f32.mrb[0].mxu0
      %v608 = vadd.f32 0.0, %v607
      %609 = vmatprep.mubr.bf16.mxu0 0
      %610 = vmatmul.mubr.bf16.gmra.mrb[0].mxu0 %v488
      %v611 = vpop.f32.mrb[0].mxu0
      %v612 = vadd.f32 0.0, %v611
      %v613 = vpop.f32.mrb[0].mxu0
      %v614 = vadd.f32 0.0, %v613
      %v615 = vpop.f32.mrb[0].mxu0
      %v616 = vadd.f32 0.0, %v615
      %v617 = vpop.f32.mrb[0].mxu0
      %v618 = vadd.f32 0.0, %v617
      %619 = vmatprep.mubr.bf16.mxu0 0
      %620 = vmatmul.mubr.bf16.gmra.mrb[0].mxu0 %v491
      %v621 = vpop.f32.mrb[0].mxu0
      %v622 = vadd.f32 0.0, %v621
      %v623 = vpop.f32.mrb[0].mxu0
      %v624 = vadd.f32 0.0, %v623
      %v625 = vpop.f32.mrb[0].mxu0
      %v626 = vadd.f32 0.0, %v625
      %v627 = vpop.f32.mrb[0].mxu0
      %v628 = vadd.f32 0.0, %v627
      %629 = vmatprep.mubr.bf16.mxu0 0
      %630 = vmatmul.mubr.bf16.gmra.mrb[0].mxu0 %v494
      %v631 = vpop.f32.mrb[0].mxu0
      %v632 = vadd.f32 0.0, %v631
      %v633 = vpop.f32.mrb[0].mxu0
      %v634 = vadd.f32 0.0, %v633
      %v635 = vpop.f32.mrb[0].mxu0
      %v636 = vadd.f32 0.0, %v635
      %v637 = vpop.f32.mrb[0].mxu0
      %v638 = vadd.f32 0.0, %v637
      %639 = vmatprep.mubr.bf16.mxu0 0
      %640 = vmatmul.mubr.bf16.gmra.mrb[0].mxu0 %v497
      %v641 = vpop.f32.mrb[0].mxu0
      %v642 = vadd.f32 0.0, %v641
      %v643 = vpop.f32.mrb[0].mxu0
      %v644 = vadd.f32 0.0, %v643
      %v645 = vpop.f32.mrb[0].mxu0
      %v646 = vadd.f32 0.0, %v645
      %v647 = vpop.f32.mrb[0].mxu0
      %v648 = vadd.f32 0.0, %v647
      %649 = vmatprep.mubr.bf16.mxu0 0
      %650 = vmatmul.mubr.bf16.gmra.mrb[0].mxu0 %v500
      %v651 = vpop.f32.mrb[0].mxu0
      %v652 = vadd.f32 0.0, %v651
      %v653 = vpop.f32.mrb[0].mxu0
      %v654 = vadd.f32 0.0, %v653
      %v655 = vpop.f32.mrb[0].mxu0
      %v656 = vadd.f32 0.0, %v655
      %v657 = vpop.f32.mrb[0].mxu0
      %v658 = vadd.f32 0.0, %v657
      %659 = vmatprep.mubr.bf16.mxu0 0
      %660 = vmatmul.mubr.bf16.gmra.mrb[0].mxu0 %v503
      %v661 = vpop.f32.mrb[0].mxu0
      %v662 = vadd.f32 0.0, %v661
      %v663 = vpop.f32.mrb[0].mxu0
      %v664 = vadd.f32 0.0, %v663
      %v665 = vpop.f32.mrb[0].mxu0
      %v666 = vadd.f32 0.0, %v665
      %v667 = vpop.f32.mrb[0].mxu0
      %v668 = vadd.f32 0.0, %v667
      %669 = vmatprep.mubr.bf16.mxu0 0
      %670 = vmatmul.mubr.bf16.gmra.mrb[0].mxu0 %v506
      %v671 = vpop.f32.mrb[0].mxu0
      %v672 = vadd.f32 0.0, %v671
      %v673 = vpop.f32.mrb[0].mxu0
      %v674 = vadd.f32 0.0, %v673
      %v675 = vpop.f32.mrb[0].mxu0
      %v676 = vadd.f32 0.0, %v675
      %v677 = vpop.f32.mrb[0].mxu0
      %v678 = vadd.f32 0.0, %v677
      %679 = vmatprep.mubr.bf16.mxu0 0
      %680 = vmatmul.mubr.bf16.gmra.mrb[0].mxu0 %v509
      %v681 = vpop.f32.mrb[0].mxu0
      %v682 = vadd.f32 0.0, %v681
      %v683 = vpop.f32.mrb[0].mxu0
      %v684 = vadd.f32 0.0, %v683
      %v685 = vpop.f32.mrb[0].mxu0
      %v686 = vadd.f32 0.0, %v685
      %v687 = vpop.f32.mrb[0].mxu0
      %v688 = vadd.f32 0.0, %v687
      %689 = vmatprep.mubr.bf16.mxu0 0
      %690 = vmatmul.mubr.bf16.gmra.mrb[0].mxu0 %v512
      %v691 = vpop.f32.mrb[0].mxu0
      %v692 = vadd.f32 0.0, %v691
      %v693 = vpop.f32.mrb[0].mxu0
      %v694 = vadd.f32 0.0, %v693
      %v695 = vpop.f32.mrb[0].mxu0
      %v696 = vadd.f32 0.0, %v695
      %v697 = vpop.f32.mrb[0].mxu0
      %v698 = vadd.f32 0.0, %v697
      %699 = vmatprep.mubr.bf16.mxu0 0
      %700 = vmatmul.mubr.bf16.gmra.mrb[0].mxu0 %v515
      %v701 = vpop.f32.mrb[0].mxu0
      %v702 = vadd.f32 0.0, %v701
      %v703 = vpop.f32.mrb[0].mxu0
      %v704 = vadd.f32 0.0, %v703
      %v705 = vpop.f32.mrb[0].mxu0
      %v706 = vadd.f32 0.0, %v705
      %v707 = vpop.f32.mrb[0].mxu0
      %v708 = vadd.f32 0.0, %v707
      %709 = vmatprep.mubr.bf16.mxu0 0
      %710 = vmatmul.mubr.bf16.gmra.mrb[0].mxu0 %v518
      %v711 = vpop.f32.mrb[0].mxu0
      %v712 = vadd.f32 0.0, %v711
      %v713 = vpop.f32.mrb[0].mxu0
      %v714 = vadd.f32 0.0, %v713
      %v715 = vpop.f32.mrb[0].mxu0
      %v716 = vadd.f32 0.0, %v715
      %v717 = vpop.f32.mrb[0].mxu0
      %v718 = vadd.f32 0.0, %v717
      %719 = vdwg.mxu0
      %720 = vst [vmem:[%s308] sm:$0xff] %v562
      %721 = vst [vmem:[%s308 + $0x8] sm:$0xff] %v566
      %722 = vst [vmem:[%s308 + $0x10] sm:$0xff] %v572
      %723 = vst [vmem:[%s308 + $0x18] sm:$0xff] %v576
      %724 = vst [vmem:[%s308 + $0x20] sm:$0xff] %v582
      %725 = vst [vmem:[%s308 + $0x28] sm:$0xff] %v586
      %726 = vst [vmem:[%s308 + $0x30] sm:$0xff] %v592
      %727 = vst [vmem:[%s308 + $0x38] sm:$0xff] %v596
      %728 = vst [vmem:[%s308 + $0x40] sm:$0xff] %v602
      %729 = vst [vmem:[%s308 + $0x48] sm:$0xff] %v606
      %730 = vst [vmem:[%s308 + $0x50] sm:$0xff] %v612
      %731 = vst [vmem:[%s308 + $0x58] sm:$0xff] %v616
      %732 = vst [vmem:[%s308 + $0x60] sm:$0xff] %v622
      %733 = vst [vmem:[%s308 + $0x68] sm:$0xff] %v626
      %734 = vst [vmem:[%s308 + $0x70] sm:$0xff] %v632
      %735 = vst [vmem:[%s308 + $0x78] sm:$0xff] %v636
      %736 = vst [vmem:[%s308 + $0x80] sm:$0xff] %v642
      %737 = vst [vmem:[%s308 + $0x88] sm:$0xff] %v646
      %738 = vst [vmem:[%s308 + $0x90] sm:$0xff] %v652
      %739 = vst [vmem:[%s308 + $0x98] sm:$0xff] %v656
      %740 = vst [vmem:[%s308 + $0xa0] sm:$0xff] %v662
      %741 = vst [vmem:[%s308 + $0xa8] sm:$0xff] %v666
      %742 = vst [vmem:[%s308 + $0xb0] sm:$0xff] %v672
      %743 = vst [vmem:[%s308 + $0xb8] sm:$0xff] %v676
      %744 = vst [vmem:[%s308 + $0xc0] sm:$0xff] %v682
      %745 = vst [vmem:[%s308 + $0xc8] sm:$0xff] %v686
      %746 = vst [vmem:[%s308 + $0xd0] sm:$0xff] %v692
      %747 = vst [vmem:[%s308 + $0xd8] sm:$0xff] %v696
      %748 = vst [vmem:[%s308 + $0xe0] sm:$0xff] %v702
      %749 = vst [vmem:[%s308 + $0xe8] sm:$0xff] %v706
      %750 = vst [vmem:[%s308 + $0xf0] sm:$0xff] %v712
      %751 = vst [vmem:[%s308 + $0xf8] sm:$0xff] %v716
      %752 = vst [vmem:[%s314] sm:$0xff] %v564
      %753 = vst [vmem:[%s314 + $0x8] sm:$0xff] %v568
      %754 = vst [vmem:[%s314 + $0x10] sm:$0xff] %v574
      %755 = vst [vmem:[%s314 + $0x18] sm:$0xff] %v578
      %756 = vst [vmem:[%s314 + $0x20] sm:$0xff] %v584
      %757 = vst [vmem:[%s314 + $0x28] sm:$0xff] %v588
      %758 = vst [vmem:[%s314 + $0x30] sm:$0xff] %v594
      %759 = vst [vmem:[%s314 + $0x38] sm:$0xff] %v598
      %760 = vst [vmem:[%s314 + $0x40] sm:$0xff] %v604
      %761 = vst [vmem:[%s314 + $0x48] sm:$0xff] %v608
      %762 = vst [vmem:[%s314 + $0x50] sm:$0xff] %v614
      %763 = vst [vmem:[%s314 + $0x58] sm:$0xff] %v618
      %764 = vst [vmem:[%s314 + $0x60] sm:$0xff] %v624
      %765 = vst [vmem:[%s314 + $0x68] sm:$0xff] %v628
      %766 = vst [vmem:[%s314 + $0x70] sm:$0xff] %v634
      %767 = vst [vmem:[%s314 + $0x78] sm:$0xff] %v638
      %768 = vst [vmem:[%s314 + $0x80] sm:$0xff] %v644
      %769 = vst [vmem:[%s314 + $0x88] sm:$0xff] %v648
      %770 = vst [vmem:[%s314 + $0x90] sm:$0xff] %v654
      %771 = vst [vmem:[%s314 + $0x98] sm:$0xff] %v658
      %772 = vst [vmem:[%s314 + $0xa0] sm:$0xff] %v664
      %773 = vst [vmem:[%s314 + $0xa8] sm:$0xff] %v668
      %774 = vst [vmem:[%s314 + $0xb0] sm:$0xff] %v674
      %775 = vst [vmem:[%s314 + $0xb8] sm:$0xff] %v678
      %776 = vst [vmem:[%s314 + $0xc0] sm:$0xff] %v684
      %777 = vst [vmem:[%s314 + $0xc8] sm:$0xff] %v688
      %778 = vst [vmem:[%s314 + $0xd0] sm:$0xff] %v694
      %779 = vst [vmem:[%s314 + $0xd8] sm:$0xff] %v698
      %780 = vst [vmem:[%s314 + $0xe0] sm:$0xff] %v704
      %781 = vst [vmem:[%s314 + $0xe8] sm:$0xff] %v708
      %782 = vst [vmem:[%s314 + $0xf0] sm:$0xff] %v714
      %783 = vst [vmem:[%s314 + $0xf8] sm:$0xff] %v718
      %v784 = vadd.f32 %v562, %v566
      %v785 = vadd.f32 %v784, %v572
      %v786 = vadd.f32 %v785, %v576
      %v787 = vadd.f32 %v786, %v582
      %v788 = vadd.f32 %v787, %v586
      %v789 = vadd.f32 %v788, %v592
      %v790 = vadd.f32 %v789, %v596
      %v791 = vadd.f32 %v790, %v602
      %v792 = vadd.f32 %v791, %v606
      %v793 = vadd.f32 %v792, %v612
      %v794 = vadd.f32 %v793, %v616
      %v795 = vadd.f32 %v794, %v622
      %v796 = vadd.f32 %v795, %v626
      %v797 = vadd.f32 %v796, %v632
      %v798 = vadd.f32 %v797, %v636
      %v799 = vadd.f32 %v798, %v642
      %v800 = vadd.f32 %v799, %v646
      %v801 = vadd.f32 %v800, %v652
      %v802 = vadd.f32 %v801, %v656
      %v803 = vadd.f32 %v802, %v662
      %v804 = vadd.f32 %v803, %v666
      %v805 = vadd.f32 %v804, %v672
      %v806 = vadd.f32 %v805, %v676
      %v807 = vadd.f32 %v806, %v682
      %v808 = vadd.f32 %v807, %v686
      %v809 = vadd.f32 %v808, %v692
      %v810 = vadd.f32 %v809, %v696
      %v811 = vadd.f32 %v810, %v702
      %v812 = vadd.f32 %v811, %v706
      %v813 = vadd.f32 %v812, %v712
      %v814 = vadd.f32 %v813, %v716
      %v815 = vrot.slane %v814, 4
      %v816 = vadd.f32 %v814, %v815
      %v817 = vrot.slane %v816, 2
      %v818 = vadd.f32 %v816, %v817
      %v819 = vrot.slane %v818, 1
      %v820 = vadd.f32 %v818, %v819
      %821 = vst [vmem:[%s318] sm:$0x1] %v820
      %v822 = vmul.f32 %v562, %v562
      %v823 = vmul.f32 %v566, %v566
      %v824 = vmul.f32 %v572, %v572
      %v825 = vmul.f32 %v576, %v576
      %v826 = vmul.f32 %v582, %v582
      %v827 = vmul.f32 %v586, %v586
      %v828 = vmul.f32 %v592, %v592
      %v829 = vmul.f32 %v596, %v596
      %v830 = vmul.f32 %v602, %v602
      %v831 = vmul.f32 %v606, %v606
      %v832 = vmul.f32 %v612, %v612
      %v833 = vmul.f32 %v616, %v616
      %v834 = vmul.f32 %v622, %v622
      %v835 = vmul.f32 %v626, %v626
      %v836 = vmul.f32 %v632, %v632
      %v837 = vmul.f32 %v636, %v636
      %v838 = vmul.f32 %v642, %v642
      %v839 = vmul.f32 %v646, %v646
      %v840 = vmul.f32 %v652, %v652
      %v841 = vmul.f32 %v656, %v656
      %v842 = vmul.f32 %v662, %v662
      %v843 = vmul.f32 %v666, %v666
      %v844 = vmul.f32 %v672, %v672
      %v845 = vmul.f32 %v676, %v676
      %v846 = vmul.f32 %v682, %v682
      %v847 = vmul.f32 %v686, %v686
      %v848 = vmul.f32 %v692, %v692
      %v849 = vmul.f32 %v696, %v696
      %v850 = vmul.f32 %v702, %v702
      %v851 = vmul.f32 %v706, %v706
      %v852 = vmul.f32 %v712, %v712
      %v853 = vmul.f32 %v716, %v716
      %v854 = vadd.f32 %v822, %v823
      %v855 = vadd.f32 %v854, %v824
      %v856 = vadd.f32 %v855, %v825
      %v857 = vadd.f32 %v856, %v826
      %v858 = vadd.f32 %v857, %v827
      %v859 = vadd.f32 %v858, %v828
      %v860 = vadd.f32 %v859, %v829
      %v861 = vadd.f32 %v860, %v830
      %v862 = vadd.f32 %v861, %v831
      %v863 = vadd.f32 %v862, %v832
      %v864 = vadd.f32 %v863, %v833
      %v865 = vadd.f32 %v864, %v834
      %v866 = vadd.f32 %v865, %v835
      %v867 = vadd.f32 %v866, %v836
      %v868 = vadd.f32 %v867, %v837
      %v869 = vadd.f32 %v868, %v838
      %v870 = vadd.f32 %v869, %v839
      %v871 = vadd.f32 %v870, %v840
      %v872 = vadd.f32 %v871, %v841
      %v873 = vadd.f32 %v872, %v842
      %v874 = vadd.f32 %v873, %v843
      %v875 = vadd.f32 %v874, %v844
      %v876 = vadd.f32 %v875, %v845
      %v877 = vadd.f32 %v876, %v846
      %v878 = vadd.f32 %v877, %v847
      %v879 = vadd.f32 %v878, %v848
      %v880 = vadd.f32 %v879, %v849
      %v881 = vadd.f32 %v880, %v850
      %v882 = vadd.f32 %v881, %v851
      %v883 = vadd.f32 %v882, %v852
      %v884 = vadd.f32 %v883, %v853
      %v885 = vrot.slane %v884, 4
      %v886 = vadd.f32 %v884, %v885
      %v887 = vrot.slane %v886, 2
      %v888 = vadd.f32 %v886, %v887
      %v889 = vrot.slane %v888, 1
      %v890 = vadd.f32 %v888, %v889
      %891 = vst [vmem:[%s321] sm:$0x1] %v890
      %v892 = vadd.f32 %v564, %v568
      %v893 = vadd.f32 %v892, %v574
      %v894 = vadd.f32 %v893, %v578
      %v895 = vadd.f32 %v894, %v584
      %v896 = vadd.f32 %v895, %v588
      %v897 = vadd.f32 %v896, %v594
      %v898 = vadd.f32 %v897, %v598
      %v899 = vadd.f32 %v898, %v604
      %v900 = vadd.f32 %v899, %v608
      %v901 = vadd.f32 %v900, %v614
      %v902 = vadd.f32 %v901, %v618
      %v903 = vadd.f32 %v902, %v624
      %v904 = vadd.f32 %v903, %v628
      %v905 = vadd.f32 %v904, %v634
      %v906 = vadd.f32 %v905, %v638
      %v907 = vadd.f32 %v906, %v644
      %v908 = vadd.f32 %v907, %v648
      %v909 = vadd.f32 %v908, %v654
      %v910 = vadd.f32 %v909, %v658
      %v911 = vadd.f32 %v910, %v664
      %v912 = vadd.f32 %v911, %v668
      %v913 = vadd.f32 %v912, %v674
      %v914 = vadd.f32 %v913, %v678
      %v915 = vadd.f32 %v914, %v684
      %v916 = vadd.f32 %v915, %v688
      %v917 = vadd.f32 %v916, %v694
      %v918 = vadd.f32 %v917, %v698
      %v919 = vadd.f32 %v918, %v704
      %v920 = vadd.f32 %v919, %v708
      %v921 = vadd.f32 %v920, %v714
      %v922 = vadd.f32 %v921, %v718
      %v923 = vrot.slane %v922, 4
      %v924 = vadd.f32 %v922, %v923
      %v925 = vrot.slane %v924, 2
      %v926 = vadd.f32 %v924, %v925
      %v927 = vrot.slane %v926, 1
      %v928 = vadd.f32 %v926, %v927
      %929 = vst [vmem:[%s324] sm:$0x1] %v928
      %v930 = vmul.f32 %v564, %v564
      %v931 = vmul.f32 %v568, %v568
      %v932 = vmul.f32 %v574, %v574
      %v933 = vmul.f32 %v578, %v578
      %v934 = vmul.f32 %v584, %v584
      %v935 = vmul.f32 %v588, %v588
      %v936 = vmul.f32 %v594, %v594
      %v937 = vmul.f32 %v598, %v598
      %v938 = vmul.f32 %v604, %v604
      %v939 = vmul.f32 %v608, %v608
      %v940 = vmul.f32 %v614, %v614
      %v941 = vmul.f32 %v618, %v618
      %v942 = vmul.f32 %v624, %v624
      %v943 = vmul.f32 %v628, %v628
      %v944 = vmul.f32 %v634, %v634
      %v945 = vmul.f32 %v638, %v638
      %v946 = vmul.f32 %v644, %v644
      %v947 = vmul.f32 %v648, %v648
      %v948 = vmul.f32 %v654, %v654
      %v949 = vmul.f32 %v658, %v658
      %v950 = vmul.f32 %v664, %v664
      %v951 = vmul.f32 %v668, %v668
      %v952 = vmul.f32 %v674, %v674
      %v953 = vmul.f32 %v678, %v678
      %v954 = vmul.f32 %v684, %v684
      %v955 = vmul.f32 %v688, %v688
      %v956 = vmul.f32 %v694, %v694
      %v957 = vmul.f32 %v698, %v698
      %v958 = vmul.f32 %v704, %v704
      %v959 = vmul.f32 %v708, %v708
      %v960 = vmul.f32 %v714, %v714
      %v961 = vmul.f32 %v718, %v718
      %v962 = vadd.f32 %v930, %v931
      %v963 = vadd.f32 %v962, %v932
      %v964 = vadd.f32 %v963, %v933
      %v965 = vadd.f32 %v964, %v934
      %v966 = vadd.f32 %v965, %v935
      %v967 = vadd.f32 %v966, %v936
      %v968 = vadd.f32 %v967, %v937
      %v969 = vadd.f32 %v968, %v938
      %v970 = vadd.f32 %v969, %v939
      %v971 = vadd.f32 %v970, %v940
      %v972 = vadd.f32 %v971, %v941
      %v973 = vadd.f32 %v972, %v942
      %v974 = vadd.f32 %v973, %v943
      %v975 = vadd.f32 %v974, %v944
      %v976 = vadd.f32 %v975, %v945
      %v977 = vadd.f32 %v976, %v946
      %v978 = vadd.f32 %v977, %v947
      %v979 = vadd.f32 %v978, %v948
      %v980 = vadd.f32 %v979, %v949
      %v981 = vadd.f32 %v980, %v950
      %v982 = vadd.f32 %v981, %v951
      %v983 = vadd.f32 %v982, %v952
      %v984 = vadd.f32 %v983, %v953
      %v985 = vadd.f32 %v984, %v954
      %v986 = vadd.f32 %v985, %v955
      %v987 = vadd.f32 %v986, %v956
      %v988 = vadd.f32 %v987, %v957
      %v989 = vadd.f32 %v988, %v958
      %v990 = vadd.f32 %v989, %v959
      %v991 = vadd.f32 %v990, %v960
      %v992 = vadd.f32 %v991, %v961
      %v993 = vrot.slane %v992, 4
      %v994 = vadd.f32 %v992, %v993
      %v995 = vrot.slane %v994, 2
      %v996 = vadd.f32 %v994, %v995
      %v997 = vrot.slane %v996, 1
      %v998 = vadd.f32 %v996, %v997
      %999 = vst [vmem:[%s327] sm:$0x1] %v998
      %s1000 = smul.u32 32, %s19
      %p1001 = scmp.lt.s32.totalorder %s1000, 63
      %s1002 = scalar_select %p1001, %s1000, 63
      %s1003 = smul.addr %s1002, 8
      %s1004 = scalar_lea.vmem %s2, %s1003
      %s1005 = smul.u32 32, %s19
      %p1006 = scmp.lt.s32.totalorder %s1005, 63
      %s1007 = scalar_select %p1006, %s1005, 63
      %s1008 = smul.addr %s1007, 8
      %s1009 = scalar_lea.vmem %s3, %s1008
      %p1010 = scmp.lt.s32.totalorder %s19, 1
      %s1011 = scalar_select %p1010, %s19, 1
      %s1012 = scalar_lea.vmem %s4, %s1011
      %p1013 = scmp.lt.s32.totalorder %s19, 1
      %s1014 = scalar_select %p1013, %s19, 1
      %s1015 = scalar_lea.vmem %s5, %s1014
      %p1016 = scmp.lt.s32.totalorder %s19, 1
      %s1017 = scalar_select %p1016, %s19, 1
      %s1018 = scalar_lea.vmem %s6, %s1017
      %p1019 = scmp.lt.s32.totalorder %s19, 1
      %s1020 = scalar_select %p1019, %s19, 1
      %s1021 = scalar_lea.vmem %s7, %s1020
      // Predicated region
      $region29: #{_lambda_.7} parent=27 // pred_check
        %p1022 = pneg %p84
      $region30: #{_lambda_.7} parent=27 // pred_check_branch
        %1024 = sbr.rel (%p1022) target = $region32
      $region31: #{_lambda_.7} parent=27 // pred_region
        %s1025 = smul.u32 32, %s19
      $region32: #{_lambda_.7} parent=27 // pred_fallthru
        _
      // Predicated region
      $region33: #{_lambda_.7} parent=27 // pred_check
        %p1026 = pneg %p110
      $region34: #{_lambda_.7} parent=27 // pred_check_branch
        %1028 = sbr.rel (%p1026) target = $region36
      $region35: #{_lambda_.7} parent=27 // pred_region
        %s1029 = smul.u32 32, %s19
      $region36: #{_lambda_.7} parent=27 // pred_fallthru
        _
      // Predicated region
      $region37: #{_lambda_.7} parent=27 // pred_check
        %p1030 = pneg %p136
      $region38: #{_lambda_.7} parent=27 // pred_check_branch
        %1032 = sbr.rel (%p1030) target = $region40
      $region39: #{_lambda_.7} parent=27 // pred_region
        _
      $region40: #{_lambda_.7} parent=27 // pred_fallthru
        _
      // Predicated region
      $region41: #{_lambda_.7} parent=27 // pred_check
        %p1033 = pneg %p162
      $region42: #{_lambda_.7} parent=27 // pred_check_branch
        %1035 = sbr.rel (%p1033) target = $region44
      $region43: #{_lambda_.7} parent=27 // pred_region
        _
      $region44: #{_lambda_.7} parent=27 // pred_fallthru
        _
      // Predicated region
      $region45: #{_lambda_.7} parent=27 // pred_check
        %p1036 = pneg %p188
      $region46: #{_lambda_.7} parent=27 // pred_check_branch
        %1038 = sbr.rel (%p1036) target = $region48
      $region47: #{_lambda_.7} parent=27 // pred_region
        _
      $region48: #{_lambda_.7} parent=27 // pred_fallthru
        _
      // Predicated region
      $region49: #{_lambda_.7} parent=27 // pred_check
        %p1039 = pneg %p214
      $region50: #{_lambda_.7} parent=27 // pred_check_branch
        %1041 = sbr.rel (%p1039) target = $region52
      $region51: #{_lambda_.7} parent=27 // pred_region
        _
      $region52: #{_lambda_.7} parent=27 // pred_fallthru
        _
    $region28: #{_lambda_.7} parent=5 // pred_fallthru
      _
    %p1042 = scmp.le.s32.totalorder 2, %s14
    // Predicated region
    $region53: #{_lambda_.7} parent=5 // pred_check
      %p1043 = pneg %p1042
    $region54: #{_lambda_.7} parent=5 // pred_check_branch
      %1045 = sbr.rel (%p1043) target = $region56
    $region55: #{_lambda_.7} parent=5 // pred_region
      %s1046 = ssub.s32 %s14, 2
      // Predicated region
      $region57: #{_lambda_.7} parent=55 // pred_check
        %p1047 = pneg %p90
      $region58: #{_lambda_.7} parent=55 // pred_check_branch
        %1049 = sbr.rel (%p1047) target = $region60
      $region59: #{_lambda_.7} parent=55 // pred_region
        %s1050 = smul.u32 32, %s20
        %p1051 = scmp.lt.s32.totalorder %s1050, 63
        %s1052 = scalar_select %p1051, %s1050, 63
        %s1053 = smul.addr %s1052, 8
        %s1054 = scalar_lea.vmem %s2, %s1053
      $region60: #{_lambda_.7} parent=55 // pred_fallthru
        _
      // Predicated region
      $region61: #{_lambda_.7} parent=55 // pred_check
        %p1055 = pneg %p116
      $region62: #{_lambda_.7} parent=55 // pred_check_branch
        %1057 = sbr.rel (%p1055) target = $region64
      $region63: #{_lambda_.7} parent=55 // pred_region
        %s1058 = smul.u32 32, %s20
        %p1059 = scmp.lt.s32.totalorder %s1058, 63
        %s1060 = scalar_select %p1059, %s1058, 63
        %s1061 = smul.addr %s1060, 8
        %s1062 = scalar_lea.vmem %s3, %s1061
      $region64: #{_lambda_.7} parent=55 // pred_fallthru
        _
      // Predicated region
      $region65: #{_lambda_.7} parent=55 // pred_check
        %p1063 = pneg %p142
      $region66: #{_lambda_.7} parent=55 // pred_check_branch
        %1065 = sbr.rel (%p1063) target = $region68
      $region67: #{_lambda_.7} parent=55 // pred_region
        %p1066 = scmp.lt.s32.totalorder %s20, 1
        %s1067 = scalar_select %p1066, %s20, 1
        %s1068 = scalar_lea.vmem %s4, %s1067
      $region68: #{_lambda_.7} parent=55 // pred_fallthru
        _
      // Predicated region
      $region69: #{_lambda_.7} parent=55 // pred_check
        %p1069 = pneg %p168
      $region70: #{_lambda_.7} parent=55 // pred_check_branch
        %1071 = sbr.rel (%p1069) target = $region72
      $region71: #{_lambda_.7} parent=55 // pred_region
        %p1072 = scmp.lt.s32.totalorder %s20, 1
        %s1073 = scalar_select %p1072, %s20, 1
        %s1074 = scalar_lea.vmem %s5, %s1073
      $region72: #{_lambda_.7} parent=55 // pred_fallthru
        _
      // Predicated region
      $region73: #{_lambda_.7} parent=55 // pred_check
        %p1075 = pneg %p194
      $region74: #{_lambda_.7} parent=55 // pred_check_branch
        %1077 = sbr.rel (%p1075) target = $region76
      $region75: #{_lambda_.7} parent=55 // pred_region
        %p1078 = scmp.lt.s32.totalorder %s20, 1
        %s1079 = scalar_select %p1078, %s20, 1
        %s1080 = scalar_lea.vmem %s6, %s1079
      $region76: #{_lambda_.7} parent=55 // pred_fallthru
        _
      // Predicated region
      $region77: #{_lambda_.7} parent=55 // pred_check
        %p1081 = pneg %p220
      $region78: #{_lambda_.7} parent=55 // pred_check_branch
        %1083 = sbr.rel (%p1081) target = $region80
      $region79: #{_lambda_.7} parent=55 // pred_region
        %p1084 = scmp.lt.s32.totalorder %s20, 1
        %s1085 = scalar_select %p1084, %s20, 1
        %s1086 = scalar_lea.vmem %s7, %s1085
      $region80: #{_lambda_.7} parent=55 // pred_fallthru
        _
    $region56: #{_lambda_.7} parent=5 // pred_fallthru
      _
  $region6: #{_lambda_.7} parent=0 // loop_footer
    %s18 = sadd.s32 1, %s14
  $region7: #{_lambda_.7} parent=0 // loop_footer_branch
    %13 = sbr.rel target = $region3
  $region8: #{_lambda_.7} parent=0 // loop_exit
    _

// kernel: _lambda_.10
$region0: #{_lambda_.10}
  #allocation0 [shape = 'u32[]', space=smem, size = 0x4, offset = 0x4, fixed_abs, tag = 'smem constant byte address 0x4 - core index']
  #allocation1 [shape = 'u32[144,128]{1,0:T(1,128)}', space=vmem, size = 0x12000, scoped, tag = 'internal scratch']
  %s0 = inlined_call_operand.vmem [shape: bf16[512,72], index: 0, kind: input, shape index: {}]
  %s1 = inlined_call_operand.vmem [shape: bf16[72,128], index: 1, kind: input, shape index: {}]
  %s2 = inlined_call_operand.vmem [shape: f32[512,128], index: 2, kind: output, shape index: {0}]
  %s3 = inlined_call_operand.vmem [shape: f32[2,1,128], index: 3, kind: output, shape index: {1}]
  %s4 = inlined_call_operand.vmem [shape: f32[2,1,128], index: 4, kind: output, shape index: {2}]
  %5 = xla_tuple %s2, %s3, %s4
  %s6 = sld [smem:[#allocation0]]
  $region57: #{_lambda_.10} parent=0
    _
  %s8 = ssub.s32 1, %s6
  %s9 = scalar_select 0, %s8, %s6
  loop: start=0, step=1, limit=4
  $region2: #{_lambda_.10} parent=0 // loop_pre_header
    _
  $region3: #{_lambda_.10} parent=0 // loop_header
    %s11 = sphi 0, %s15
    %p12 = scmp.ge.s32.totalorder %s11, 4
    %s21 = sphi 0, %s23
    %s24 = sphi 0, %s21
    %s25 = sphi 0, %s24
    %s41 = sphi 0, %s25
    %s45 = sphi 0, %s45
    %s47 = sphi 0, %s45
    %s48 = sphi 0, %s47
    %s62 = sphi 0, %s48
    %s68 = sphi 0, %s70
    %s71 = sphi 0, %s68
    %s72 = sphi 0, %s71
    %s88 = sphi 0, %s72
    %s94 = sphi 0, %s96
    %s97 = sphi 0, %s94
    %s98 = sphi 0, %s97
    %s114 = sphi 0, %s98
    %s120 = sphi 0, %s122
    %s123 = sphi 0, %s120
    %s124 = sphi 0, %s123
    %s140 = sphi 0, %s124
  $region4: #{_lambda_.10} parent=0 // loop_header_branch
    %14 = sbr.rel (%p12) target = $region8
  $region5: #{_lambda_.10} parent=0 // loop_body
    %s16 = ssub.s32 %s11, 1
    %s17 = ssub.s32 %s11, 2
    %s18 = sadd.s32 %s11, 1
    %s19 = ssub.s32 %s11, %s18
    %p20 = scmp.eq.s32.totalorder %s19, 0
    %s22 = sadd.s32 %s21, 1
    %s23 = scalar_select %p20, %s21, %s22
    %p26 = pneg %p20
    %p27 = scmp.eq.s32.totalorder %s11, 1
    %p28 = por %p26, %p27
    %p29 = scmp.ne.s32.totalorder %s21, %s24
    %p30 = scmp.eq.s32.totalorder %s11, 0
    %p31 = por %p29, %p30
    %p32 = scmp.ne.s32.totalorder %s21, %s24
    %p33 = scmp.eq.s32.totalorder %s16, 1
    %p34 = por %p32, %p33
    %p35 = scmp.ne.s32.totalorder %s24, %s25
    %p36 = scmp.eq.s32.totalorder %s16, 0
    %p37 = por %p35, %p36
    %p38 = scmp.ne.s32.totalorder %s24, %s25
    %p39 = scmp.eq.s32.totalorder %s17, 1
    %p40 = por %p38, %p39
    %p42 = scmp.ne.s32.totalorder %s25, %s41
    %p43 = scmp.eq.s32.totalorder %s17, 0
    %p44 = por %p42, %p43
    %s46 = sadd.s32 %s45, 1
    %p49 = scmp.eq.s32.totalorder %s11, 1
    %p50 = scmp.ne.s32.totalorder %s45, %s47
    %p51 = scmp.eq.s32.totalorder %s11, 0
    %p52 = por %p50, %p51
    %p53 = scmp.ne.s32.totalorder %s45, %s47
    %p54 = scmp.eq.s32.totalorder %s16, 1
    %p55 = por %p53, %p54
    %p56 = scmp.ne.s32.totalorder %s47, %s48
    %p57 = scmp.eq.s32.totalorder %s16, 0
    %p58 = por %p56, %p57
    %p59 = scmp.ne.s32.totalorder %s47, %s48
    %p60 = scmp.eq.s32.totalorder %s17, 1
    %p61 = por %p59, %p60
    %p63 = scmp.ne.s32.totalorder %s48, %s62
    %p64 = scmp.eq.s32.totalorder %s17, 0
    %p65 = por %p63, %p64
    %s66 = ssub.s32 %s11, %s18
    %p67 = scmp.eq.s32.totalorder %s66, 0
    %s69 = sadd.s32 %s68, 1
    %s70 = scalar_select %p67, %s68, %s69
    %p73 = pneg %p67
    %p74 = scmp.eq.s32.totalorder %s11, 1
    %p75 = por %p73, %p74
    %p76 = scmp.ne.s32.totalorder %s68, %s71
    %p77 = scmp.eq.s32.totalorder %s11, 0
    %p78 = por %p76, %p77
    %p79 = scmp.ne.s32.totalorder %s68, %s71
    %p80 = scmp.eq.s32.totalorder %s16, 1
    %p81 = por %p79, %p80
    %p82 = scmp.ne.s32.totalorder %s71, %s72
    %p83 = scmp.eq.s32.totalorder %s16, 0
    %p84 = por %p82, %p83
    %p85 = scmp.ne.s32.totalorder %s71, %s72
    %p86 = scmp.eq.s32.totalorder %s17, 1
    %p87 = por %p85, %p86
    %p89 = scmp.ne.s32.totalorder %s72, %s88
    %p90 = scmp.eq.s32.totalorder %s17, 0
    %p91 = por %p89, %p90
    %s92 = ssub.s32 %s11, %s18
    %p93 = scmp.eq.s32.totalorder %s92, 0
    %s95 = sadd.s32 %s94, 1
    %s96 = scalar_select %p93, %s94, %s95
    %p99 = pneg %p93
    %p100 = scmp.eq.s32.totalorder %s11, 1
    %p101 = por %p99, %p100
    %p102 = scmp.ne.s32.totalorder %s94, %s97
    %p103 = scmp.eq.s32.totalorder %s11, 0
    %p104 = por %p102, %p103
    %p105 = scmp.ne.s32.totalorder %s94, %s97
    %p106 = scmp.eq.s32.totalorder %s16, 1
    %p107 = por %p105, %p106
    %p108 = scmp.ne.s32.totalorder %s97, %s98
    %p109 = scmp.eq.s32.totalorder %s16, 0
    %p110 = por %p108, %p109
    %p111 = scmp.ne.s32.totalorder %s97, %s98
    %p112 = scmp.eq.s32.totalorder %s17, 1
    %p113 = por %p111, %p112
    %p115 = scmp.ne.s32.totalorder %s98, %s114
    %p116 = scmp.eq.s32.totalorder %s17, 0
    %p117 = por %p115, %p116
    %s118 = ssub.s32 %s11, %s18
    %p119 = scmp.eq.s32.totalorder %s118, 0
    %s121 = sadd.s32 %s120, 1
    %s122 = scalar_select %p119, %s120, %s121
    %p125 = pneg %p119
    %p126 = scmp.eq.s32.totalorder %s11, 1
    %p127 = por %p125, %p126
    %p128 = scmp.ne.s32.totalorder %s120, %s123
    %p129 = scmp.eq.s32.totalorder %s11, 0
    %p130 = por %p128, %p129
    %p131 = scmp.ne.s32.totalorder %s120, %s123
    %p132 = scmp.eq.s32.totalorder %s16, 1
    %p133 = por %p131, %p132
    %p134 = scmp.ne.s32.totalorder %s123, %s124
    %p135 = scmp.eq.s32.totalorder %s16, 0
    %p136 = por %p134, %p135
    %p137 = scmp.ne.s32.totalorder %s123, %s124
    %p138 = scmp.eq.s32.totalorder %s17, 1
    %p139 = por %p137, %p138
    %p141 = scmp.ne.s32.totalorder %s124, %s140
    %p142 = scmp.eq.s32.totalorder %s17, 0
    %p143 = por %p141, %p142
    %p144 = scmp.le.s32.totalorder 1, %s11
    %p145 = scmp.lt.s32.totalorder %s11, 3
    %p146 = pnand %p144, %p145
    %p147 = pneg %p146
    // Predicated region
    $region9: #{_lambda_.10} parent=5 // pred_check
      _
    $region10: #{_lambda_.10} parent=5 // pred_check_branch
      %149 = sbr.rel (%p146) target = $region12
    $region11: #{_lambda_.10} parent=5 // pred_region
      %s150 = ssub.s32 %s11, 1
      // Predicated region
      $region13: #{_lambda_.10} parent=11 // pred_check
        %p151 = pneg %p58
      $region14: #{_lambda_.10} parent=11 // pred_check_branch
        %153 = sbr.rel (%p151) target = $region16
      $region15: #{_lambda_.10} parent=11 // pred_region
        _
      $region16: #{_lambda_.10} parent=11 // pred_fallthru
        _
    $region12: #{_lambda_.10} parent=5 // pred_fallthru
      _
    %p154 = scmp.lt.s32.totalorder %s11, 2
    // Predicated region
    $region17: #{_lambda_.10} parent=5 // pred_check
      %p155 = pneg %p154
    $region18: #{_lambda_.10} parent=5 // pred_check_branch
      %157 = sbr.rel (%p155) target = $region20
    $region19: #{_lambda_.10} parent=5 // pred_region
      // Predicated region
      $region21: #{_lambda_.10} parent=19 // pred_check
        %p158 = pneg %p31
      $region22: #{_lambda_.10} parent=19 // pred_check_branch
        %160 = sbr.rel (%p158) target = $region24
      $region23: #{_lambda_.10} parent=19 // pred_region
        %s161 = smul.u32 32, %s11
        %p162 = scmp.lt.s32.totalorder %s161, 63
        %s163 = scalar_select %p162, %s161, 63
        %s164 = smul.addr %s163, 4
        %s165 = scalar_lea.vmem %s0, %s164
        %s166 = smul.u32 32, %s11
      $region24: #{_lambda_.10} parent=19 // pred_fallthru
        _
    $region20: #{_lambda_.10} parent=5 // pred_fallthru
      _
    %p167 = scmp.le.s32.totalorder 1, %s11
    %p168 = scmp.lt.s32.totalorder %s11, 3
    %p169 = pnand %p167, %p168
    %p170 = pneg %p169
    // Predicated region
    $region25: #{_lambda_.10} parent=5 // pred_check
      _
    $region26: #{_lambda_.10} parent=5 // pred_check_branch
      %172 = sbr.rel (%p169) target = $region28
    $region27: #{_lambda_.10} parent=5 // pred_region
      %s173 = ssub.s32 %s11, 1
      %s174 = smul.u32 32, %s16
      %p175 = scmp.lt.s32.totalorder %s174, 63
      %s176 = scalar_select %p175, %s174, 63
      %s177 = smul.addr %s176, 4
      %s178 = scalar_lea.vmem %s0, %s177
      %p179 = pneg %p37
      %p180 = pneg %p34
      %p181 = pneg %p58
      %p182 = pneg %p55
      %p183 = pneg %p84
      %p184 = pneg %p81
      %s185 = smul.u32 32, %s16
      %p186 = scmp.lt.s32.totalorder %s185, 63
      %s187 = scalar_select %p186, %s185, 63
      %s188 = smul.addr %s187, 8
      %s189 = scalar_lea.vmem %s2, %s188
      %p190 = pneg %p110
      %p191 = pneg %p107
      %p192 = scmp.lt.s32.totalorder %s16, 1
      %s193 = scalar_select %p192, %s16, 1
      %s194 = scalar_lea.vmem %s3, %s193
      %p195 = pneg %p136
      %p196 = pneg %p133
      %p197 = scmp.lt.s32.totalorder %s16, 1
      %s198 = scalar_select %p197, %s16, 1
      %s199 = scalar_lea.vmem %s4, %s198
      %s200 = smul.u32 32, %s16
      %p201 = scmp.lt.s32.totalorder %s200, 63
      %s202 = scalar_select %p201, %s200, 63
      %s203 = smul.addr %s202, 4
      %s204 = scalar_lea.vmem %s0, %s203
      %s205 = smul.u32 32, %s16
      %s206 = smul.u32 32, %s16
      %p207 = scmp.lt.s32.totalorder %s206, 63
      %s208 = scalar_select %p207, %s206, 63
      %s209 = smul.addr %s208, 8
      %s210 = scalar_lea.vmem %s2, %s209
      %s211 = smul.u32 32, %s16
      %p212 = scmp.lt.s32.totalorder %s16, 1
      %s213 = scalar_select %p212, %s16, 1
      %s214 = scalar_lea.vmem %s3, %s213
      %p215 = scmp.lt.s32.totalorder %s16, 1
      %s216 = scalar_select %p215, %s16, 1
      %s217 = scalar_lea.vmem %s4, %s216
      %v219 = vld [vmem:[%s204] sm:$0xf]
      %v220 = vld [vmem:[%s204 + $0x4] sm:$0xf]
      %v221 = vld [vmem:[%s204 + $0x8] sm:$0xf]
      %v222 = vld [vmem:[%s204 + $0xc] sm:$0xf]
      %v223 = vld [vmem:[%s204 + $0x10] sm:$0xf]
      %v224 = vld [vmem:[%s204 + $0x14] sm:$0xf]
      %v225 = vld [vmem:[%s204 + $0x18] sm:$0xf]
      %v226 = vld [vmem:[%s204 + $0x1c] sm:$0xf]
      %v227 = vld [vmem:[%s204 + $0x20] sm:$0xf]
      %v228 = vld [vmem:[%s204 + $0x24] sm:$0xf]
      %v229 = vld [vmem:[%s204 + $0x28] sm:$0xf]
      %v230 = vld [vmem:[%s204 + $0x2c] sm:$0xf]
      %v231 = vld [vmem:[%s204 + $0x30] sm:$0xf]
      %v232 = vld [vmem:[%s204 + $0x34] sm:$0xf]
      %v233 = vld [vmem:[%s204 + $0x38] sm:$0xf]
      %v234 = vld [vmem:[%s204 + $0x3c] sm:$0xf]
      %v235 = vld [vmem:[%s204 + $0x40] sm:$0xf]
      %v236 = vld [vmem:[%s204 + $0x44] sm:$0xf]
      %v237 = vld [vmem:[%s204 + $0x48] sm:$0xf]
      %v238 = vld [vmem:[%s204 + $0x4c] sm:$0xf]
      %v239 = vld [vmem:[%s204 + $0x50] sm:$0xf]
      %v240 = vld [vmem:[%s204 + $0x54] sm:$0xf]
      %v241 = vld [vmem:[%s204 + $0x58] sm:$0xf]
      %v242 = vld [vmem:[%s204 + $0x5c] sm:$0xf]
      %v243 = vld [vmem:[%s204 + $0x60] sm:$0xf]
      %v244 = vld [vmem:[%s204 + $0x64] sm:$0xf]
      %v245 = vld [vmem:[%s204 + $0x68] sm:$0xf]
      %v246 = vld [vmem:[%s204 + $0x6c] sm:$0xf]
      %v247 = vld [vmem:[%s204 + $0x70] sm:$0xf]
      %v248 = vld [vmem:[%s204 + $0x74] sm:$0xf]
      %v249 = vld [vmem:[%s204 + $0x78] sm:$0xf]
      %v250 = vld [vmem:[%s204 + $0x7c] sm:$0xf]
      %v251 = vld [vmem:[%s1] sm:$0xf]
      %v252 = vld [vmem:[%s1 + $0x4] sm:$0xf]
      %v253 = vld [vmem:[%s1 + $0x8] sm:$0xf]
      %v254 = vld [vmem:[%s1 + $0xc] sm:$0xf]
      %v255 = vld [vmem:[%s1 + $0x10] sm:$0xf]
      %v256 = vld [vmem:[%s1 + $0x14] sm:$0xf]
      %v257 = vld [vmem:[%s1 + $0x18] sm:$0xf]
      %v258 = vld [vmem:[%s1 + $0x1c] sm:$0xf]
      %v259 = vld [vmem:[%s1 + $0x20] sm:$0xf]
      %v292 = vunpack.c.l.b16 %v219
      %v293 = vunpack.c.l.b16 %v220
      %v294 = vunpack.c.l.b16 %v221
      %v295 = vunpack.c.l.b16 %v222
      %v296 = vunpack.c.l.b16 %v223
      %v297 = vunpack.c.l.b16 %v224
      %v298 = vunpack.c.l.b16 %v225
      %v299 = vunpack.c.l.b16 %v226
      %v300 = vunpack.c.l.b16 %v227
      %v301 = vunpack.c.l.b16 %v228
      %v302 = vunpack.c.l.b16 %v229
      %v303 = vunpack.c.l.b16 %v230
      %v304 = vunpack.c.l.b16 %v231
      %v305 = vunpack.c.l.b16 %v232
      %v306 = vunpack.c.l.b16 %v233
      %v307 = vunpack.c.l.b16 %v234
      %v308 = vunpack.c.l.b16 %v235
      %v309 = vunpack.c.l.b16 %v236
      %v310 = vunpack.c.l.b16 %v237
      %v311 = vunpack.c.l.b16 %v238
      %v312 = vunpack.c.l.b16 %v239
      %v313 = vunpack.c.l.b16 %v240
      %v314 = vunpack.c.l.b16 %v241
      %v315 = vunpack.c.l.b16 %v242
      %v316 = vunpack.c.l.b16 %v243
      %v317 = vunpack.c.l.b16 %v244
      %v318 = vunpack.c.l.b16 %v245
      %v319 = vunpack.c.l.b16 %v246
      %v320 = vunpack.c.l.b16 %v247
      %v321 = vunpack.c.l.b16 %v248
      %v322 = vunpack.c.l.b16 %v249
      %v323 = vunpack.c.l.b16 %v250
      %v324 = vpack.c.b16 %v293, %v292
      %v325 = vpack.c.b16 %v295, %v294
      %v326 = vpack.c.b16 %v297, %v296
      %v327 = vpack.c.b16 %v299, %v298
      %v328 = vpack.c.b16 %v301, %v300
      %v329 = vpack.c.b16 %v303, %v302
      %v330 = vpack.c.b16 %v305, %v304
      %v331 = vpack.c.b16 %v307, %v306
      %v332 = vpack.c.b16 %v309, %v308
      %v333 = vpack.c.b16 %v311, %v310
      %v334 = vpack.c.b16 %v313, %v312
      %v335 = vpack.c.b16 %v315, %v314
      %v336 = vpack.c.b16 %v317, %v316
      %v337 = vpack.c.b16 %v319, %v318
      %v338 = vpack.c.b16 %v321, %v320
      %v339 = vpack.c.b16 %v323, %v322
      %v349 = vunpack.c.l.b16 %v251
      %v350 = vunpack.c.l.b16 %v252
      %v351 = vunpack.c.l.b16 %v253
      %v352 = vunpack.c.l.b16 %v254
      %v353 = vunpack.c.l.b16 %v255
      %v354 = vunpack.c.l.b16 %v256
      %v355 = vunpack.c.l.b16 %v257
      %v356 = vunpack.c.l.b16 %v258
      %v357 = vunpack.c.l.b16 %v259
      %v358 = vpack.c.b16 %v350, %v349
      %v359 = vpack.c.b16 %v352, %v351
      %v360 = vpack.c.b16 %v354, %v353
      %v361 = vpack.c.b16 %v356, %v355
      %v362 = vpack.c.b16 %v357, %v357
      %vm367 = vcmask 588800
      %v369 = vsel %vm367, %v324, 0
      %v372 = vsel %vm367, %v325, 0
      %v375 = vsel %vm367, %v326, 0
      %v378 = vsel %vm367, %v327, 0
      %v381 = vsel %vm367, %v328, 0
      %v384 = vsel %vm367, %v329, 0
      %v387 = vsel %vm367, %v330, 0
      %v390 = vsel %vm367, %v331, 0
      %v393 = vsel %vm367, %v332, 0
      %v396 = vsel %vm367, %v333, 0
      %v399 = vsel %vm367, %v334, 0
      %v402 = vsel %vm367, %v335, 0
      %v405 = vsel %vm367, %v336, 0
      %v408 = vsel %vm367, %v337, 0
      %v411 = vsel %vm367, %v338, 0
      %v414 = vsel %vm367, %v339, 0
      %vm416 = vcmask 1043456
      %v418 = vsel %vm416, %v362, 0
      %420 = vmatprep.subr.bf16.mxu0 0
      %421 = vmatpush1.bf16.msra.mxu0 %v358
      %422 = vmatprep.subr.bf16.mxu0 0
      %423 = vmatpush1.bf16.msra.mxu0 %v359
      %424 = vmatprep.subr.bf16.mxu0 0
      %425 = vmatpush1.bf16.msra.mxu0 %v360
      %426 = vmatprep.subr.bf16.mxu0 0
      %427 = vmatpush1.bf16.msra.mxu0 %v361
      %428 = vmatprep.subr.bf16.mxu0 0
      %429 = vmatpush1.bf16.msra.mxu0 %v418
      %430 = vmatprep.subr.bf16.mxu0 0
      %431 = vmatpush1.bf16.msra.mxu0 0
      %432 = vmatprep.subr.bf16.mxu0 0
      %433 = vmatpush1.bf16.msra.mxu0 0
      %434 = vmatprep.subr.bf16.mxu0 0
      %435 = vmatpush1.bf16.msra.mxu0 0
      %436 = vmatprep.subr.bf16.mxu0 0
      %437 = vmatpush1.bf16.msra.mxu0 0
      %438 = vmatprep.subr.bf16.mxu0 0
      %439 = vmatpush1.bf16.msra.mxu0 0
      %440 = vmatprep.subr.bf16.mxu0 0
      %441 = vmatpush1.bf16.msra.mxu0 0
      %442 = vmatprep.subr.bf16.mxu0 0
      %443 = vmatpush1.bf16.msra.mxu0 0
      %444 = vmatprep.subr.bf16.mxu0 0
      %445 = vmatpush1.bf16.msra.mxu0 0
      %446 = vmatprep.subr.bf16.mxu0 0
      %447 = vmatpush1.bf16.msra.mxu0 0
      %448 = vmatprep.subr.bf16.mxu0 0
      %449 = vmatpush1.bf16.msra.mxu0 0
      %450 = vmatprep.subr.bf16.mxu0 0
      %451 = vmatpush1.bf16.msra.mxu0 0
      %452 = vmatprep.mubr.bf16.mxu0 0
      %453 = vmatmul.mubr.bf16.gmra.mrb[0].mxu0 %v369
      %v454 = vpop.f32.mrb[0].mxu0
      %v455 = vadd.f32 0.0, %v454
      %v456 = vpop.f32.mrb[0].mxu0
      %v457 = vpop.f32.mrb[0].mxu0
      %v458 = vadd.f32 0.0, %v457
      %v459 = vpop.f32.mrb[0].mxu0
      %460 = vmatprep.mubr.bf16.mxu0 0
      %461 = vmatmul.mubr.bf16.gmra.mrb[0].mxu0 %v372
      %v462 = vpop.f32.mrb[0].mxu0
      %v463 = vadd.f32 0.0, %v462
      %v464 = vpop.f32.mrb[0].mxu0
      %v465 = vpop.f32.mrb[0].mxu0
      %v466 = vadd.f32 0.0, %v465
      %v467 = vpop.f32.mrb[0].mxu0
      %468 = vmatprep.mubr.bf16.mxu0 0
      %469 = vmatmul.mubr.bf16.gmra.mrb[0].mxu0 %v375
      %v470 = vpop.f32.mrb[0].mxu0
      %v471 = vadd.f32 0.0, %v470
      %v472 = vpop.f32.mrb[0].mxu0
      %v473 = vpop.f32.mrb[0].mxu0
      %v474 = vadd.f32 0.0, %v473
      %v475 = vpop.f32.mrb[0].mxu0
      %476 = vmatprep.mubr.bf16.mxu0 0
      %477 = vmatmul.mubr.bf16.gmra.mrb[0].mxu0 %v378
      %v478 = vpop.f32.mrb[0].mxu0
      %v479 = vadd.f32 0.0, %v478
      %v480 = vpop.f32.mrb[0].mxu0
      %v481 = vpop.f32.mrb[0].mxu0
      %v482 = vadd.f32 0.0, %v481
      %v483 = vpop.f32.mrb[0].mxu0
      %484 = vmatprep.mubr.bf16.mxu0 0
      %485 = vmatmul.mubr.bf16.gmra.mrb[0].mxu0 %v381
      %v486 = vpop.f32.mrb[0].mxu0
      %v487 = vadd.f32 0.0, %v486
      %v488 = vpop.f32.mrb[0].mxu0
      %v489 = vpop.f32.mrb[0].mxu0
      %v490 = vadd.f32 0.0, %v489
      %v491 = vpop.f32.mrb[0].mxu0
      %492 = vmatprep.mubr.bf16.mxu0 0
      %493 = vmatmul.mubr.bf16.gmra.mrb[0].mxu0 %v384
      %v494 = vpop.f32.mrb[0].mxu0
      %v495 = vadd.f32 0.0, %v494
      %v496 = vpop.f32.mrb[0].mxu0
      %v497 = vpop.f32.mrb[0].mxu0
      %v498 = vadd.f32 0.0, %v497
      %v499 = vpop.f32.mrb[0].mxu0
      %500 = vmatprep.mubr.bf16.mxu0 0
      %501 = vmatmul.mubr.bf16.gmra.mrb[0].mxu0 %v387
      %v502 = vpop.f32.mrb[0].mxu0
      %v503 = vadd.f32 0.0, %v502
      %v504 = vpop.f32.mrb[0].mxu0
      %v505 = vpop.f32.mrb[0].mxu0
      %v506 = vadd.f32 0.0, %v505
      %v507 = vpop.f32.mrb[0].mxu0
      %508 = vmatprep.mubr.bf16.mxu0 0
      %509 = vmatmul.mubr.bf16.gmra.mrb[0].mxu0 %v390
      %v510 = vpop.f32.mrb[0].mxu0
      %v511 = vadd.f32 0.0, %v510
      %v512 = vpop.f32.mrb[0].mxu0
      %v513 = vpop.f32.mrb[0].mxu0
      %v514 = vadd.f32 0.0, %v513
      %v515 = vpop.f32.mrb[0].mxu0
      %516 = vmatprep.mubr.bf16.mxu0 0
      %517 = vmatmul.mubr.bf16.gmra.mrb[0].mxu0 %v393
      %v518 = vpop.f32.mrb[0].mxu0
      %v519 = vadd.f32 0.0, %v518
      %v520 = vpop.f32.mrb[0].mxu0
      %v521 = vpop.f32.mrb[0].mxu0
      %v522 = vadd.f32 0.0, %v521
      %v523 = vpop.f32.mrb[0].mxu0
      %524 = vmatprep.mubr.bf16.mxu0 0
      %525 = vmatmul.mubr.bf16.gmra.mrb[0].mxu0 %v396
      %v526 = vpop.f32.mrb[0].mxu0
      %v527 = vadd.f32 0.0, %v526
      %v528 = vpop.f32.mrb[0].mxu0
      %v529 = vpop.f32.mrb[0].mxu0
      %v530 = vadd.f32 0.0, %v529
      %v531 = vpop.f32.mrb[0].mxu0
      %532 = vmatprep.mubr.bf16.mxu0 0
      %533 = vmatmul.mubr.bf16.gmra.mrb[0].mxu0 %v399
      %v534 = vpop.f32.mrb[0].mxu0
      %v535 = vadd.f32 0.0, %v534
      %v536 = vpop.f32.mrb[0].mxu0
      %v537 = vpop.f32.mrb[0].mxu0
      %v538 = vadd.f32 0.0, %v537
      %v539 = vpop.f32.mrb[0].mxu0
      %540 = vmatprep.mubr.bf16.mxu0 0
      %541 = vmatmul.mubr.bf16.gmra.mrb[0].mxu0 %v402
      %v542 = vpop.f32.mrb[0].mxu0
      %v543 = vadd.f32 0.0, %v542
      %v544 = vpop.f32.mrb[0].mxu0
      %v545 = vpop.f32.mrb[0].mxu0
      %v546 = vadd.f32 0.0, %v545
      %v547 = vpop.f32.mrb[0].mxu0
      %548 = vmatprep.mubr.bf16.mxu0 0
      %549 = vmatmul.mubr.bf16.gmra.mrb[0].mxu0 %v405
      %v550 = vpop.f32.mrb[0].mxu0
      %v551 = vadd.f32 0.0, %v550
      %v552 = vpop.f32.mrb[0].mxu0
      %v553 = vpop.f32.mrb[0].mxu0
      %v554 = vadd.f32 0.0, %v553
      %v555 = vpop.f32.mrb[0].mxu0
      %556 = vmatprep.mubr.bf16.mxu0 0
      %557 = vmatmul.mubr.bf16.gmra.mrb[0].mxu0 %v408
      %v558 = vpop.f32.mrb[0].mxu0
      %v559 = vadd.f32 0.0, %v558
      %v560 = vpop.f32.mrb[0].mxu0
      %v561 = vpop.f32.mrb[0].mxu0
      %v562 = vadd.f32 0.0, %v561
      %v563 = vpop.f32.mrb[0].mxu0
      %564 = vmatprep.mubr.bf16.mxu0 0
      %565 = vmatmul.mubr.bf16.gmra.mrb[0].mxu0 %v411
      %v566 = vpop.f32.mrb[0].mxu0
      %v567 = vadd.f32 0.0, %v566
      %v568 = vpop.f32.mrb[0].mxu0
      %v569 = vpop.f32.mrb[0].mxu0
      %v570 = vadd.f32 0.0, %v569
      %v571 = vpop.f32.mrb[0].mxu0
      %572 = vmatprep.mubr.bf16.mxu0 0
      %573 = vmatmul.mubr.bf16.gmra.mrb[0].mxu0 %v414
      %v574 = vpop.f32.mrb[0].mxu0
      %v575 = vadd.f32 0.0, %v574
      %v576 = vpop.f32.mrb[0].mxu0
      %v577 = vpop.f32.mrb[0].mxu0
      %v578 = vadd.f32 0.0, %v577
      %v579 = vpop.f32.mrb[0].mxu0
      %580 = vdwg.mxu0
      %581 = vst [vmem:[%s210] sm:$0xff] %v455
      %582 = vst [vmem:[%s210 + $0x8] sm:$0xff] %v458
      %583 = vst [vmem:[%s210 + $0x10] sm:$0xff] %v463
      %584 = vst [vmem:[%s210 + $0x18] sm:$0xff] %v466
      %585 = vst [vmem:[%s210 + $0x20] sm:$0xff] %v471
      %586 = vst [vmem:[%s210 + $0x28] sm:$0xff] %v474
      %587 = vst [vmem:[%s210 + $0x30] sm:$0xff] %v479
      %588 = vst [vmem:[%s210 + $0x38] sm:$0xff] %v482
      %589 = vst [vmem:[%s210 + $0x40] sm:$0xff] %v487
      %590 = vst [vmem:[%s210 + $0x48] sm:$0xff] %v490
      %591 = vst [vmem:[%s210 + $0x50] sm:$0xff] %v495
      %592 = vst [vmem:[%s210 + $0x58] sm:$0xff] %v498
      %593 = vst [vmem:[%s210 + $0x60] sm:$0xff] %v503
      %594 = vst [vmem:[%s210 + $0x68] sm:$0xff] %v506
      %595 = vst [vmem:[%s210 + $0x70] sm:$0xff] %v511
      %596 = vst [vmem:[%s210 + $0x78] sm:$0xff] %v514
      %597 = vst [vmem:[%s210 + $0x80] sm:$0xff] %v519
      %598 = vst [vmem:[%s210 + $0x88] sm:$0xff] %v522
      %599 = vst [vmem:[%s210 + $0x90] sm:$0xff] %v527
      %600 = vst [vmem:[%s210 + $0x98] sm:$0xff] %v530
      %601 = vst [vmem:[%s210 + $0xa0] sm:$0xff] %v535
      %602 = vst [vmem:[%s210 + $0xa8] sm:$0xff] %v538
      %603 = vst [vmem:[%s210 + $0xb0] sm:$0xff] %v543
      %604 = vst [vmem:[%s210 + $0xb8] sm:$0xff] %v546
      %605 = vst [vmem:[%s210 + $0xc0] sm:$0xff] %v551
      %606 = vst [vmem:[%s210 + $0xc8] sm:$0xff] %v554
      %607 = vst [vmem:[%s210 + $0xd0] sm:$0xff] %v559
      %608 = vst [vmem:[%s210 + $0xd8] sm:$0xff] %v562
      %609 = vst [vmem:[%s210 + $0xe0] sm:$0xff] %v567
      %610 = vst [vmem:[%s210 + $0xe8] sm:$0xff] %v570
      %611 = vst [vmem:[%s210 + $0xf0] sm:$0xff] %v575
      %612 = vst [vmem:[%s210 + $0xf8] sm:$0xff] %v578
      %v613 = vadd.f32 %v455, %v458
      %v614 = vadd.f32 %v613, %v463
      %v615 = vadd.f32 %v614, %v466
      %v616 = vadd.f32 %v615, %v471
      %v617 = vadd.f32 %v616, %v474
      %v618 = vadd.f32 %v617, %v479
      %v619 = vadd.f32 %v618, %v482
      %v620 = vadd.f32 %v619, %v487
      %v621 = vadd.f32 %v620, %v490
      %v622 = vadd.f32 %v621, %v495
      %v623 = vadd.f32 %v622, %v498
      %v624 = vadd.f32 %v623, %v503
      %v625 = vadd.f32 %v624, %v506
      %v626 = vadd.f32 %v625, %v511
      %v627 = vadd.f32 %v626, %v514
      %v628 = vadd.f32 %v627, %v519
      %v629 = vadd.f32 %v628, %v522
      %v630 = vadd.f32 %v629, %v527
      %v631 = vadd.f32 %v630, %v530
      %v632 = vadd.f32 %v631, %v535
      %v633 = vadd.f32 %v632, %v538
      %v634 = vadd.f32 %v633, %v543
      %v635 = vadd.f32 %v634, %v546
      %v636 = vadd.f32 %v635, %v551
      %v637 = vadd.f32 %v636, %v554
      %v638 = vadd.f32 %v637, %v559
      %v639 = vadd.f32 %v638, %v562
      %v640 = vadd.f32 %v639, %v567
      %v641 = vadd.f32 %v640, %v570
      %v642 = vadd.f32 %v641, %v575
      %v643 = vadd.f32 %v642, %v578
      %v644 = vrot.slane %v643, 4
      %v645 = vadd.f32 %v643, %v644
      %v646 = vrot.slane %v645, 2
      %v647 = vadd.f32 %v645, %v646
      %v648 = vrot.slane %v647, 1
      %v649 = vadd.f32 %v647, %v648
      %650 = vst [vmem:[%s214] sm:$0x1] %v649
      %v651 = vmul.f32 %v455, %v455
      %v652 = vmul.f32 %v458, %v458
      %v653 = vmul.f32 %v463, %v463
      %v654 = vmul.f32 %v466, %v466
      %v655 = vmul.f32 %v471, %v471
      %v656 = vmul.f32 %v474, %v474
      %v657 = vmul.f32 %v479, %v479
      %v658 = vmul.f32 %v482, %v482
      %v659 = vmul.f32 %v487, %v487
      %v660 = vmul.f32 %v490, %v490
      %v661 = vmul.f32 %v495, %v495
      %v662 = vmul.f32 %v498, %v498
      %v663 = vmul.f32 %v503, %v503
      %v664 = vmul.f32 %v506, %v506
      %v665 = vmul.f32 %v511, %v511
      %v666 = vmul.f32 %v514, %v514
      %v667 = vmul.f32 %v519, %v519
      %v668 = vmul.f32 %v522, %v522
      %v669 = vmul.f32 %v527, %v527
      %v670 = vmul.f32 %v530, %v530
      %v671 = vmul.f32 %v535, %v535
      %v672 = vmul.f32 %v538, %v538
      %v673 = vmul.f32 %v543, %v543
      %v674 = vmul.f32 %v546, %v546
      %v675 = vmul.f32 %v551, %v551
      %v676 = vmul.f32 %v554, %v554
      %v677 = vmul.f32 %v559, %v559
      %v678 = vmul.f32 %v562, %v562
      %v679 = vmul.f32 %v567, %v567
      %v680 = vmul.f32 %v570, %v570
      %v681 = vmul.f32 %v575, %v575
      %v682 = vmul.f32 %v578, %v578
      %v683 = vadd.f32 %v651, %v652
      %v684 = vadd.f32 %v683, %v653
      %v685 = vadd.f32 %v684, %v654
      %v686 = vadd.f32 %v685, %v655
      %v687 = vadd.f32 %v686, %v656
      %v688 = vadd.f32 %v687, %v657
      %v689 = vadd.f32 %v688, %v658
      %v690 = vadd.f32 %v689, %v659
      %v691 = vadd.f32 %v690, %v660
      %v692 = vadd.f32 %v691, %v661
      %v693 = vadd.f32 %v692, %v662
      %v694 = vadd.f32 %v693, %v663
      %v695 = vadd.f32 %v694, %v664
      %v696 = vadd.f32 %v695, %v665
      %v697 = vadd.f32 %v696, %v666
      %v698 = vadd.f32 %v697, %v667
      %v699 = vadd.f32 %v698, %v668
      %v700 = vadd.f32 %v699, %v669
      %v701 = vadd.f32 %v700, %v670
      %v702 = vadd.f32 %v701, %v671
      %v703 = vadd.f32 %v702, %v672
      %v704 = vadd.f32 %v703, %v673
      %v705 = vadd.f32 %v704, %v674
      %v706 = vadd.f32 %v705, %v675
      %v707 = vadd.f32 %v706, %v676
      %v708 = vadd.f32 %v707, %v677
      %v709 = vadd.f32 %v708, %v678
      %v710 = vadd.f32 %v709, %v679
      %v711 = vadd.f32 %v710, %v680
      %v712 = vadd.f32 %v711, %v681
      %v713 = vadd.f32 %v712, %v682
      %v714 = vrot.slane %v713, 4
      %v715 = vadd.f32 %v713, %v714
      %v716 = vrot.slane %v715, 2
      %v717 = vadd.f32 %v715, %v716
      %v718 = vrot.slane %v717, 1
      %v719 = vadd.f32 %v717, %v718
      %720 = vst [vmem:[%s217] sm:$0x1] %v719
      %s721 = smul.u32 32, %s16
      %p722 = scmp.lt.s32.totalorder %s721, 63
      %s723 = scalar_select %p722, %s721, 63
      %s724 = smul.addr %s723, 8
      %s725 = scalar_lea.vmem %s2, %s724
      %p726 = scmp.lt.s32.totalorder %s16, 1
      %s727 = scalar_select %p726, %s16, 1
      %s728 = scalar_lea.vmem %s3, %s727
      %p729 = scmp.lt.s32.totalorder %s16, 1
      %s730 = scalar_select %p729, %s16, 1
      %s731 = scalar_lea.vmem %s4, %s730
      // Predicated region
      $region29: #{_lambda_.10} parent=27 // pred_check
        %p732 = pneg %p81
      $region30: #{_lambda_.10} parent=27 // pred_check_branch
        %734 = sbr.rel (%p732) target = $region32
      $region31: #{_lambda_.10} parent=27 // pred_region
        %s735 = smul.u32 32, %s16
      $region32: #{_lambda_.10} parent=27 // pred_fallthru
        _
      // Predicated region
      $region33: #{_lambda_.10} parent=27 // pred_check
        %p736 = pneg %p107
      $region34: #{_lambda_.10} parent=27 // pred_check_branch
        %738 = sbr.rel (%p736) target = $region36
      $region35: #{_lambda_.10} parent=27 // pred_region
        _
      $region36: #{_lambda_.10} parent=27 // pred_fallthru
        _
      // Predicated region
      $region37: #{_lambda_.10} parent=27 // pred_check
        %p739 = pneg %p133
      $region38: #{_lambda_.10} parent=27 // pred_check_branch
        %741 = sbr.rel (%p739) target = $region40
      $region39: #{_lambda_.10} parent=27 // pred_region
        _
      $region40: #{_lambda_.10} parent=27 // pred_fallthru
        _
    $region28: #{_lambda_.10} parent=5 // pred_fallthru
      _
    %p742 = scmp.le.s32.totalorder 2, %s11
    // Predicated region
    $region41: #{_lambda_.10} parent=5 // pred_check
      %p743 = pneg %p742
    $region42: #{_lambda_.10} parent=5 // pred_check_branch
      %745 = sbr.rel (%p743) target = $region44
    $region43: #{_lambda_.10} parent=5 // pred_region
      %s746 = ssub.s32 %s11, 2
      // Predicated region
      $region45: #{_lambda_.10} parent=43 // pred_check
        %p747 = pneg %p87
      $region46: #{_lambda_.10} parent=43 // pred_check_branch
        %749 = sbr.rel (%p747) target = $region48
      $region47: #{_lambda_.10} parent=43 // pred_region
        %s750 = smul.u32 32, %s17
        %p751 = scmp.lt.s32.totalorder %s750, 63
        %s752 = scalar_select %p751, %s750, 63
        %s753 = smul.addr %s752, 8
        %s754 = scalar_lea.vmem %s2, %s753
      $region48: #{_lambda_.10} parent=43 // pred_fallthru
        _
      // Predicated region
      $region49: #{_lambda_.10} parent=43 // pred_check
        %p755 = pneg %p113
      $region50: #{_lambda_.10} parent=43 // pred_check_branch
        %757 = sbr.rel (%p755) target = $region52
      $region51: #{_lambda_.10} parent=43 // pred_region
        %p758 = scmp.lt.s32.totalorder %s17, 1
        %s759 = scalar_select %p758, %s17, 1
        %s760 = scalar_lea.vmem %s3, %s759
      $region52: #{_lambda_.10} parent=43 // pred_fallthru
        _
      // Predicated region
      $region53: #{_lambda_.10} parent=43 // pred_check
        %p761 = pneg %p139
      $region54: #{_lambda_.10} parent=43 // pred_check_branch
        %763 = sbr.rel (%p761) target = $region56
      $region55: #{_lambda_.10} parent=43 // pred_region
        %p764 = scmp.lt.s32.totalorder %s17, 1
        %s765 = scalar_select %p764, %s17, 1
        %s766 = scalar_lea.vmem %s4, %s765
      $region56: #{_lambda_.10} parent=43 // pred_fallthru
        _
    $region44: #{_lambda_.10} parent=5 // pred_fallthru
      _
  $region6: #{_lambda_.10} parent=0 // loop_footer
    %s15 = sadd.s32 1, %s11
  $region7: #{_lambda_.10} parent=0 // loop_footer_branch
    %10 = sbr.rel target = $region3
  $region8: #{_lambda_.10} parent=0 // loop_exit
    _

// kernel: _lambda_.13
$region0: #{_lambda_.13}
  #allocation0 [shape = 'u32[]', space=smem, size = 0x4, offset = 0x4, fixed_abs, tag = 'smem constant byte address 0x4 - core index']
  #allocation1 [shape = 'u32[144,128]{1,0:T(1,128)}', space=vmem, size = 0x12000, scoped, tag = 'internal scratch']
  %s0 = inlined_call_operand.vmem [shape: f32[512,128], index: 0, kind: input, shape index: {}]
  %s1 = inlined_call_operand.vmem [shape: f32[1,128], index: 1, kind: input, shape index: {}]
  %s2 = inlined_call_operand.vmem [shape: f32[1,128], index: 2, kind: input, shape index: {}]
  %s3 = inlined_call_operand.vmem [shape: f32[512,128], index: 3, kind: input, shape index: {}]
  %s4 = inlined_call_operand.vmem [shape: f32[1,128], index: 4, kind: input, shape index: {}]
  %s5 = inlined_call_operand.vmem [shape: f32[1,128], index: 5, kind: input, shape index: {}]
  %s6 = inlined_call_operand.vmem [shape: f32[512,128], index: 6, kind: output, shape index: {}]
  %s7 = sld [smem:[#allocation0]]
  $region57: #{_lambda_.13} parent=0
    _
  %s9 = ssub.s32 1, %s7
  %s10 = scalar_select 0, %s9, %s7
  loop: start=0, step=1, limit=4
  $region2: #{_lambda_.13} parent=0 // loop_pre_header
    _
  $region3: #{_lambda_.13} parent=0 // loop_header
    %s12 = sphi 0, %s16
    %p13 = scmp.ge.s32.totalorder %s12, 4
    %s22 = sphi 0, %s24
    %s25 = sphi 0, %s22
    %s26 = sphi 0, %s25
    %s42 = sphi 0, %s26
    %s46 = sphi 0, %s46
    %s48 = sphi 0, %s46
    %s49 = sphi 0, %s48
    %s63 = sphi 0, %s49
    %s67 = sphi 0, %s67
    %s69 = sphi 0, %s67
    %s70 = sphi 0, %s69
    %s84 = sphi 0, %s70
    %s90 = sphi 0, %s92
    %s93 = sphi 0, %s90
    %s94 = sphi 0, %s93
    %s110 = sphi 0, %s94
    %s114 = sphi 0, %s114
    %s116 = sphi 0, %s114
    %s117 = sphi 0, %s116
    %s131 = sphi 0, %s117
    %s135 = sphi 0, %s135
    %s137 = sphi 0, %s135
    %s138 = sphi 0, %s137
    %s152 = sphi 0, %s138
    %s158 = sphi 0, %s160
    %s161 = sphi 0, %s158
    %s162 = sphi 0, %s161
    %s178 = sphi 0, %s162
  $region4: #{_lambda_.13} parent=0 // loop_header_branch
    %15 = sbr.rel (%p13) target = $region8
  $region5: #{_lambda_.13} parent=0 // loop_body
    %s17 = ssub.s32 %s12, 1
    %s18 = ssub.s32 %s12, 2
    %s19 = sadd.s32 %s12, 1
    %s20 = ssub.s32 %s12, %s19
    %p21 = scmp.eq.s32.totalorder %s20, 0
    %s23 = sadd.s32 %s22, 1
    %s24 = scalar_select %p21, %s22, %s23
    %p27 = pneg %p21
    %p28 = scmp.eq.s32.totalorder %s12, 1
    %p29 = por %p27, %p28
    %p30 = scmp.ne.s32.totalorder %s22, %s25
    %p31 = scmp.eq.s32.totalorder %s12, 0
    %p32 = por %p30, %p31
    %p33 = scmp.ne.s32.totalorder %s22, %s25
    %p34 = scmp.eq.s32.totalorder %s17, 1
    %p35 = por %p33, %p34
    %p36 = scmp.ne.s32.totalorder %s25, %s26
    %p37 = scmp.eq.s32.totalorder %s17, 0
    %p38 = por %p36, %p37
    %p39 = scmp.ne.s32.totalorder %s25, %s26
    %p40 = scmp.eq.s32.totalorder %s18, 1
    %p41 = por %p39, %p40
    %p43 = scmp.ne.s32.totalorder %s26, %s42
    %p44 = scmp.eq.s32.totalorder %s18, 0
    %p45 = por %p43, %p44
    %s47 = sadd.s32 %s46, 1
    %p50 = scmp.eq.s32.totalorder %s12, 1
    %p51 = scmp.ne.s32.totalorder %s46, %s48
    %p52 = scmp.eq.s32.totalorder %s12, 0
    %p53 = por %p51, %p52
    %p54 = scmp.ne.s32.totalorder %s46, %s48
    %p55 = scmp.eq.s32.totalorder %s17, 1
    %p56 = por %p54, %p55
    %p57 = scmp.ne.s32.totalorder %s48, %s49
    %p58 = scmp.eq.s32.totalorder %s17, 0
    %p59 = por %p57, %p58
    %p60 = scmp.ne.s32.totalorder %s48, %s49
    %p61 = scmp.eq.s32.totalorder %s18, 1
    %p62 = por %p60, %p61
    %p64 = scmp.ne.s32.totalorder %s49, %s63
    %p65 = scmp.eq.s32.totalorder %s18, 0
    %p66 = por %p64, %p65
    %s68 = sadd.s32 %s67, 1
    %p71 = scmp.eq.s32.totalorder %s12, 1
    %p72 = scmp.ne.s32.totalorder %s67, %s69
    %p73 = scmp.eq.s32.totalorder %s12, 0
    %p74 = por %p72, %p73
    %p75 = scmp.ne.s32.totalorder %s67, %s69
    %p76 = scmp.eq.s32.totalorder %s17, 1
    %p77 = por %p75, %p76
    %p78 = scmp.ne.s32.totalorder %s69, %s70
    %p79 = scmp.eq.s32.totalorder %s17, 0
    %p80 = por %p78, %p79
    %p81 = scmp.ne.s32.totalorder %s69, %s70
    %p82 = scmp.eq.s32.totalorder %s18, 1
    %p83 = por %p81, %p82
    %p85 = scmp.ne.s32.totalorder %s70, %s84
    %p86 = scmp.eq.s32.totalorder %s18, 0
    %p87 = por %p85, %p86
    %s88 = ssub.s32 %s12, %s19
    %p89 = scmp.eq.s32.totalorder %s88, 0
    %s91 = sadd.s32 %s90, 1
    %s92 = scalar_select %p89, %s90, %s91
    %p95 = pneg %p89
    %p96 = scmp.eq.s32.totalorder %s12, 1
    %p97 = por %p95, %p96
    %p98 = scmp.ne.s32.totalorder %s90, %s93
    %p99 = scmp.eq.s32.totalorder %s12, 0
    %p100 = por %p98, %p99
    %p101 = scmp.ne.s32.totalorder %s90, %s93
    %p102 = scmp.eq.s32.totalorder %s17, 1
    %p103 = por %p101, %p102
    %p104 = scmp.ne.s32.totalorder %s93, %s94
    %p105 = scmp.eq.s32.totalorder %s17, 0
    %p106 = por %p104, %p105
    %p107 = scmp.ne.s32.totalorder %s93, %s94
    %p108 = scmp.eq.s32.totalorder %s18, 1
    %p109 = por %p107, %p108
    %p111 = scmp.ne.s32.totalorder %s94, %s110
    %p112 = scmp.eq.s32.totalorder %s18, 0
    %p113 = por %p111, %p112
    %s115 = sadd.s32 %s114, 1
    %p118 = scmp.eq.s32.totalorder %s12, 1
    %p119 = scmp.ne.s32.totalorder %s114, %s116
    %p120 = scmp.eq.s32.totalorder %s12, 0
    %p121 = por %p119, %p120
    %p122 = scmp.ne.s32.totalorder %s114, %s116
    %p123 = scmp.eq.s32.totalorder %s17, 1
    %p124 = por %p122, %p123
    %p125 = scmp.ne.s32.totalorder %s116, %s117
    %p126 = scmp.eq.s32.totalorder %s17, 0
    %p127 = por %p125, %p126
    %p128 = scmp.ne.s32.totalorder %s116, %s117
    %p129 = scmp.eq.s32.totalorder %s18, 1
    %p130 = por %p128, %p129
    %p132 = scmp.ne.s32.totalorder %s117, %s131
    %p133 = scmp.eq.s32.totalorder %s18, 0
    %p134 = por %p132, %p133
    %s136 = sadd.s32 %s135, 1
    %p139 = scmp.eq.s32.totalorder %s12, 1
    %p140 = scmp.ne.s32.totalorder %s135, %s137
    %p141 = scmp.eq.s32.totalorder %s12, 0
    %p142 = por %p140, %p141
    %p143 = scmp.ne.s32.totalorder %s135, %s137
    %p144 = scmp.eq.s32.totalorder %s17, 1
    %p145 = por %p143, %p144
    %p146 = scmp.ne.s32.totalorder %s137, %s138
    %p147 = scmp.eq.s32.totalorder %s17, 0
    %p148 = por %p146, %p147
    %p149 = scmp.ne.s32.totalorder %s137, %s138
    %p150 = scmp.eq.s32.totalorder %s18, 1
    %p151 = por %p149, %p150
    %p153 = scmp.ne.s32.totalorder %s138, %s152
    %p154 = scmp.eq.s32.totalorder %s18, 0
    %p155 = por %p153, %p154
    %s156 = ssub.s32 %s12, %s19
    %p157 = scmp.eq.s32.totalorder %s156, 0
    %s159 = sadd.s32 %s158, 1
    %s160 = scalar_select %p157, %s158, %s159
    %p163 = pneg %p157
    %p164 = scmp.eq.s32.totalorder %s12, 1
    %p165 = por %p163, %p164
    %p166 = scmp.ne.s32.totalorder %s158, %s161
    %p167 = scmp.eq.s32.totalorder %s12, 0
    %p168 = por %p166, %p167
    %p169 = scmp.ne.s32.totalorder %s158, %s161
    %p170 = scmp.eq.s32.totalorder %s17, 1
    %p171 = por %p169, %p170
    %p172 = scmp.ne.s32.totalorder %s161, %s162
    %p173 = scmp.eq.s32.totalorder %s17, 0
    %p174 = por %p172, %p173
    %p175 = scmp.ne.s32.totalorder %s161, %s162
    %p176 = scmp.eq.s32.totalorder %s18, 1
    %p177 = por %p175, %p176
    %p179 = scmp.ne.s32.totalorder %s162, %s178
    %p180 = scmp.eq.s32.totalorder %s18, 0
    %p181 = por %p179, %p180
    %p182 = scmp.le.s32.totalorder 1, %s12
    %p183 = scmp.lt.s32.totalorder %s12, 3
    %p184 = pnand %p182, %p183
    %p185 = pneg %p184
    // Predicated region
    $region9: #{_lambda_.13} parent=5 // pred_check
      _
    $region10: #{_lambda_.13} parent=5 // pred_check_branch
      %187 = sbr.rel (%p184) target = $region12
    $region11: #{_lambda_.13} parent=5 // pred_region
      %s188 = ssub.s32 %s12, 1
      // Predicated region
      $region13: #{_lambda_.13} parent=11 // pred_check
        %p189 = pneg %p59
      $region14: #{_lambda_.13} parent=11 // pred_check_branch
        %191 = sbr.rel (%p189) target = $region16
      $region15: #{_lambda_.13} parent=11 // pred_region
        _
      $region16: #{_lambda_.13} parent=11 // pred_fallthru
        _
      // Predicated region
      $region17: #{_lambda_.13} parent=11 // pred_check
        %p192 = pneg %p80
      $region18: #{_lambda_.13} parent=11 // pred_check_branch
        %194 = sbr.rel (%p192) target = $region20
      $region19: #{_lambda_.13} parent=11 // pred_region
        _
      $region20: #{_lambda_.13} parent=11 // pred_fallthru
        _
      // Predicated region
      $region21: #{_lambda_.13} parent=11 // pred_check
        %p195 = pneg %p127
      $region22: #{_lambda_.13} parent=11 // pred_check_branch
        %197 = sbr.rel (%p195) target = $region24
      $region23: #{_lambda_.13} parent=11 // pred_region
        _
      $region24: #{_lambda_.13} parent=11 // pred_fallthru
        _
      // Predicated region
      $region25: #{_lambda_.13} parent=11 // pred_check
        %p198 = pneg %p148
      $region26: #{_lambda_.13} parent=11 // pred_check_branch
        %200 = sbr.rel (%p198) target = $region28
      $region27: #{_lambda_.13} parent=11 // pred_region
        _
      $region28: #{_lambda_.13} parent=11 // pred_fallthru
        _
    $region12: #{_lambda_.13} parent=5 // pred_fallthru
      _
    %p201 = scmp.lt.s32.totalorder %s12, 2
    // Predicated region
    $region29: #{_lambda_.13} parent=5 // pred_check
      %p202 = pneg %p201
    $region30: #{_lambda_.13} parent=5 // pred_check_branch
      %204 = sbr.rel (%p202) target = $region32
    $region31: #{_lambda_.13} parent=5 // pred_region
      // Predicated region
      $region33: #{_lambda_.13} parent=31 // pred_check
        %p205 = pneg %p32
      $region34: #{_lambda_.13} parent=31 // pred_check_branch
        %207 = sbr.rel (%p205) target = $region36
      $region35: #{_lambda_.13} parent=31 // pred_region
        %s208 = smul.u32 32, %s12
        %p209 = scmp.lt.s32.totalorder %s208, 63
        %s210 = scalar_select %p209, %s208, 63
        %s211 = smul.addr %s210, 8
        %s212 = scalar_lea.vmem %s0, %s211
        %s213 = smul.u32 32, %s12
      $region36: #{_lambda_.13} parent=31 // pred_fallthru
        _
      // Predicated region
      $region37: #{_lambda_.13} parent=31 // pred_check
        %p214 = pneg %p100
      $region38: #{_lambda_.13} parent=31 // pred_check_branch
        %216 = sbr.rel (%p214) target = $region40
      $region39: #{_lambda_.13} parent=31 // pred_region
        %s217 = smul.u32 32, %s12
        %p218 = scmp.lt.s32.totalorder %s217, 63
        %s219 = scalar_select %p218, %s217, 63
        %s220 = smul.addr %s219, 8
        %s221 = scalar_lea.vmem %s3, %s220
        %s222 = smul.u32 32, %s12
      $region40: #{_lambda_.13} parent=31 // pred_fallthru
        _
    $region32: #{_lambda_.13} parent=5 // pred_fallthru
      _
    %p223 = scmp.le.s32.totalorder 1, %s12
    %p224 = scmp.lt.s32.totalorder %s12, 3
    %p225 = pnand %p223, %p224
    %p226 = pneg %p225
    // Predicated region
    $region41: #{_lambda_.13} parent=5 // pred_check
      _
    $region42: #{_lambda_.13} parent=5 // pred_check_branch
      %228 = sbr.rel (%p225) target = $region44
    $region43: #{_lambda_.13} parent=5 // pred_region
      %s229 = ssub.s32 %s12, 1
      %s230 = smul.u32 32, %s17
      %p231 = scmp.lt.s32.totalorder %s230, 63
      %s232 = scalar_select %p231, %s230, 63
      %s233 = smul.addr %s232, 8
      %s234 = scalar_lea.vmem %s0, %s233
      %p235 = pneg %p38
      %p236 = pneg %p35
      %p237 = pneg %p59
      %p238 = pneg %p56
      %p239 = pneg %p80
      %p240 = pneg %p77
      %s241 = smul.u32 32, %s17
      %p242 = scmp.lt.s32.totalorder %s241, 63
      %s243 = scalar_select %p242, %s241, 63
      %s244 = smul.addr %s243, 8
      %s245 = scalar_lea.vmem %s3, %s244
      %p246 = pneg %p106
      %p247 = pneg %p103
      %p248 = pneg %p127
      %p249 = pneg %p124
      %p250 = pneg %p148
      %p251 = pneg %p145
      %p252 = pneg %p174
      %p253 = pneg %p171
      %s254 = smul.u32 32, %s17
      %p255 = scmp.lt.s32.totalorder %s254, 63
      %s256 = scalar_select %p255, %s254, 63
      %s257 = smul.addr %s256, 8
      %s258 = scalar_lea.vmem %s6, %s257
      %s259 = smul.u32 32, %s17
      %p260 = scmp.lt.s32.totalorder %s259, 63
      %s261 = scalar_select %p260, %s259, 63
      %s262 = smul.addr %s261, 8
      %s263 = scalar_lea.vmem %s0, %s262
      %s264 = smul.u32 32, %s17
      %s265 = smul.u32 32, %s17
      %p266 = scmp.lt.s32.totalorder %s265, 63
      %s267 = scalar_select %p266, %s265, 63
      %s268 = smul.addr %s267, 8
      %s269 = scalar_lea.vmem %s3, %s268
      %s270 = smul.u32 32, %s17
      %s271 = smul.u32 32, %s17
      %p272 = scmp.lt.s32.totalorder %s271, 63
      %s273 = scalar_select %p272, %s271, 63
      %s274 = smul.addr %s273, 8
      %s275 = scalar_lea.vmem %s6, %s274
      %s276 = smul.u32 32, %s17
      %v277 = vld [vmem:[%s263] sm:$0xff]
      %v278 = vld [vmem:[%s263 + $0x8] sm:$0xff]
      %v279 = vld [vmem:[%s263 + $0x10] sm:$0xff]
      %v280 = vld [vmem:[%s263 + $0x18] sm:$0xff]
      %v281 = vld [vmem:[%s263 + $0x20] sm:$0xff]
      %v282 = vld [vmem:[%s263 + $0x28] sm:$0xff]
      %v283 = vld [vmem:[%s263 + $0x30] sm:$0xff]
      %v284 = vld [vmem:[%s263 + $0x38] sm:$0xff]
      %v285 = vld [vmem:[%s263 + $0x40] sm:$0xff]
      %v286 = vld [vmem:[%s263 + $0x48] sm:$0xff]
      %v287 = vld [vmem:[%s263 + $0x50] sm:$0xff]
      %v288 = vld [vmem:[%s263 + $0x58] sm:$0xff]
      %v289 = vld [vmem:[%s263 + $0x60] sm:$0xff]
      %v290 = vld [vmem:[%s263 + $0x68] sm:$0xff]
      %v291 = vld [vmem:[%s263 + $0x70] sm:$0xff]
      %v292 = vld [vmem:[%s263 + $0x78] sm:$0xff]
      %v293 = vld [vmem:[%s263 + $0x80] sm:$0xff]
      %v294 = vld [vmem:[%s263 + $0x88] sm:$0xff]
      %v295 = vld [vmem:[%s263 + $0x90] sm:$0xff]
      %v296 = vld [vmem:[%s263 + $0x98] sm:$0xff]
      %v297 = vld [vmem:[%s263 + $0xa0] sm:$0xff]
      %v298 = vld [vmem:[%s263 + $0xa8] sm:$0xff]
      %v299 = vld [vmem:[%s263 + $0xb0] sm:$0xff]
      %v300 = vld [vmem:[%s263 + $0xb8] sm:$0xff]
      %v301 = vld [vmem:[%s263 + $0xc0] sm:$0xff]
      %v302 = vld [vmem:[%s263 + $0xc8] sm:$0xff]
      %v303 = vld [vmem:[%s263 + $0xd0] sm:$0xff]
      %v304 = vld [vmem:[%s263 + $0xd8] sm:$0xff]
      %v305 = vld [vmem:[%s263 + $0xe0] sm:$0xff]
      %v306 = vld [vmem:[%s263 + $0xe8] sm:$0xff]
      %v307 = vld [vmem:[%s263 + $0xf0] sm:$0xff]
      %v308 = vld [vmem:[%s263 + $0xf8] sm:$0xff]
      %v309 = vld [vmem:[%s1] sm:$0x1]
      %v311 = vlaneseq
      %v312 = vshrl.u32 %v311, 7
      %v313 = vsub.s32 0, %v312
      %v314 = vrot.slane %v309, %v313
      %v316 = vmul.f32 %v277, %v314
      %v317 = vmul.f32 %v278, %v314
      %v318 = vmul.f32 %v279, %v314
      %v319 = vmul.f32 %v280, %v314
      %v320 = vmul.f32 %v281, %v314
      %v321 = vmul.f32 %v282, %v314
      %v322 = vmul.f32 %v283, %v314
      %v323 = vmul.f32 %v284, %v314
      %v324 = vmul.f32 %v285, %v314
      %v325 = vmul.f32 %v286, %v314
      %v326 = vmul.f32 %v287, %v314
      %v327 = vmul.f32 %v288, %v314
      %v328 = vmul.f32 %v289, %v314
      %v329 = vmul.f32 %v290, %v314
      %v330 = vmul.f32 %v291, %v314
      %v331 = vmul.f32 %v292, %v314
      %v332 = vmul.f32 %v293, %v314
      %v333 = vmul.f32 %v294, %v314
      %v334 = vmul.f32 %v295, %v314
      %v335 = vmul.f32 %v296, %v314
      %v336 = vmul.f32 %v297, %v314
      %v337 = vmul.f32 %v298, %v314
      %v338 = vmul.f32 %v299, %v314
      %v339 = vmul.f32 %v300, %v314
      %v340 = vmul.f32 %v301, %v314
      %v341 = vmul.f32 %v302, %v314
      %v342 = vmul.f32 %v303, %v314
      %v343 = vmul.f32 %v304, %v314
      %v344 = vmul.f32 %v305, %v314
      %v345 = vmul.f32 %v306, %v314
      %v346 = vmul.f32 %v307, %v314
      %v347 = vmul.f32 %v308, %v314
      %v348 = vld [vmem:[%s2] sm:$0x1]
      %v350 = vlaneseq
      %v351 = vshrl.u32 %v350, 7
      %v352 = vsub.s32 0, %v351
      %v353 = vrot.slane %v348, %v352
      %v355 = vadd.f32 %v316, %v353
      %v356 = vadd.f32 %v317, %v353
      %v357 = vadd.f32 %v318, %v353
      %v358 = vadd.f32 %v319, %v353
      %v359 = vadd.f32 %v320, %v353
      %v360 = vadd.f32 %v321, %v353
      %v361 = vadd.f32 %v322, %v353
      %v362 = vadd.f32 %v323, %v353
      %v363 = vadd.f32 %v324, %v353
      %v364 = vadd.f32 %v325, %v353
      %v365 = vadd.f32 %v326, %v353
      %v366 = vadd.f32 %v327, %v353
      %v367 = vadd.f32 %v328, %v353
      %v368 = vadd.f32 %v329, %v353
      %v369 = vadd.f32 %v330, %v353
      %v370 = vadd.f32 %v331, %v353
      %v371 = vadd.f32 %v332, %v353
      %v372 = vadd.f32 %v333, %v353
      %v373 = vadd.f32 %v334, %v353
      %v374 = vadd.f32 %v335, %v353
      %v375 = vadd.f32 %v336, %v353
      %v376 = vadd.f32 %v337, %v353
      %v377 = vadd.f32 %v338, %v353
      %v378 = vadd.f32 %v339, %v353
      %v379 = vadd.f32 %v340, %v353
      %v380 = vadd.f32 %v341, %v353
      %v381 = vadd.f32 %v342, %v353
      %v382 = vadd.f32 %v343, %v353
      %v383 = vadd.f32 %v344, %v353
      %v384 = vadd.f32 %v345, %v353
      %v385 = vadd.f32 %v346, %v353
      %v386 = vadd.f32 %v347, %v353
      %v387 = vmax.f32 %v355, 0.0
      %v388 = vmax.f32 %v356, 0.0
      %v389 = vmax.f32 %v357, 0.0
      %v390 = vmax.f32 %v358, 0.0
      %v391 = vmax.f32 %v359, 0.0
      %v392 = vmax.f32 %v360, 0.0
      %v393 = vmax.f32 %v361, 0.0
      %v394 = vmax.f32 %v362, 0.0
      %v395 = vmax.f32 %v363, 0.0
      %v396 = vmax.f32 %v364, 0.0
      %v397 = vmax.f32 %v365, 0.0
      %v398 = vmax.f32 %v366, 0.0
      %v399 = vmax.f32 %v367, 0.0
      %v400 = vmax.f32 %v368, 0.0
      %v401 = vmax.f32 %v369, 0.0
      %v402 = vmax.f32 %v370, 0.0
      %v403 = vmax.f32 %v371, 0.0
      %v404 = vmax.f32 %v372, 0.0
      %v405 = vmax.f32 %v373, 0.0
      %v406 = vmax.f32 %v374, 0.0
      %v407 = vmax.f32 %v375, 0.0
      %v408 = vmax.f32 %v376, 0.0
      %v409 = vmax.f32 %v377, 0.0
      %v410 = vmax.f32 %v378, 0.0
      %v411 = vmax.f32 %v379, 0.0
      %v412 = vmax.f32 %v380, 0.0
      %v413 = vmax.f32 %v381, 0.0
      %v414 = vmax.f32 %v382, 0.0
      %v415 = vmax.f32 %v383, 0.0
      %v416 = vmax.f32 %v384, 0.0
      %v417 = vmax.f32 %v385, 0.0
      %v418 = vmax.f32 %v386, 0.0
      %v419 = vld [vmem:[%s269] sm:$0xff]
      %v420 = vld [vmem:[%s269 + $0x8] sm:$0xff]
      %v421 = vld [vmem:[%s269 + $0x10] sm:$0xff]
      %v422 = vld [vmem:[%s269 + $0x18] sm:$0xff]
      %v423 = vld [vmem:[%s269 + $0x20] sm:$0xff]
      %v424 = vld [vmem:[%s269 + $0x28] sm:$0xff]
      %v425 = vld [vmem:[%s269 + $0x30] sm:$0xff]
      %v426 = vld [vmem:[%s269 + $0x38] sm:$0xff]
      %v427 = vld [vmem:[%s269 + $0x40] sm:$0xff]
      %v428 = vld [vmem:[%s269 + $0x48] sm:$0xff]
      %v429 = vld [vmem:[%s269 + $0x50] sm:$0xff]
      %v430 = vld [vmem:[%s269 + $0x58] sm:$0xff]
      %v431 = vld [vmem:[%s269 + $0x60] sm:$0xff]
      %v432 = vld [vmem:[%s269 + $0x68] sm:$0xff]
      %v433 = vld [vmem:[%s269 + $0x70] sm:$0xff]
      %v434 = vld [vmem:[%s269 + $0x78] sm:$0xff]
      %v435 = vld [vmem:[%s269 + $0x80] sm:$0xff]
      %v436 = vld [vmem:[%s269 + $0x88] sm:$0xff]
      %v437 = vld [vmem:[%s269 + $0x90] sm:$0xff]
      %v438 = vld [vmem:[%s269 + $0x98] sm:$0xff]
      %v439 = vld [vmem:[%s269 + $0xa0] sm:$0xff]
      %v440 = vld [vmem:[%s269 + $0xa8] sm:$0xff]
      %v441 = vld [vmem:[%s269 + $0xb0] sm:$0xff]
      %v442 = vld [vmem:[%s269 + $0xb8] sm:$0xff]
      %v443 = vld [vmem:[%s269 + $0xc0] sm:$0xff]
      %v444 = vld [vmem:[%s269 + $0xc8] sm:$0xff]
      %v445 = vld [vmem:[%s269 + $0xd0] sm:$0xff]
      %v446 = vld [vmem:[%s269 + $0xd8] sm:$0xff]
      %v447 = vld [vmem:[%s269 + $0xe0] sm:$0xff]
      %v448 = vld [vmem:[%s269 + $0xe8] sm:$0xff]
      %v449 = vld [vmem:[%s269 + $0xf0] sm:$0xff]
      %v450 = vld [vmem:[%s269 + $0xf8] sm:$0xff]
      %v451 = vld [vmem:[%s4] sm:$0x1]
      %v453 = vlaneseq
      %v454 = vshrl.u32 %v453, 7
      %v455 = vsub.s32 0, %v454
      %v456 = vrot.slane %v451, %v455
      %v458 = vmul.f32 %v419, %v456
      %v459 = vmul.f32 %v420, %v456
      %v460 = vmul.f32 %v421, %v456
      %v461 = vmul.f32 %v422, %v456
      %v462 = vmul.f32 %v423, %v456
      %v463 = vmul.f32 %v424, %v456
      %v464 = vmul.f32 %v425, %v456
      %v465 = vmul.f32 %v426, %v456
      %v466 = vmul.f32 %v427, %v456
      %v467 = vmul.f32 %v428, %v456
      %v468 = vmul.f32 %v429, %v456
      %v469 = vmul.f32 %v430, %v456
      %v470 = vmul.f32 %v431, %v456
      %v471 = vmul.f32 %v432, %v456
      %v472 = vmul.f32 %v433, %v456
      %v473 = vmul.f32 %v434, %v456
      %v474 = vmul.f32 %v435, %v456
      %v475 = vmul.f32 %v436, %v456
      %v476 = vmul.f32 %v437, %v456
      %v477 = vmul.f32 %v438, %v456
      %v478 = vmul.f32 %v439, %v456
      %v479 = vmul.f32 %v440, %v456
      %v480 = vmul.f32 %v441, %v456
      %v481 = vmul.f32 %v442, %v456
      %v482 = vmul.f32 %v443, %v456
      %v483 = vmul.f32 %v444, %v456
      %v484 = vmul.f32 %v445, %v456
      %v485 = vmul.f32 %v446, %v456
      %v486 = vmul.f32 %v447, %v456
      %v487 = vmul.f32 %v448, %v456
      %v488 = vmul.f32 %v449, %v456
      %v489 = vmul.f32 %v450, %v456
      %v490 = vld [vmem:[%s5] sm:$0x1]
      %v492 = vlaneseq
      %v493 = vshrl.u32 %v492, 7
      %v494 = vsub.s32 0, %v493
      %v495 = vrot.slane %v490, %v494
      %v497 = vadd.f32 %v458, %v495
      %v498 = vadd.f32 %v459, %v495
      %v499 = vadd.f32 %v460, %v495
      %v500 = vadd.f32 %v461, %v495
      %v501 = vadd.f32 %v462, %v495
      %v502 = vadd.f32 %v463, %v495
      %v503 = vadd.f32 %v464, %v495
      %v504 = vadd.f32 %v465, %v495
      %v505 = vadd.f32 %v466, %v495
      %v506 = vadd.f32 %v467, %v495
      %v507 = vadd.f32 %v468, %v495
      %v508 = vadd.f32 %v469, %v495
      %v509 = vadd.f32 %v470, %v495
      %v510 = vadd.f32 %v471, %v495
      %v511 = vadd.f32 %v472, %v495
      %v512 = vadd.f32 %v473, %v495
      %v513 = vadd.f32 %v474, %v495
      %v514 = vadd.f32 %v475, %v495
      %v515 = vadd.f32 %v476, %v495
      %v516 = vadd.f32 %v477, %v495
      %v517 = vadd.f32 %v478, %v495
      %v518 = vadd.f32 %v479, %v495
      %v519 = vadd.f32 %v480, %v495
      %v520 = vadd.f32 %v481, %v495
      %v521 = vadd.f32 %v482, %v495
      %v522 = vadd.f32 %v483, %v495
      %v523 = vadd.f32 %v484, %v495
      %v524 = vadd.f32 %v485, %v495
      %v525 = vadd.f32 %v486, %v495
      %v526 = vadd.f32 %v487, %v495
      %v527 = vadd.f32 %v488, %v495
      %v528 = vadd.f32 %v489, %v495
      %v529 = vadd.f32 %v387, %v497
      %v530 = vadd.f32 %v388, %v498
      %v531 = vadd.f32 %v389, %v499
      %v532 = vadd.f32 %v390, %v500
      %v533 = vadd.f32 %v391, %v501
      %v534 = vadd.f32 %v392, %v502
      %v535 = vadd.f32 %v393, %v503
      %v536 = vadd.f32 %v394, %v504
      %v537 = vadd.f32 %v395, %v505
      %v538 = vadd.f32 %v396, %v506
      %v539 = vadd.f32 %v397, %v507
      %v540 = vadd.f32 %v398, %v508
      %v541 = vadd.f32 %v399, %v509
      %v542 = vadd.f32 %v400, %v510
      %v543 = vadd.f32 %v401, %v511
      %v544 = vadd.f32 %v402, %v512
      %v545 = vadd.f32 %v403, %v513
      %v546 = vadd.f32 %v404, %v514
      %v547 = vadd.f32 %v405, %v515
      %v548 = vadd.f32 %v406, %v516
      %v549 = vadd.f32 %v407, %v517
      %v550 = vadd.f32 %v408, %v518
      %v551 = vadd.f32 %v409, %v519
      %v552 = vadd.f32 %v410, %v520
      %v553 = vadd.f32 %v411, %v521
      %v554 = vadd.f32 %v412, %v522
      %v555 = vadd.f32 %v413, %v523
      %v556 = vadd.f32 %v414, %v524
      %v557 = vadd.f32 %v415, %v525
      %v558 = vadd.f32 %v416, %v526
      %v559 = vadd.f32 %v417, %v527
      %v560 = vadd.f32 %v418, %v528
      %561 = vst [vmem:[%s275] sm:$0xff] %v529
      %562 = vst [vmem:[%s275 + $0x8] sm:$0xff] %v530
      %563 = vst [vmem:[%s275 + $0x10] sm:$0xff] %v531
      %564 = vst [vmem:[%s275 + $0x18] sm:$0xff] %v532
      %565 = vst [vmem:[%s275 + $0x20] sm:$0xff] %v533
      %566 = vst [vmem:[%s275 + $0x28] sm:$0xff] %v534
      %567 = vst [vmem:[%s275 + $0x30] sm:$0xff] %v535
      %568 = vst [vmem:[%s275 + $0x38] sm:$0xff] %v536
      %569 = vst [vmem:[%s275 + $0x40] sm:$0xff] %v537
      %570 = vst [vmem:[%s275 + $0x48] sm:$0xff] %v538
      %571 = vst [vmem:[%s275 + $0x50] sm:$0xff] %v539
      %572 = vst [vmem:[%s275 + $0x58] sm:$0xff] %v540
      %573 = vst [vmem:[%s275 + $0x60] sm:$0xff] %v541
      %574 = vst [vmem:[%s275 + $0x68] sm:$0xff] %v542
      %575 = vst [vmem:[%s275 + $0x70] sm:$0xff] %v543
      %576 = vst [vmem:[%s275 + $0x78] sm:$0xff] %v544
      %577 = vst [vmem:[%s275 + $0x80] sm:$0xff] %v545
      %578 = vst [vmem:[%s275 + $0x88] sm:$0xff] %v546
      %579 = vst [vmem:[%s275 + $0x90] sm:$0xff] %v547
      %580 = vst [vmem:[%s275 + $0x98] sm:$0xff] %v548
      %581 = vst [vmem:[%s275 + $0xa0] sm:$0xff] %v549
      %582 = vst [vmem:[%s275 + $0xa8] sm:$0xff] %v550
      %583 = vst [vmem:[%s275 + $0xb0] sm:$0xff] %v551
      %584 = vst [vmem:[%s275 + $0xb8] sm:$0xff] %v552
      %585 = vst [vmem:[%s275 + $0xc0] sm:$0xff] %v553
      %586 = vst [vmem:[%s275 + $0xc8] sm:$0xff] %v554
      %587 = vst [vmem:[%s275 + $0xd0] sm:$0xff] %v555
      %588 = vst [vmem:[%s275 + $0xd8] sm:$0xff] %v556
      %589 = vst [vmem:[%s275 + $0xe0] sm:$0xff] %v557
      %590 = vst [vmem:[%s275 + $0xe8] sm:$0xff] %v558
      %591 = vst [vmem:[%s275 + $0xf0] sm:$0xff] %v559
      %592 = vst [vmem:[%s275 + $0xf8] sm:$0xff] %v560
      %s593 = smul.u32 32, %s17
      %p594 = scmp.lt.s32.totalorder %s593, 63
      %s595 = scalar_select %p594, %s593, 63
      %s596 = smul.addr %s595, 8
      %s597 = scalar_lea.vmem %s6, %s596
      // Predicated region
      $region45: #{_lambda_.13} parent=43 // pred_check
        %p598 = pneg %p171
      $region46: #{_lambda_.13} parent=43 // pred_check_branch
        %600 = sbr.rel (%p598) target = $region48
      $region47: #{_lambda_.13} parent=43 // pred_region
        %s601 = smul.u32 32, %s17
      $region48: #{_lambda_.13} parent=43 // pred_fallthru
        _
    $region44: #{_lambda_.13} parent=5 // pred_fallthru
      _
    %p602 = scmp.le.s32.totalorder 2, %s12
    // Predicated region
    $region49: #{_lambda_.13} parent=5 // pred_check
      %p603 = pneg %p602
    $region50: #{_lambda_.13} parent=5 // pred_check_branch
      %605 = sbr.rel (%p603) target = $region52
    $region51: #{_lambda_.13} parent=5 // pred_region
      %s606 = ssub.s32 %s12, 2
      // Predicated region
      $region53: #{_lambda_.13} parent=51 // pred_check
        %p607 = pneg %p177
      $region54: #{_lambda_.13} parent=51 // pred_check_branch
        %609 = sbr.rel (%p607) target = $region56
      $region55: #{_lambda_.13} parent=51 // pred_region
        %s610 = smul.u32 32, %s18
        %p611 = scmp.lt.s32.totalorder %s610, 63
        %s612 = scalar_select %p611, %s610, 63
        %s613 = smul.addr %s612, 8
        %s614 = scalar_lea.vmem %s6, %s613
      $region56: #{_lambda_.13} parent=51 // pred_fallthru
        _
    $region52: #{_lambda_.13} parent=5 // pred_fallthru
      _
  $region6: #{_lambda_.13} parent=0 // loop_footer
    %s16 = sadd.s32 1, %s12
  $region7: #{_lambda_.13} parent=0 // loop_footer_branch
    %11 = sbr.rel target = $region3
  $region8: #{_lambda_.13} parent=0 // loop_exit
    _

</llo_original>
